<compile_context>
chip_gen: v6e
topology: v6e:2x2x1
jax: 0.10.0
libtpu: 0.0.40
codegen_flags: <defaults>
</compile_context>

<pallas_src>
import functools
import math

import jax
import jax.numpy as jnp
from jax.experimental import pallas as pl
from jax.experimental.pallas import tpu as pltpu

_HALF_LOG_2PI = 0.5 * math.log(2.0 * math.pi)

# Padded layer widths (multiples of 128) and the lane offset of the std half
# of the fused head.
_H1, _H2, _H3 = 896, 640, 512          # 800, 600, 400 zero-padded
_HEAD_HALF = 128                        # mu lanes [0,128), std lanes [128,256)
_HEAD = 2 * _HEAD_HALF


def _round_up(x, m):
    return ((x + m - 1) // m) * m


def _softplus(x):
    # numerically stable softplus: log(1 + exp(x))
    return jnp.maximum(x, 0.0) + jnp.log1p(jnp.exp(-jnp.abs(x)))


def actor_kernel(action_bound, action_dim,
                 state_ref, eps_ref,
                 w1_ref, b1_ref, w2_ref, b2_ref, w3_ref, b3_ref,
                 whead_ref, bhead_ref,
                 out_ref):
    f32 = jnp.float32
    bf16 = jnp.bfloat16

    x = state_ref[...].astype(bf16)
    h1 = jnp.maximum(
        jnp.dot(x, w1_ref[...], preferred_element_type=f32) + b1_ref[...], 0.0)
    h2 = jnp.maximum(
        jnp.dot(h1.astype(bf16), w2_ref[...], preferred_element_type=f32) + b2_ref[...], 0.0)
    h3 = jnp.maximum(
        jnp.dot(h2.astype(bf16), w3_ref[...], preferred_element_type=f32) + b3_ref[...], 0.0)

    # Fused mu/std head, padded to 256 lanes: split at lane 128 is a free
    # vreg-boundary slice.
    head = jnp.dot(h3.astype(bf16), whead_ref[...],
                   preferred_element_type=f32) + bhead_ref[...]
    mu = head[:, :_HEAD_HALF]
    std = _softplus(head[:, _HEAD_HALF:])

    eps = eps_ref[...]                       # (tb, 128); lanes >= action_dim are 0
    # dist.rsample()  ==  mu + std * eps
    z = mu + std * eps

    # Normal(mu, std).log_prob(z); note (z - mu)/std == eps exactly.
    log_prob = -0.5 * eps * eps - jnp.log(std) - _HALF_LOG_2PI

    action = jnp.tanh(z)
    # Faithful to the reference module: it applies tanh to the already-squashed
    # action, i.e. log(1 - tanh(tanh(z))^2 + 1e-7).
    t = jnp.tanh(action)
    log_prob = log_prob - jnp.log(1.0 - t * t + 1e-7)

    # Mask the padded lanes out of the per-sample sum.
    lane = jax.lax.broadcasted_iota(jnp.int32, log_prob.shape, 1)
    log_prob = jnp.where(lane < action_dim, log_prob, 0.0)
    lp = jnp.sum(log_prob, axis=-1, keepdims=True)      # (tb, 1)

    # Single lane-dense writeback: action in lanes [0,128), log_prob broadcast
    # into lanes [128,256).
    out_ref[...] = jnp.concatenate(
        [action * action_bound, jnp.broadcast_to(lp, action.shape)], axis=-1)


def pack_actor_params(params):
    """One-time host-side repack: bf16 weights, f32 biases, hidden widths
    zero-padded to multiples of 128, fused mu/std head padded to 256 lanes."""
    S = params["w1"].shape[0]
    A = params["wmu"].shape[1]
    H3_real = params["wmu"].shape[0]       # 400

    def pad2(a, rows, cols):
        return jnp.pad(a, ((0, rows - a.shape[0]), (0, cols - a.shape[1])))

    whead = jnp.zeros((_H3, _HEAD), jnp.float32)
    whead = whead.at[:H3_real, 0:A].set(params["wmu"])
    whead = whead.at[:H3_real, _HEAD_HALF:_HEAD_HALF + A].set(params["wstd"])
    bhead = jnp.zeros((1, _HEAD), jnp.float32)
    bhead = bhead.at[:, 0:A].set(params["bmu"])
    bhead = bhead.at[:, _HEAD_HALF:_HEAD_HALF + A].set(params["bstd"])

    return {
        "w1": pad2(params["w1"], S, _H1).astype(jnp.bfloat16),
        "b1": pad2(params["b1"], 1, _H1).astype(jnp.float32),
        "w2": pad2(params["w2"], _H1, _H2).astype(jnp.bfloat16),
        "b2": pad2(params["b2"], 1, _H2).astype(jnp.float32),
        "w3": pad2(params["w3"], _H2, _H3).astype(jnp.bfloat16),
        "b3": pad2(params["b3"], 1, _H3).astype(jnp.float32),
        "whead": whead.astype(jnp.bfloat16),
        "bhead": bhead.astype(jnp.float32),
    }


def actor_forward(state, eps, packed, action_bound, *, block_b=512):
    B, S = state.shape
    A = eps.shape[1]
    assert A <= _HEAD_HALF

    # Batch tiling: weights stay VMEM-resident (constant index_map -> DMA'd
    # once), batch rows stream through the pipelined grid.
    Bp8 = _round_up(B, 8)
    if Bp8 <= 16:
        tb = Bp8                                   # tiny batch: single step
    elif Bp8 <= block_b:
        # Split into >=2 grid steps so v7x's two TensorCores both get work.
        tb = _round_up(pl.cdiv(Bp8, 2), 8)
    else:
        tb = block_b
    Bp = _round_up(Bp8, tb)

    state_p = jnp.pad(state, ((0, Bp - B), (0, 0)))
    # eps is lane-padded to 128 so all elementwise work runs on whole vregs;
    # padded lanes get eps=0 (-> z=0 -> action=0 there, sliced away below).
    eps_p = jnp.pad(eps, ((0, Bp - B), (0, _HEAD_HALF - A)))

    def row_spec(f):
        return pl.BlockSpec((tb, f), lambda i: (i, 0))

    def resident_spec(arr):
        return pl.BlockSpec(arr.shape, lambda i: (0, 0))

    args = (state_p, eps_p,
            packed["w1"], packed["b1"],
            packed["w2"], packed["b2"],
            packed["w3"], packed["b3"],
            packed["whead"], packed["bhead"])

    in_specs = [row_spec(S), row_spec(_HEAD_HALF)] + \
               [resident_spec(a) for a in args[2:]]

    kernel = functools.partial(actor_kernel, float(action_bound), int(A))
    out = pl.pallas_call(
        kernel,
        grid=(Bp // tb,),
        out_shape=jax.ShapeDtypeStruct((Bp, _HEAD), jnp.float32),
        in_specs=in_specs,
        out_specs=row_spec(_HEAD),
        compiler_params=pltpu.CompilerParams(
            dimension_semantics=("parallel",),
            vmem_limit_bytes=48 * 1024 * 1024),
    )(*args)

    action = out[:B, :A]
    log_prob = out[:B, _HEAD_HALF:_HEAD_HALF + 1]
    return action, log_prob


def actor_reference(state, eps, params, action_bound):
    """Pure-JAX reference on the ORIGINAL (unpadded) params, using the same
    bf16-weight / f32-accumulate precision path as the kernel.  Also validates
    that the zero padding in pack_actor_params is a mathematical no-op."""
    f32, bf16 = jnp.float32, jnp.bfloat16

    def dense(x, w, b):
        return jnp.dot(x.astype(bf16), w.astype(bf16),
                       preferred_element_type=f32) + b.astype(f32)

    h = jnp.maximum(dense(state, params["w1"], params["b1"]), 0.0)
    h = jnp.maximum(dense(h, params["w2"], params["b2"]), 0.0)
    h = jnp.maximum(dense(h, params["w3"], params["b3"]), 0.0)
    mu = dense(h, params["wmu"], params["bmu"])
    std = _softplus(dense(h, params["wstd"], params["bstd"]))
    z = mu + std * eps
    log_prob = -0.5 * eps * eps - jnp.log(std) - _HALF_LOG_2PI
    action = jnp.tanh(z)
    t = jnp.tanh(action)
    log_prob = log_prob - jnp.log(1.0 - t * t + 1e-7)
    return action * action_bound, jnp.sum(log_prob, axis=-1, keepdims=True)


def init_actor_params(key, state_dim, action_dim):
    """Deterministic synthetic parameter init (shapes match the PyTorch module,
    stored [in, out] so y = x @ W + b)."""
    dims = [(state_dim, 800), (800, 600), (600, 400),
            (400, action_dim), (400, action_dim)]
    names = ["1", "2", "3", "mu", "std"]
    params = {}
    keys = jax.random.split(key, len(dims))
    for k, (din, dout), name in zip(keys, dims, names):
        kw, kb = jax.random.split(k)
        scale = 1.0 / jnp.sqrt(jnp.float32(din))
        params[f"w{name}"] = (jax.random.uniform(kw, (din, dout), jnp.float32,
                                                 -1.0, 1.0) * scale)
        params[f"b{name}"] = (jax.random.uniform(kb, (1, dout), jnp.float32,
                                                 -1.0, 1.0) * scale)
    return params


def _check(state, eps, packed, params, action_bound, **kw):
    action, log_prob = actor_forward(state, eps, packed, action_bound, **kw)
    jax.block_until_ready((action, log_prob))
    B, A = eps.shape
    assert action.shape == (B, A)
    assert log_prob.shape == (B, 1)
    assert bool(jnp.all(jnp.isfinite(action)))
    assert bool(jnp.all(jnp.isfinite(log_prob)))
    ref_a, ref_lp = actor_reference(state, eps, params, action_bound)
    assert bool(jnp.allclose(action, ref_a, atol=1e-2, rtol=1e-2))
    assert bool(jnp.allclose(log_prob, ref_lp, atol=1e-2, rtol=1e-2))


if __name__ == "__main__":
    state_dim = 8
    action_dim = 4
    action_bound = 2.0

    root = jax.random.PRNGKey(0)
    k_params, k_state, k_eps = jax.random.split(root, 3)

    params = init_actor_params(k_params, state_dim, action_dim)
    packed = pack_actor_params(params)

    # Small batch: single grid step, batch rounded up to a multiple of 8.
    batch = 2
    state = jax.random.normal(k_state, (batch, state_dim), jnp.float32)
    eps = jax.random.normal(k_eps, (batch, action_dim), jnp.float32)  # rsample noise
    _check(state, eps, packed, params, action_bound)

    # Medium batch that fits one tile: exercises the 2-step (megacore) split.
    batch2 = 260
    k_state2, k_eps2 = jax.random.split(jax.random.PRNGKey(1))
    state2 = jax.random.normal(k_state2, (batch2, state_dim), jnp.float32)
    eps2 = jax.random.normal(k_eps2, (batch2, action_dim), jnp.float32)
    _check(state2, eps2, packed, params, action_bound)

    # Larger, non-multiple-of-tile batch: exercises the pipelined multi-step grid.
    batch3 = 1100
    k_state3, k_eps3 = jax.random.split(jax.random.PRNGKey(2))
    state3 = jax.random.normal(k_state3, (batch3, state_dim), jnp.float32)
    eps3 = jax.random.normal(k_eps3, (batch3, action_dim), jnp.float32)
    _check(state3, eps3, packed, params, action_bound, block_b=512)

    print("KERNEL_OK")
</pallas_src>

<mosaic_0001>
module attributes {stable_mosaic.version = 11 : i64} {
  func.func @actor_kernel(%arg0: i32, %arg1: memref<8x8xf32, #tpu.memory_space<vmem>>, %arg2: memref<8x128xf32, #tpu.memory_space<vmem>>, %arg3: memref<8x896xbf16, #tpu.memory_space<vmem>>, %arg4: memref<1x896xf32, #tpu.memory_space<vmem>>, %arg5: memref<896x640xbf16, #tpu.memory_space<vmem>>, %arg6: memref<1x640xf32, #tpu.memory_space<vmem>>, %arg7: memref<640x512xbf16, #tpu.memory_space<vmem>>, %arg8: memref<1x512xf32, #tpu.memory_space<vmem>>, %arg9: memref<512x256xbf16, #tpu.memory_space<vmem>>, %arg10: memref<1x256xf32, #tpu.memory_space<vmem>>, %arg11: memref<8x256xf32, #tpu.memory_space<vmem>>) attributes {dimension_semantics = [#tpu.dimension_semantics<parallel>], iteration_bounds = array<i64: 1>, scalar_prefetch = 0 : i64, scratch_operands = 0 : i64, tpu.core_type = #tpu.core_type<tc>, window_params = [{transform_indices = @transform_0, window_bounds = array<i64: 8, 8>}, {transform_indices = @transform_1, window_bounds = array<i64: 8, 128>}, {pipeline_mode = #tpu.pipeline_mode<synchronous>, transform_indices = @transform_2, window_bounds = array<i64: 8, 896>}, {pipeline_mode = #tpu.pipeline_mode<synchronous>, transform_indices = @transform_3, window_bounds = array<i64: 1, 896>}, {pipeline_mode = #tpu.pipeline_mode<synchronous>, transform_indices = @transform_4, window_bounds = array<i64: 896, 640>}, {pipeline_mode = #tpu.pipeline_mode<synchronous>, transform_indices = @transform_5, window_bounds = array<i64: 1, 640>}, {pipeline_mode = #tpu.pipeline_mode<synchronous>, transform_indices = @transform_6, window_bounds = array<i64: 640, 512>}, {pipeline_mode = #tpu.pipeline_mode<synchronous>, transform_indices = @transform_7, window_bounds = array<i64: 1, 512>}, {pipeline_mode = #tpu.pipeline_mode<synchronous>, transform_indices = @transform_8, window_bounds = array<i64: 512, 256>}, {pipeline_mode = #tpu.pipeline_mode<synchronous>, transform_indices = @transform_9, window_bounds = array<i64: 1, 256>}, {transform_indices = @transform_10, window_bounds = array<i64: 8, 256>}]} {
    %c0 = arith.constant 0 : index
    %c0_0 = arith.constant 0 : index
    %0 = vector.load %arg1[%c0, %c0_0] : memref<8x8xf32, #tpu.memory_space<vmem>>, vector<8x8xf32>
    %1 = arith.truncf %0 : vector<8x8xf32> to vector<8x8xbf16>
    %c0_1 = arith.constant 0 : index
    %c0_2 = arith.constant 0 : index
    %2 = vector.load %arg3[%c0_1, %c0_2] : memref<8x896xbf16, #tpu.memory_space<vmem>>, vector<8x896xbf16>
    %cst = arith.constant dense<0.000000e+00> : vector<8x896xf32>
    %3 = tpu.matmul %1, %2, %cst {dimension_numbers = #tpu.dot_dimension_numbers<[1], [0], [0], [1], [0, 0, 1, 1], [], []>} : vector<8x8xbf16>, vector<8x896xbf16>, vector<8x896xf32> -> vector<8x896xf32>
    %c0_3 = arith.constant 0 : index
    %c0_4 = arith.constant 0 : index
    %4 = vector.load %arg4[%c0_3, %c0_4] : memref<1x896xf32, #tpu.memory_space<vmem>>, vector<1x896xf32>
    %5 = vector.broadcast %4 : vector<1x896xf32> to vector<8x896xf32>
    %6 = arith.addf %3, %5 : vector<8x896xf32>
    %cst_5 = arith.constant 0.000000e+00 : f32
    %7 = vector.broadcast %cst_5 : f32 to vector<8x896xf32>
    %8 = arith.maximumf %6, %7 : vector<8x896xf32>
    %9 = arith.truncf %8 : vector<8x896xf32> to vector<8x896xbf16>
    %c0_6 = arith.constant 0 : index
    %c0_7 = arith.constant 0 : index
    %10 = vector.load %arg5[%c0_6, %c0_7] : memref<896x640xbf16, #tpu.memory_space<vmem>>, vector<896x640xbf16>
    %cst_8 = arith.constant dense<0.000000e+00> : vector<8x640xf32>
    %11 = tpu.matmul %9, %10, %cst_8 {dimension_numbers = #tpu.dot_dimension_numbers<[1], [0], [0], [1], [0, 0, 1, 1], [], []>} : vector<8x896xbf16>, vector<896x640xbf16>, vector<8x640xf32> -> vector<8x640xf32>
    %c0_9 = arith.constant 0 : index
    %c0_10 = arith.constant 0 : index
    %12 = vector.load %arg6[%c0_9, %c0_10] : memref<1x640xf32, #tpu.memory_space<vmem>>, vector<1x640xf32>
    %13 = vector.broadcast %12 : vector<1x640xf32> to vector<8x640xf32>
    %14 = arith.addf %11, %13 : vector<8x640xf32>
    %cst_11 = arith.constant 0.000000e+00 : f32
    %15 = vector.broadcast %cst_11 : f32 to vector<8x640xf32>
    %16 = arith.maximumf %14, %15 : vector<8x640xf32>
    %17 = arith.truncf %16 : vector<8x640xf32> to vector<8x640xbf16>
    %c0_12 = arith.constant 0 : index
    %c0_13 = arith.constant 0 : index
    %18 = vector.load %arg7[%c0_12, %c0_13] : memref<640x512xbf16, #tpu.memory_space<vmem>>, vector<640x512xbf16>
    %cst_14 = arith.constant dense<0.000000e+00> : vector<8x512xf32>
    %19 = tpu.matmul %17, %18, %cst_14 {dimension_numbers = #tpu.dot_dimension_numbers<[1], [0], [0], [1], [0, 0, 1, 1], [], []>} : vector<8x640xbf16>, vector<640x512xbf16>, vector<8x512xf32> -> vector<8x512xf32>
    %c0_15 = arith.constant 0 : index
    %c0_16 = arith.constant 0 : index
    %20 = vector.load %arg8[%c0_15, %c0_16] : memref<1x512xf32, #tpu.memory_space<vmem>>, vector<1x512xf32>
    %21 = vector.broadcast %20 : vector<1x512xf32> to vector<8x512xf32>
    %22 = arith.addf %19, %21 : vector<8x512xf32>
    %cst_17 = arith.constant 0.000000e+00 : f32
    %23 = vector.broadcast %cst_17 : f32 to vector<8x512xf32>
    %24 = arith.maximumf %22, %23 : vector<8x512xf32>
    %25 = arith.truncf %24 : vector<8x512xf32> to vector<8x512xbf16>
    %c0_18 = arith.constant 0 : index
    %c0_19 = arith.constant 0 : index
    %26 = vector.load %arg9[%c0_18, %c0_19] : memref<512x256xbf16, #tpu.memory_space<vmem>>, vector<512x256xbf16>
    %cst_20 = arith.constant dense<0.000000e+00> : vector<8x256xf32>
    %27 = tpu.matmul %25, %26, %cst_20 {dimension_numbers = #tpu.dot_dimension_numbers<[1], [0], [0], [1], [0, 0, 1, 1], [], []>} : vector<8x512xbf16>, vector<512x256xbf16>, vector<8x256xf32> -> vector<8x256xf32>
    %c0_21 = arith.constant 0 : index
    %c0_22 = arith.constant 0 : index
    %28 = vector.load %arg10[%c0_21, %c0_22] : memref<1x256xf32, #tpu.memory_space<vmem>>, vector<1x256xf32>
    %29 = vector.broadcast %28 : vector<1x256xf32> to vector<8x256xf32>
    %30 = arith.addf %27, %29 : vector<8x256xf32>
    %31 = vector.extract_strided_slice %30 {offsets = [0, 0], sizes = [8, 128], strides = [1, 1]} : vector<8x256xf32> to vector<8x128xf32>
    %32 = vector.extract_strided_slice %30 {offsets = [0, 128], sizes = [8, 128], strides = [1, 1]} : vector<8x256xf32> to vector<8x128xf32>
    %cst_23 = arith.constant 0.000000e+00 : f32
    %33 = vector.broadcast %cst_23 : f32 to vector<8x128xf32>
    %34 = arith.maximumf %32, %33 : vector<8x128xf32>
    %35 = math.absf %32 : vector<8x128xf32>
    %cst_24 = arith.constant 0.000000e+00 : f32
    %36 = vector.broadcast %cst_24 : f32 to vector<8x128xf32>
    %37 = arith.subf %36, %35 : vector<8x128xf32>
    %38 = math.exp %37 : vector<8x128xf32>
    %39 = math.log1p %38 : vector<8x128xf32>
    %40 = arith.addf %34, %39 : vector<8x128xf32>
    %c0_25 = arith.constant 0 : index
    %c0_26 = arith.constant 0 : index
    %41 = vector.load %arg2[%c0_25, %c0_26] : memref<8x128xf32, #tpu.memory_space<vmem>>, vector<8x128xf32>
    %42 = arith.mulf %40, %41 : vector<8x128xf32>
    %43 = arith.addf %31, %42 : vector<8x128xf32>
    %cst_27 = arith.constant -5.000000e-01 : f32
    %44 = vector.broadcast %cst_27 : f32 to vector<8x128xf32>
    %45 = arith.mulf %44, %41 : vector<8x128xf32>
    %46 = arith.mulf %45, %41 : vector<8x128xf32>
    %47 = math.log %40 : vector<8x128xf32>
    %48 = arith.subf %46, %47 : vector<8x128xf32>
    %cst_28 = arith.constant 0.918938517 : f32
    %49 = vector.broadcast %cst_28 : f32 to vector<8x128xf32>
    %50 = arith.subf %48, %49 : vector<8x128xf32>
    %51 = math.tanh %43 : vector<8x128xf32>
    %52 = math.tanh %51 : vector<8x128xf32>
    %53 = arith.mulf %52, %52 : vector<8x128xf32>
    %cst_29 = arith.constant 1.000000e+00 : f32
    %54 = vector.broadcast %cst_29 : f32 to vector<8x128xf32>
    %55 = arith.subf %54, %53 : vector<8x128xf32>
    %cst_30 = arith.constant 1.000000e-07 : f32
    %56 = vector.broadcast %cst_30 : f32 to vector<8x128xf32>
    %57 = arith.addf %55, %56 : vector<8x128xf32>
    %58 = math.log %57 : vector<8x128xf32>
    %59 = arith.subf %50, %58 : vector<8x128xf32>
    %60 = tpu.iota {dimensions = array<i32: 1>} : vector<8x128xi32>
    %c4_i32 = arith.constant 4 : i32
    %61 = vector.broadcast %c4_i32 : i32 to vector<8x128xi32>
    %62 = arith.cmpi slt, %60, %61 : vector<8x128xi32>
    %cst_31 = arith.constant 0.000000e+00 : f32
    %63 = vector.broadcast %cst_31 : f32 to vector<8x128xf32>
    %64 = arith.select %62, %59, %63 : vector<8x128xi1>, vector<8x128xf32>
    %cst_32 = arith.constant dense<0.000000e+00> : vector<8xf32>
    %65 = vector.multi_reduction <add>, %64, %cst_32 [1] : vector<8x128xf32> to vector<8xf32>
    %66 = vector.shape_cast %65 : vector<8xf32> to vector<8x1xf32>
    %cst_33 = arith.constant 2.000000e+00 : f32
    %67 = vector.broadcast %cst_33 : f32 to vector<8x128xf32>
    %68 = arith.mulf %51, %67 : vector<8x128xf32>
    %69 = vector.shape_cast %66 : vector<8x1xf32> to vector<8x1xf32>
    %70 = vector.broadcast %69 : vector<8x1xf32> to vector<8x128xf32>
    %71 = tpu.concatenate %68, %70 in 1 : vector<8x128xf32>, vector<8x128xf32> -> vector<8x256xf32>
    %c0_34 = arith.constant 0 : index
    %c0_35 = arith.constant 0 : index
    %72 = vector.load %arg11[%c0_34, %c0_35] : memref<8x256xf32, #tpu.memory_space<vmem>>, vector<8x256xf32>
    tpu.vector_store %arg11[%c0_34, %c0_35], %71 {strides = array<i32>} : memref<8x256xf32, #tpu.memory_space<vmem>>, vector<8x256xf32>,
    return
  }
  func.func @transform_0(%arg0: i32) -> (i32, i32) {
    %c0_i32 = arith.constant 0 : i32
    %c0_i32_0 = arith.constant 0 : i32
    return %arg0, %c0_i32 : i32, i32
  }
  func.func @transform_1(%arg0: i32) -> (i32, i32) {
    %c0_i32 = arith.constant 0 : i32
    %c0_i32_0 = arith.constant 0 : i32
    return %arg0, %c0_i32 : i32, i32
  }
  func.func @transform_2(%arg0: i32) -> (i32, i32) {
    %c0_i32 = arith.constant 0 : i32
    %c0_i32_0 = arith.constant 0 : i32
    %c0_i32_1 = arith.constant 0 : i32
    return %c0_i32, %c0_i32_0 : i32, i32
  }
  func.func @transform_3(%arg0: i32) -> (i32, i32) {
    %c0_i32 = arith.constant 0 : i32
    %c0_i32_0 = arith.constant 0 : i32
    %c0_i32_1 = arith.constant 0 : i32
    return %c0_i32, %c0_i32_0 : i32, i32
  }
  func.func @transform_4(%arg0: i32) -> (i32, i32) {
    %c0_i32 = arith.constant 0 : i32
    %c0_i32_0 = arith.constant 0 : i32
    %c0_i32_1 = arith.constant 0 : i32
    return %c0_i32, %c0_i32_0 : i32, i32
  }
  func.func @transform_5(%arg0: i32) -> (i32, i32) {
    %c0_i32 = arith.constant 0 : i32
    %c0_i32_0 = arith.constant 0 : i32
    %c0_i32_1 = arith.constant 0 : i32
    return %c0_i32, %c0_i32_0 : i32, i32
  }
  func.func @transform_6(%arg0: i32) -> (i32, i32) {
    %c0_i32 = arith.constant 0 : i32
    %c0_i32_0 = arith.constant 0 : i32
    %c0_i32_1 = arith.constant 0 : i32
    return %c0_i32, %c0_i32_0 : i32, i32
  }
  func.func @transform_7(%arg0: i32) -> (i32, i32) {
    %c0_i32 = arith.constant 0 : i32
    %c0_i32_0 = arith.constant 0 : i32
    %c0_i32_1 = arith.constant 0 : i32
    return %c0_i32, %c0_i32_0 : i32, i32
  }
  func.func @transform_8(%arg0: i32) -> (i32, i32) {
    %c0_i32 = arith.constant 0 : i32
    %c0_i32_0 = arith.constant 0 : i32
    %c0_i32_1 = arith.constant 0 : i32
    return %c0_i32, %c0_i32_0 : i32, i32
  }
  func.func @transform_9(%arg0: i32) -> (i32, i32) {
    %c0_i32 = arith.constant 0 : i32
    %c0_i32_0 = arith.constant 0 : i32
    %c0_i32_1 = arith.constant 0 : i32
    return %c0_i32, %c0_i32_0 : i32, i32
  }
  func.func @transform_10(%arg0: i32) -> (i32, i32) {
    %c0_i32 = arith.constant 0 : i32
    %c0_i32_0 = arith.constant 0 : i32
    return %arg0, %c0_i32 : i32, i32
  }
}

</mosaic_0001>

<llo_original>
// kernel: tpu_custom_call.1
$region0: #{tpu_custom_call.1}
  #allocation0 [shape = 'u32[]', space=smem, size = 0x4, offset = 0x4, fixed_abs, tag = 'smem constant byte address 0x4 - core index']
  #allocation1 [shape = 'u32[144,128]{1,0:T(1,128)}', space=vmem, size = 0x12000, scoped, tag = 'internal scratch']
  %s0 = inlined_call_operand.hbm [shape: f32[8,8], index: 0, kind: input, shape index: {}]
  %s1 = inlined_call_operand.hbm [shape: f32[8,128], index: 1, kind: input, shape index: {}]
  %s2 = inlined_call_operand.hbm [shape: bf16[8,896], index: 2, kind: input, shape index: {}]
  %s3 = inlined_call_operand.hbm [shape: f32[1,896], index: 3, kind: input, shape index: {}]
  %s4 = inlined_call_operand.hbm [shape: bf16[896,640], index: 4, kind: input, shape index: {}]
  %s5 = inlined_call_operand.hbm [shape: f32[1,640], index: 5, kind: input, shape index: {}]
  %s6 = inlined_call_operand.hbm [shape: bf16[640,512], index: 6, kind: input, shape index: {}]
  %s7 = inlined_call_operand.hbm [shape: f32[1,512], index: 7, kind: input, shape index: {}]
  %s8 = inlined_call_operand.hbm [shape: bf16[512,256], index: 8, kind: input, shape index: {}]
  %s9 = inlined_call_operand.hbm [shape: f32[1,256], index: 9, kind: input, shape index: {}]
  %s10 = inlined_call_operand.hbm [shape: f32[8,256], index: 10, kind: output, shape index: {}]
  %s11 = sld [smem:[#allocation0]]
  $region90: #{tpu_custom_call.1} parent=0
    _
  %s13 = ssub.s32 1, %s11
  %s14 = scalar_select 0, %s13, %s11
  $region1: #{tpu_custom_call.1} parent=0
    #allocation2 [shape = 'u8[4096]{0}', space=vmem, size = 0x1000, scoped, tag = 'input window, operand 0, single buffered']
    #allocation3 [shape = 's32[1]{0}', space=sflag, size = 0x4, scoped, tag = 'scoped memory for tpu_custom_call.1']
    #allocation4 [shape = 's32[1]{0}', space=sflag, size = 0x4, scoped, tag = 'scoped memory for tpu_custom_call.1']
    #allocation5 [shape = 'u8[4096]{0}', space=vmem, size = 0x1000, scoped, tag = 'input window, operand 1, single buffered']
    #allocation6 [shape = 's32[1]{0}', space=sflag, size = 0x4, scoped, tag = 'scoped memory for tpu_custom_call.1']
    #allocation7 [shape = 'u8[14336]{0}', space=vmem, size = 0x3800, scoped, tag = 'input window, operand 2, single buffered']
    #allocation8 [shape = 'u8[3584]{0}', space=vmem, size = 0x1000, scoped, tag = 'input window, operand 3, single buffered']
    #allocation9 [shape = 's32[1]{0}', space=sflag, size = 0x4, scoped, tag = 'scoped memory for tpu_custom_call.1']
    #allocation10 [shape = 'u8[1146880]{0}', space=vmem, size = 0x118000, scoped, tag = 'input window, operand 4, single buffered']
    #allocation11 [shape = 'u8[2560]{0}', space=vmem, size = 0xc00, scoped, tag = 'input window, operand 5, single buffered']
    #allocation12 [shape = 's32[1]{0}', space=sflag, size = 0x4, scoped, tag = 'scoped memory for tpu_custom_call.1']
    #allocation13 [shape = 'u8[655360]{0}', space=vmem, size = 0xa0000, scoped, tag = 'input window, operand 6, single buffered']
    #allocation14 [shape = 'u8[2048]{0}', space=vmem, size = 0x800, scoped, tag = 'input window, operand 7, single buffered']
    #allocation15 [shape = 's32[1]{0}', space=sflag, size = 0x4, scoped, tag = 'scoped memory for tpu_custom_call.1']
    #allocation16 [shape = 'u8[262144]{0}', space=vmem, size = 0x40000, scoped, tag = 'input window, operand 8, single buffered']
    #allocation17 [shape = 'u8[1024]{0}', space=vmem, size = 0x400, scoped, tag = 'input window, operand 9, single buffered']
    #allocation18 [shape = 's32[1]{0}', space=sflag, size = 0x4, scoped, tag = 'scoped memory for tpu_custom_call.1']
    #allocation19 [shape = 'u8[8192]{0}', space=vmem, size = 0x2000, scoped, tag = 'output window, operand 0, single buffered']
    %15 = vsyncpa [#allocation3], 0
    %16 = vsyncpa [#allocation6], 0
    %17 = vsyncpa [#allocation9], 0
    %18 = vsyncpa [#allocation12], 0
    %19 = vsyncpa [#allocation15], 0
    %20 = vsyncpa [#allocation18], 0
    %21 = vsyncpa [#allocation4], 0
    // Predicated region
    $region2: #{tpu_custom_call.1} parent=1 // pred_check
      _
    $region3: #{tpu_custom_call.1} parent=1 // pred_check_branch
      %23 = sbr.rel (0) target = $region5
    $region4: #{tpu_custom_call.1} parent=1 // pred_region
      %s25 = ssub.s32 128, 128
      %26 = vsyncadd [#allocation3], %s25
      %s28 = sshll.u32 [#allocation2], 4
      %s29 = int_to_ptr.vmem [resolvable:$true] %s28
      %31 = dma.hbm_to_vmem [thread:$0]  %s0, 128, %s29, [#allocation3]
    $region5: #{tpu_custom_call.1} parent=1 // pred_fallthru
      _
    // Predicated region
    $region6: #{tpu_custom_call.1} parent=1 // pred_check
      _
    $region7: #{tpu_custom_call.1} parent=1 // pred_check_branch
      %33 = sbr.rel (0) target = $region9
    $region8: #{tpu_custom_call.1} parent=1 // pred_region
      %s35 = ssub.s32 128, 128
      %36 = vsyncadd [#allocation6], %s35
      %s38 = sshll.u32 [#allocation5], 4
      %s39 = int_to_ptr.vmem [resolvable:$true] %s38
      %41 = dma.hbm_to_vmem [thread:$0]  %s1, 128, %s39, [#allocation6]
    $region9: #{tpu_custom_call.1} parent=1 // pred_fallthru
      _
    // Predicated region
    $region10: #{tpu_custom_call.1} parent=1 // pred_check
      _
    $region11: #{tpu_custom_call.1} parent=1 // pred_check_branch
      %43 = sbr.rel (0) target = $region13
    $region12: #{tpu_custom_call.1} parent=1 // pred_region
      %s45 = ssub.s32 448, 448
      %46 = vsyncadd [#allocation6], %s45
      %s48 = sshll.u32 [#allocation7], 4
      %s49 = int_to_ptr.vmem [resolvable:$true] %s48
      %51 = dma.hbm_to_vmem [thread:$0]  %s2, 448, %s49, [#allocation6]
    $region13: #{tpu_custom_call.1} parent=1 // pred_fallthru
      _
    // Predicated region
    $region14: #{tpu_custom_call.1} parent=1 // pred_check
      _
    $region15: #{tpu_custom_call.1} parent=1 // pred_check_branch
      %53 = sbr.rel (0) target = $region17
    $region16: #{tpu_custom_call.1} parent=1 // pred_region
      %s55 = ssub.s32 112, 112
      %56 = vsyncadd [#allocation9], %s55
      %s58 = sshll.u32 [#allocation8], 4
      %s59 = int_to_ptr.vmem [resolvable:$true] %s58
      %61 = dma.hbm_to_vmem [thread:$0]  %s3, 112, %s59, [#allocation9]
    $region17: #{tpu_custom_call.1} parent=1 // pred_fallthru
      _
    // Predicated region
    $region18: #{tpu_custom_call.1} parent=1 // pred_check
      _
    $region19: #{tpu_custom_call.1} parent=1 // pred_check_branch
      %63 = sbr.rel (0) target = $region21
    $region20: #{tpu_custom_call.1} parent=1 // pred_region
      %s65 = ssub.s32 35840, 35840
      %66 = vsyncadd [#allocation9], %s65
      %s67 = sshll.u32 [#allocation10], 4
      %s68 = int_to_ptr.vmem [resolvable:$true] %s67
      %73 = dma.hbm_to_vmem [thread:$0]  %s4, 35840, %s68, [#allocation9], 320, 320, 20
    $region21: #{tpu_custom_call.1} parent=1 // pred_fallthru
      _
    // Predicated region
    $region22: #{tpu_custom_call.1} parent=1 // pred_check
      _
    $region23: #{tpu_custom_call.1} parent=1 // pred_check_branch
      %75 = sbr.rel (0) target = $region25
    $region24: #{tpu_custom_call.1} parent=1 // pred_region
      %s77 = ssub.s32 80, 80
      %78 = vsyncadd [#allocation12], %s77
      %s80 = sshll.u32 [#allocation11], 4
      %s81 = int_to_ptr.vmem [resolvable:$true] %s80
      %83 = dma.hbm_to_vmem [thread:$0]  %s5, 80, %s81, [#allocation12]
    $region25: #{tpu_custom_call.1} parent=1 // pred_fallthru
      _
    // Predicated region
    $region26: #{tpu_custom_call.1} parent=1 // pred_check
      _
    $region27: #{tpu_custom_call.1} parent=1 // pred_check_branch
      %85 = sbr.rel (0) target = $region29
    $region28: #{tpu_custom_call.1} parent=1 // pred_region
      %s87 = ssub.s32 20480, 20480
      %88 = vsyncadd [#allocation12], %s87
      %s89 = sshll.u32 [#allocation13], 4
      %s90 = int_to_ptr.vmem [resolvable:$true] %s89
      %95 = dma.hbm_to_vmem [thread:$0]  %s6, 20480, %s90, [#allocation12], 256, 256, 16
    $region29: #{tpu_custom_call.1} parent=1 // pred_fallthru
      _
    // Predicated region
    $region30: #{tpu_custom_call.1} parent=1 // pred_check
      _
    $region31: #{tpu_custom_call.1} parent=1 // pred_check_branch
      %97 = sbr.rel (0) target = $region33
    $region32: #{tpu_custom_call.1} parent=1 // pred_region
      %s99 = ssub.s32 64, 64
      %100 = vsyncadd [#allocation15], %s99
      %s102 = sshll.u32 [#allocation14], 4
      %s103 = int_to_ptr.vmem [resolvable:$true] %s102
      %105 = dma.hbm_to_vmem [thread:$0]  %s7, 64, %s103, [#allocation15]
    $region33: #{tpu_custom_call.1} parent=1 // pred_fallthru
      _
    // Predicated region
    $region34: #{tpu_custom_call.1} parent=1 // pred_check
      _
    $region35: #{tpu_custom_call.1} parent=1 // pred_check_branch
      %107 = sbr.rel (0) target = $region37
    $region36: #{tpu_custom_call.1} parent=1 // pred_region
      %s109 = ssub.s32 8192, 8192
      %110 = vsyncadd [#allocation15], %s109
      %s111 = sshll.u32 [#allocation16], 4
      %s112 = int_to_ptr.vmem [resolvable:$true] %s111
      %117 = dma.hbm_to_vmem [thread:$0]  %s8, 8192, %s112, [#allocation15], 128, 128, 8
    $region37: #{tpu_custom_call.1} parent=1 // pred_fallthru
      _
    // Predicated region
    $region38: #{tpu_custom_call.1} parent=1 // pred_check
      _
    $region39: #{tpu_custom_call.1} parent=1 // pred_check_branch
      %119 = sbr.rel (0) target = $region41
    $region40: #{tpu_custom_call.1} parent=1 // pred_region
      %s121 = ssub.s32 32, 32
      %122 = vsyncadd [#allocation18], %s121
      %s124 = sshll.u32 [#allocation17], 4
      %s125 = int_to_ptr.vmem [resolvable:$true] %s124
      %127 = dma.hbm_to_vmem [thread:$0]  %s9, 32, %s125, [#allocation18]
    $region41: #{tpu_custom_call.1} parent=1 // pred_fallthru
      _
    // Predicated region
    $region42: #{tpu_custom_call.1} parent=1 // pred_check
      _
    $region43: #{tpu_custom_call.1} parent=1 // pred_check_branch
      %129 = sbr.rel (0) target = $region45
    $region44: #{tpu_custom_call.1} parent=1 // pred_region
      %130 = dma.done [#allocation3], 128
    $region45: #{tpu_custom_call.1} parent=1 // pred_fallthru
      _
    // Predicated region
    $region46: #{tpu_custom_call.1} parent=1 // pred_check
      _
    $region47: #{tpu_custom_call.1} parent=1 // pred_check_branch
      %132 = sbr.rel (0) target = $region49
    $region48: #{tpu_custom_call.1} parent=1 // pred_region
      %133 = dma.done [#allocation6], 128
    $region49: #{tpu_custom_call.1} parent=1 // pred_fallthru
      _
    // Predicated region
    $region50: #{tpu_custom_call.1} parent=1 // pred_check
      _
    $region51: #{tpu_custom_call.1} parent=1 // pred_check_branch
      %135 = sbr.rel (0) target = $region53
    $region52: #{tpu_custom_call.1} parent=1 // pred_region
      %136 = dma.done [#allocation6], 448
    $region53: #{tpu_custom_call.1} parent=1 // pred_fallthru
      _
    // Predicated region
    $region54: #{tpu_custom_call.1} parent=1 // pred_check
      _
    $region55: #{tpu_custom_call.1} parent=1 // pred_check_branch
      %138 = sbr.rel (0) target = $region57
    $region56: #{tpu_custom_call.1} parent=1 // pred_region
      %139 = dma.done [#allocation9], 112
    $region57: #{tpu_custom_call.1} parent=1 // pred_fallthru
      _
    // Predicated region
    $region58: #{tpu_custom_call.1} parent=1 // pred_check
      _
    $region59: #{tpu_custom_call.1} parent=1 // pred_check_branch
      %141 = sbr.rel (0) target = $region61
    $region60: #{tpu_custom_call.1} parent=1 // pred_region
      %142 = dma.done [#allocation9], 35840
    $region61: #{tpu_custom_call.1} parent=1 // pred_fallthru
      _
    // Predicated region
    $region62: #{tpu_custom_call.1} parent=1 // pred_check
      _
    $region63: #{tpu_custom_call.1} parent=1 // pred_check_branch
      %144 = sbr.rel (0) target = $region65
    $region64: #{tpu_custom_call.1} parent=1 // pred_region
      %145 = dma.done [#allocation12], 80
    $region65: #{tpu_custom_call.1} parent=1 // pred_fallthru
      _
    // Predicated region
    $region66: #{tpu_custom_call.1} parent=1 // pred_check
      _
    $region67: #{tpu_custom_call.1} parent=1 // pred_check_branch
      %147 = sbr.rel (0) target = $region69
    $region68: #{tpu_custom_call.1} parent=1 // pred_region
      %148 = dma.done [#allocation12], 20480
    $region69: #{tpu_custom_call.1} parent=1 // pred_fallthru
      _
    // Predicated region
    $region70: #{tpu_custom_call.1} parent=1 // pred_check
      _
    $region71: #{tpu_custom_call.1} parent=1 // pred_check_branch
      %150 = sbr.rel (0) target = $region73
    $region72: #{tpu_custom_call.1} parent=1 // pred_region
      %151 = dma.done [#allocation15], 64
    $region73: #{tpu_custom_call.1} parent=1 // pred_fallthru
      _
    // Predicated region
    $region74: #{tpu_custom_call.1} parent=1 // pred_check
      _
    $region75: #{tpu_custom_call.1} parent=1 // pred_check_branch
      %153 = sbr.rel (0) target = $region77
    $region76: #{tpu_custom_call.1} parent=1 // pred_region
      %154 = dma.done [#allocation15], 8192
    $region77: #{tpu_custom_call.1} parent=1 // pred_fallthru
      _
    // Predicated region
    $region78: #{tpu_custom_call.1} parent=1 // pred_check
      _
    $region79: #{tpu_custom_call.1} parent=1 // pred_check_branch
      %156 = sbr.rel (0) target = $region81
    $region80: #{tpu_custom_call.1} parent=1 // pred_region
      %157 = dma.done [#allocation18], 32
    $region81: #{tpu_custom_call.1} parent=1 // pred_fallthru
      _
    %v159 = vld [vmem:[#allocation2] sm:$0xff]
    %v160 = vpack.c.bf16 %v159, %v159
    %v161 = vld [vmem:[#allocation7] sm:$0xff]
    %v162 = vld [vmem:[#allocation7 + $0x8] sm:$0xff]
    %v163 = vld [vmem:[#allocation7 + $0x10] sm:$0xff]
    %v164 = vld [vmem:[#allocation7 + $0x18] sm:$0xf]
    %v165 = vld [vmem:[#allocation8] sm:$0xff]
    %v167 = vlaneseq
    %v168 = vshrl.u32 %v167, 7
    %v169 = vsub.s32 0, %v168
    %v170 = vrot.slane %v165, %v169
    %v171 = vlaneseq
    %v172 = vshrl.u32 %v171, 7
    %v173 = vsub.s32 1, %v172
    %v174 = vrot.slane %v165, %v173
    %v175 = vlaneseq
    %v176 = vshrl.u32 %v175, 7
    %v177 = vsub.s32 2, %v176
    %v178 = vrot.slane %v165, %v177
    %v179 = vlaneseq
    %v180 = vshrl.u32 %v179, 7
    %v181 = vsub.s32 3, %v180
    %v182 = vrot.slane %v165, %v181
    %v183 = vlaneseq
    %v184 = vshrl.u32 %v183, 7
    %v185 = vsub.s32 4, %v184
    %v186 = vrot.slane %v165, %v185
    %v187 = vlaneseq
    %v188 = vshrl.u32 %v187, 7
    %v189 = vsub.s32 5, %v188
    %v190 = vrot.slane %v165, %v189
    %v191 = vlaneseq
    %v192 = vshrl.u32 %v191, 7
    %v193 = vsub.s32 6, %v192
    %v194 = vrot.slane %v165, %v193
    %v206 = vunpack.c.l.b16 %v161
    %v207 = vunpack.c.h.b16 %v161
    %v208 = vunpack.c.l.b16 %v162
    %v209 = vunpack.c.h.b16 %v162
    %v210 = vunpack.c.l.b16 %v163
    %v211 = vunpack.c.h.b16 %v163
    %v212 = vunpack.c.l.b16 %v164
    %v213 = vpack.c.b16 %v206, %v206
    %v214 = vpack.c.b16 %v207, %v207
    %v215 = vpack.c.b16 %v208, %v208
    %v216 = vpack.c.b16 %v209, %v209
    %v217 = vpack.c.b16 %v210, %v210
    %v218 = vpack.c.b16 %v211, %v211
    %v219 = vpack.c.b16 %v212, %v212
    %vm220 = vcmask 64512
    %v222 = vsel %vm220, %v160, 0
    %vm224 = vcmask 1043456
    %v226 = vsel %vm224, %v213, 0
    %v229 = vsel %vm224, %v214, 0
    %v232 = vsel %vm224, %v215, 0
    %v235 = vsel %vm224, %v216, 0
    %v238 = vsel %vm224, %v217, 0
    %v241 = vsel %vm224, %v218, 0
    %v244 = vsel %vm224, %v219, 0
    %246 = vmatprep.subr.bf16.mxu0 0
    %247 = vmatpush1.bf16.msra.mxu0 0
    %248 = vmatprep.subr.bf16.mxu0 0
    %249 = vmatpush1.bf16.msra.mxu0 0
    %250 = vmatprep.subr.bf16.mxu0 0
    %251 = vmatpush1.bf16.msra.mxu0 0
    %252 = vmatprep.subr.bf16.mxu0 0
    %253 = vmatpush1.bf16.msra.mxu0 0
    %254 = vmatprep.subr.bf16.mxu0 0
    %255 = vmatpush1.bf16.msra.mxu0 0
    %256 = vmatprep.subr.bf16.mxu0 0
    %257 = vmatpush1.bf16.msra.mxu0 0
    %258 = vmatprep.subr.bf16.mxu0 0
    %259 = vmatpush1.bf16.msra.mxu0 0
    %260 = vmatprep.subr.bf16.mxu0 %v229
    %261 = vmatpush1.bf16.msra.mxu0 %v226
    %262 = vmatprep.subr.bf16.mxu0 0
    %263 = vmatpush2.bf16.msra.mxu0 0
    %264 = vmatprep.subr.bf16.mxu0 0
    %265 = vmatpush2.bf16.msra.mxu0 0
    %266 = vmatprep.subr.bf16.mxu0 0
    %267 = vmatpush2.bf16.msra.mxu0 0
    %268 = vmatprep.subr.bf16.mxu0 0
    %269 = vmatpush2.bf16.msra.mxu0 0
    %270 = vmatprep.subr.bf16.mxu0 0
    %271 = vmatpush2.bf16.msra.mxu0 0
    %272 = vmatprep.subr.bf16.mxu0 0
    %273 = vmatpush2.bf16.msra.mxu0 0
    %274 = vmatprep.subr.bf16.mxu0 0
    %275 = vmatpush2.bf16.msra.mxu0 0
    %276 = vmatprep.subr.bf16.mxu0 0
    %277 = vmatpush2.bf16.msra.mxu0 0
    %278 = vmatprep.mubr.bf16.mxu0 0
    %279 = vmatmul.mubr.bf16.gmra.mxu0 %v222
    %v280 = vpop.f32.mrf.mxu0
    %v281 = vadd.f32 %v170, %v280
    %v282 = vpop.f32.mrf.mxu0
    %v283 = vadd.f32 %v174, %v282
    %v284 = vpop.f32.mrf.mxu0
    %v285 = vpop.f32.mrf.mxu0
    %286 = vdwg.mxu0
    %287 = vmatprep.subr.bf16.mxu0 0
    %288 = vmatpush1.bf16.msra.mxu0 0
    %289 = vmatprep.subr.bf16.mxu0 0
    %290 = vmatpush1.bf16.msra.mxu0 0
    %291 = vmatprep.subr.bf16.mxu0 0
    %292 = vmatpush1.bf16.msra.mxu0 0
    %293 = vmatprep.subr.bf16.mxu0 0
    %294 = vmatpush1.bf16.msra.mxu0 0
    %295 = vmatprep.subr.bf16.mxu0 0
    %296 = vmatpush1.bf16.msra.mxu0 0
    %297 = vmatprep.subr.bf16.mxu0 0
    %298 = vmatpush1.bf16.msra.mxu0 0
    %299 = vmatprep.subr.bf16.mxu0 0
    %300 = vmatpush1.bf16.msra.mxu0 0
    %301 = vmatprep.subr.bf16.mxu0 %v235
    %302 = vmatpush1.bf16.msra.mxu0 %v232
    %303 = vmatprep.subr.bf16.mxu0 0
    %304 = vmatpush2.bf16.msra.mxu0 0
    %305 = vmatprep.subr.bf16.mxu0 0
    %306 = vmatpush2.bf16.msra.mxu0 0
    %307 = vmatprep.subr.bf16.mxu0 0
    %308 = vmatpush2.bf16.msra.mxu0 0
    %309 = vmatprep.subr.bf16.mxu0 0
    %310 = vmatpush2.bf16.msra.mxu0 0
    %311 = vmatprep.subr.bf16.mxu0 0
    %312 = vmatpush2.bf16.msra.mxu0 0
    %313 = vmatprep.subr.bf16.mxu0 0
    %314 = vmatpush2.bf16.msra.mxu0 0
    %315 = vmatprep.subr.bf16.mxu0 0
    %316 = vmatpush2.bf16.msra.mxu0 0
    %317 = vmatprep.subr.bf16.mxu0 0
    %318 = vmatpush2.bf16.msra.mxu0 0
    %319 = vmatprep.mubr.bf16.mxu0 0
    %320 = vmatmul.mubr.bf16.gmra.mxu0 %v222
    %v321 = vpop.f32.mrf.mxu0
    %v322 = vadd.f32 %v178, %v321
    %v323 = vpop.f32.mrf.mxu0
    %v324 = vadd.f32 %v182, %v323
    %v325 = vpop.f32.mrf.mxu0
    %v326 = vpop.f32.mrf.mxu0
    %327 = vdwg.mxu0
    %328 = vmatprep.subr.bf16.mxu0 0
    %329 = vmatpush1.bf16.msra.mxu0 0
    %330 = vmatprep.subr.bf16.mxu0 0
    %331 = vmatpush1.bf16.msra.mxu0 0
    %332 = vmatprep.subr.bf16.mxu0 0
    %333 = vmatpush1.bf16.msra.mxu0 0
    %334 = vmatprep.subr.bf16.mxu0 0
    %335 = vmatpush1.bf16.msra.mxu0 0
    %336 = vmatprep.subr.bf16.mxu0 0
    %337 = vmatpush1.bf16.msra.mxu0 0
    %338 = vmatprep.subr.bf16.mxu0 0
    %339 = vmatpush1.bf16.msra.mxu0 0
    %340 = vmatprep.subr.bf16.mxu0 0
    %341 = vmatpush1.bf16.msra.mxu0 0
    %342 = vmatprep.subr.bf16.mxu0 %v241
    %343 = vmatpush1.bf16.msra.mxu0 %v238
    %344 = vmatprep.subr.bf16.mxu0 0
    %345 = vmatpush2.bf16.msra.mxu0 0
    %346 = vmatprep.subr.bf16.mxu0 0
    %347 = vmatpush2.bf16.msra.mxu0 0
    %348 = vmatprep.subr.bf16.mxu0 0
    %349 = vmatpush2.bf16.msra.mxu0 0
    %350 = vmatprep.subr.bf16.mxu0 0
    %351 = vmatpush2.bf16.msra.mxu0 0
    %352 = vmatprep.subr.bf16.mxu0 0
    %353 = vmatpush2.bf16.msra.mxu0 0
    %354 = vmatprep.subr.bf16.mxu0 0
    %355 = vmatpush2.bf16.msra.mxu0 0
    %356 = vmatprep.subr.bf16.mxu0 0
    %357 = vmatpush2.bf16.msra.mxu0 0
    %358 = vmatprep.subr.bf16.mxu0 0
    %359 = vmatpush2.bf16.msra.mxu0 0
    %360 = vmatprep.mubr.bf16.mxu0 0
    %361 = vmatmul.mubr.bf16.gmra.mxu0 %v222
    %v362 = vpop.f32.mrf.mxu0
    %v363 = vadd.f32 %v186, %v362
    %v364 = vpop.f32.mrf.mxu0
    %v365 = vadd.f32 %v190, %v364
    %v366 = vpop.f32.mrf.mxu0
    %v367 = vpop.f32.mrf.mxu0
    %368 = vdwg.mxu0
    %369 = vmatprep.subr.bf16.mxu0 0
    %370 = vmatpush1.bf16.msra.mxu0 0
    %371 = vmatprep.subr.bf16.mxu0 0
    %372 = vmatpush1.bf16.msra.mxu0 0
    %373 = vmatprep.subr.bf16.mxu0 0
    %374 = vmatpush1.bf16.msra.mxu0 0
    %375 = vmatprep.subr.bf16.mxu0 0
    %376 = vmatpush1.bf16.msra.mxu0 0
    %377 = vmatprep.subr.bf16.mxu0 0
    %378 = vmatpush1.bf16.msra.mxu0 0
    %379 = vmatprep.subr.bf16.mxu0 0
    %380 = vmatpush1.bf16.msra.mxu0 0
    %381 = vmatprep.subr.bf16.mxu0 0
    %382 = vmatpush1.bf16.msra.mxu0 0
    %383 = vmatprep.subr.bf16.mxu0 0
    %384 = vmatpush1.bf16.msra.mxu0 %v244
    %385 = vmatprep.subr.bf16.mxu0 0
    %386 = vmatpush2.bf16.msra.mxu0 0
    %387 = vmatprep.subr.bf16.mxu0 0
    %388 = vmatpush2.bf16.msra.mxu0 0
    %389 = vmatprep.subr.bf16.mxu0 0
    %390 = vmatpush2.bf16.msra.mxu0 0
    %391 = vmatprep.subr.bf16.mxu0 0
    %392 = vmatpush2.bf16.msra.mxu0 0
    %393 = vmatprep.subr.bf16.mxu0 0
    %394 = vmatpush2.bf16.msra.mxu0 0
    %395 = vmatprep.subr.bf16.mxu0 0
    %396 = vmatpush2.bf16.msra.mxu0 0
    %397 = vmatprep.subr.bf16.mxu0 0
    %398 = vmatpush2.bf16.msra.mxu0 0
    %399 = vmatprep.subr.bf16.mxu0 0
    %400 = vmatpush2.bf16.msra.mxu0 0
    %401 = vmatprep.mubr.bf16.mxu0 0
    %402 = vmatmul.mubr.bf16.gmra.mxu0 %v222
    %v403 = vpop.f32.mrf.mxu0
    %v404 = vadd.f32 %v194, %v403
    %v405 = vpop.f32.mrf.mxu0
    %v406 = vpop.f32.mrf.mxu0
    %v407 = vpop.f32.mrf.mxu0
    %408 = vdwg.mxu0
    %v409 = vmax.f32 %v281, 0.0
    %v410 = vmax.f32 %v283, 0.0
    %v411 = vmax.f32 %v322, 0.0
    %v412 = vmax.f32 %v324, 0.0
    %v413 = vmax.f32 %v363, 0.0
    %v414 = vmax.f32 %v365, 0.0
    %v415 = vmax.f32 %v404, 0.0
    %v416 = vpack.c.bf16 %v409, %v409
    %v417 = vpack.c.bf16 %v410, %v410
    %v418 = vpack.c.bf16 %v411, %v411
    %v419 = vpack.c.bf16 %v412, %v412
    %v420 = vpack.c.bf16 %v413, %v413
    %v421 = vpack.c.bf16 %v414, %v414
    %v422 = vpack.c.bf16 %v415, %v415
    %v423 = vld [vmem:[#allocation10] sm:$0xff]
    %v424 = vld [vmem:[#allocation10 + $0x8] sm:$0xff]
    %v425 = vld [vmem:[#allocation10 + $0x10] sm:$0xf]
    %v426 = vld [vmem:[#allocation10 + $0x14] sm:$0xff]
    %v427 = vld [vmem:[#allocation10 + $0x1c] sm:$0xff]
    %v428 = vld [vmem:[#allocation10 + $0x24] sm:$0xf]
    %v429 = vld [vmem:[#allocation10 + $0x28] sm:$0xff]
    %v430 = vld [vmem:[#allocation10 + $0x30] sm:$0xff]
    %v431 = vld [vmem:[#allocation10 + $0x38] sm:$0xf]
    %v432 = vld [vmem:[#allocation10 + $0x3c] sm:$0xff]
    %v433 = vld [vmem:[#allocation10 + $0x44] sm:$0xff]
    %v434 = vld [vmem:[#allocation10 + $0x4c] sm:$0xf]
    %v435 = vld [vmem:[#allocation10 + $0x50] sm:$0xff]
    %v436 = vld [vmem:[#allocation10 + $0x58] sm:$0xff]
    %v437 = vld [vmem:[#allocation10 + $0x60] sm:$0xf]
    %v438 = vld [vmem:[#allocation10 + $0x64] sm:$0xff]
    %v439 = vld [vmem:[#allocation10 + $0x6c] sm:$0xff]
    %v440 = vld [vmem:[#allocation10 + $0x74] sm:$0xf]
    %v441 = vld [vmem:[#allocation10 + $0x78] sm:$0xff]
    %v442 = vld [vmem:[#allocation10 + $0x80] sm:$0xff]
    %v443 = vld [vmem:[#allocation10 + $0x88] sm:$0xf]
    %v444 = vld [vmem:[#allocation10 + $0x8c] sm:$0xff]
    %v445 = vld [vmem:[#allocation10 + $0x94] sm:$0xff]
    %v446 = vld [vmem:[#allocation10 + $0x9c] sm:$0xf]
    %v447 = vld [vmem:[#allocation10 + $0xa0] sm:$0xff]
    %v448 = vld [vmem:[#allocation10 + $0xa8] sm:$0xff]
    %v449 = vld [vmem:[#allocation10 + $0xb0] sm:$0xf]
    %v450 = vld [vmem:[#allocation10 + $0xb4] sm:$0xff]
    %v451 = vld [vmem:[#allocation10 + $0xbc] sm:$0xff]
    %v452 = vld [vmem:[#allocation10 + $0xc4] sm:$0xf]
    %v453 = vld [vmem:[#allocation10 + $0xc8] sm:$0xff]
    %v454 = vld [vmem:[#allocation10 + $0xd0] sm:$0xff]
    %v455 = vld [vmem:[#allocation10 + $0xd8] sm:$0xf]
    %v456 = vld [vmem:[#allocation10 + $0xdc] sm:$0xff]
    %v457 = vld [vmem:[#allocation10 + $0xe4] sm:$0xff]
    %v458 = vld [vmem:[#allocation10 + $0xec] sm:$0xf]
    %v459 = vld [vmem:[#allocation10 + $0xf0] sm:$0xff]
    %v460 = vld [vmem:[#allocation10 + $0xf8] sm:$0xff]
    %v461 = vld [vmem:[#allocation10 + $0x100] sm:$0xf]
    %v462 = vld [vmem:[#allocation10 + $0x104] sm:$0xff]
    %v463 = vld [vmem:[#allocation10 + $0x10c] sm:$0xff]
    %v464 = vld [vmem:[#allocation10 + $0x114] sm:$0xf]
    %v465 = vld [vmem:[#allocation10 + $0x118] sm:$0xff]
    %v466 = vld [vmem:[#allocation10 + $0x120] sm:$0xff]
    %v467 = vld [vmem:[#allocation10 + $0x128] sm:$0xf]
    %v468 = vld [vmem:[#allocation10 + $0x12c] sm:$0xff]
    %v469 = vld [vmem:[#allocation10 + $0x134] sm:$0xff]
    %v470 = vld [vmem:[#allocation10 + $0x13c] sm:$0xf]
    %v471 = vld [vmem:[#allocation10 + $0x140] sm:$0xff]
    %v472 = vld [vmem:[#allocation10 + $0x148] sm:$0xff]
    %v473 = vld [vmem:[#allocation10 + $0x150] sm:$0xf]
    %v474 = vld [vmem:[#allocation10 + $0x154] sm:$0xff]
    %v475 = vld [vmem:[#allocation10 + $0x15c] sm:$0xff]
    %v476 = vld [vmem:[#allocation10 + $0x164] sm:$0xf]
    %v477 = vld [vmem:[#allocation10 + $0x168] sm:$0xff]
    %v478 = vld [vmem:[#allocation10 + $0x170] sm:$0xff]
    %v479 = vld [vmem:[#allocation10 + $0x178] sm:$0xf]
    %v480 = vld [vmem:[#allocation10 + $0x17c] sm:$0xff]
    %v481 = vld [vmem:[#allocation10 + $0x184] sm:$0xff]
    %v482 = vld [vmem:[#allocation10 + $0x18c] sm:$0xf]
    %v483 = vld [vmem:[#allocation10 + $0x190] sm:$0xff]
    %v484 = vld [vmem:[#allocation10 + $0x198] sm:$0xff]
    %v485 = vld [vmem:[#allocation10 + $0x1a0] sm:$0xf]
    %v486 = vld [vmem:[#allocation10 + $0x1a4] sm:$0xff]
    %v487 = vld [vmem:[#allocation10 + $0x1ac] sm:$0xff]
    %v488 = vld [vmem:[#allocation10 + $0x1b4] sm:$0xf]
    %v489 = vld [vmem:[#allocation10 + $0x1b8] sm:$0xff]
    %v490 = vld [vmem:[#allocation10 + $0x1c0] sm:$0xff]
    %v491 = vld [vmem:[#allocation10 + $0x1c8] sm:$0xf]
    %v492 = vld [vmem:[#allocation10 + $0x1cc] sm:$0xff]
    %v493 = vld [vmem:[#allocation10 + $0x1d4] sm:$0xff]
    %v494 = vld [vmem:[#allocation10 + $0x1dc] sm:$0xf]
    %v495 = vld [vmem:[#allocation10 + $0x1e0] sm:$0xff]
    %v496 = vld [vmem:[#allocation10 + $0x1e8] sm:$0xff]
    %v497 = vld [vmem:[#allocation10 + $0x1f0] sm:$0xf]
    %v498 = vld [vmem:[#allocation10 + $0x1f4] sm:$0xff]
    %v499 = vld [vmem:[#allocation10 + $0x1fc] sm:$0xff]
    %v500 = vld [vmem:[#allocation10 + $0x204] sm:$0xf]
    %v501 = vld [vmem:[#allocation10 + $0x208] sm:$0xff]
    %v502 = vld [vmem:[#allocation10 + $0x210] sm:$0xff]
    %v503 = vld [vmem:[#allocation10 + $0x218] sm:$0xf]
    %v504 = vld [vmem:[#allocation10 + $0x21c] sm:$0xff]
    %v505 = vld [vmem:[#allocation10 + $0x224] sm:$0xff]
    %v506 = vld [vmem:[#allocation10 + $0x22c] sm:$0xf]
    %v507 = vld [vmem:[#allocation10 + $0x230] sm:$0xff]
    %v508 = vld [vmem:[#allocation10 + $0x238] sm:$0xff]
    %v509 = vld [vmem:[#allocation10 + $0x240] sm:$0xf]
    %v510 = vld [vmem:[#allocation10 + $0x244] sm:$0xff]
    %v511 = vld [vmem:[#allocation10 + $0x24c] sm:$0xff]
    %v512 = vld [vmem:[#allocation10 + $0x254] sm:$0xf]
    %v513 = vld [vmem:[#allocation10 + $0x258] sm:$0xff]
    %v514 = vld [vmem:[#allocation10 + $0x260] sm:$0xff]
    %v515 = vld [vmem:[#allocation10 + $0x268] sm:$0xf]
    %v516 = vld [vmem:[#allocation10 + $0x26c] sm:$0xff]
    %v517 = vld [vmem:[#allocation10 + $0x274] sm:$0xff]
    %v518 = vld [vmem:[#allocation10 + $0x27c] sm:$0xf]
    %v519 = vld [vmem:[#allocation10 + $0x280] sm:$0xff]
    %v520 = vld [vmem:[#allocation10 + $0x288] sm:$0xff]
    %v521 = vld [vmem:[#allocation10 + $0x290] sm:$0xf]
    %v522 = vld [vmem:[#allocation10 + $0x294] sm:$0xff]
    %v523 = vld [vmem:[#allocation10 + $0x29c] sm:$0xff]
    %v524 = vld [vmem:[#allocation10 + $0x2a4] sm:$0xf]
    %v525 = vld [vmem:[#allocation10 + $0x2a8] sm:$0xff]
    %v526 = vld [vmem:[#allocation10 + $0x2b0] sm:$0xff]
    %v527 = vld [vmem:[#allocation10 + $0x2b8] sm:$0xf]
    %v528 = vld [vmem:[#allocation10 + $0x2bc] sm:$0xff]
    %v529 = vld [vmem:[#allocation10 + $0x2c4] sm:$0xff]
    %v530 = vld [vmem:[#allocation10 + $0x2cc] sm:$0xf]
    %v531 = vld [vmem:[#allocation10 + $0x2d0] sm:$0xff]
    %v532 = vld [vmem:[#allocation10 + $0x2d8] sm:$0xff]
    %v533 = vld [vmem:[#allocation10 + $0x2e0] sm:$0xf]
    %v534 = vld [vmem:[#allocation10 + $0x2e4] sm:$0xff]
    %v535 = vld [vmem:[#allocation10 + $0x2ec] sm:$0xff]
    %v536 = vld [vmem:[#allocation10 + $0x2f4] sm:$0xf]
    %v537 = vld [vmem:[#allocation10 + $0x2f8] sm:$0xff]
    %v538 = vld [vmem:[#allocation10 + $0x300] sm:$0xff]
    %v539 = vld [vmem:[#allocation10 + $0x308] sm:$0xf]
    %v540 = vld [vmem:[#allocation10 + $0x30c] sm:$0xff]
    %v541 = vld [vmem:[#allocation10 + $0x314] sm:$0xff]
    %v542 = vld [vmem:[#allocation10 + $0x31c] sm:$0xf]
    %v543 = vld [vmem:[#allocation10 + $0x320] sm:$0xff]
    %v544 = vld [vmem:[#allocation10 + $0x328] sm:$0xff]
    %v545 = vld [vmem:[#allocation10 + $0x330] sm:$0xf]
    %v546 = vld [vmem:[#allocation10 + $0x334] sm:$0xff]
    %v547 = vld [vmem:[#allocation10 + $0x33c] sm:$0xff]
    %v548 = vld [vmem:[#allocation10 + $0x344] sm:$0xf]
    %v549 = vld [vmem:[#allocation10 + $0x348] sm:$0xff]
    %v550 = vld [vmem:[#allocation10 + $0x350] sm:$0xff]
    %v551 = vld [vmem:[#allocation10 + $0x358] sm:$0xf]
    %v552 = vld [vmem:[#allocation10 + $0x35c] sm:$0xff]
    %v553 = vld [vmem:[#allocation10 + $0x364] sm:$0xff]
    %v554 = vld [vmem:[#allocation10 + $0x36c] sm:$0xf]
    %v555 = vld [vmem:[#allocation10 + $0x370] sm:$0xff]
    %v556 = vld [vmem:[#allocation10 + $0x378] sm:$0xff]
    %v557 = vld [vmem:[#allocation10 + $0x380] sm:$0xf]
    %v558 = vld [vmem:[#allocation10 + $0x384] sm:$0xff]
    %v559 = vld [vmem:[#allocation10 + $0x38c] sm:$0xff]
    %v560 = vld [vmem:[#allocation10 + $0x394] sm:$0xf]
    %v561 = vld [vmem:[#allocation10 + $0x398] sm:$0xff]
    %v562 = vld [vmem:[#allocation10 + $0x3a0] sm:$0xff]
    %v563 = vld [vmem:[#allocation10 + $0x3a8] sm:$0xf]
    %v564 = vld [vmem:[#allocation10 + $0x3ac] sm:$0xff]
    %v565 = vld [vmem:[#allocation10 + $0x3b4] sm:$0xff]
    %v566 = vld [vmem:[#allocation10 + $0x3bc] sm:$0xf]
    %v567 = vld [vmem:[#allocation10 + $0x3c0] sm:$0xff]
    %v568 = vld [vmem:[#allocation10 + $0x3c8] sm:$0xff]
    %v569 = vld [vmem:[#allocation10 + $0x3d0] sm:$0xf]
    %v570 = vld [vmem:[#allocation10 + $0x3d4] sm:$0xff]
    %v571 = vld [vmem:[#allocation10 + $0x3dc] sm:$0xff]
    %v572 = vld [vmem:[#allocation10 + $0x3e4] sm:$0xf]
    %v573 = vld [vmem:[#allocation10 + $0x3e8] sm:$0xff]
    %v574 = vld [vmem:[#allocation10 + $0x3f0] sm:$0xff]
    %v575 = vld [vmem:[#allocation10 + $0x3f8] sm:$0xf]
    %v576 = vld [vmem:[#allocation10 + $0x3fc] sm:$0xff]
    %v577 = vld [vmem:[#allocation10 + $0x404] sm:$0xff]
    %v578 = vld [vmem:[#allocation10 + $0x40c] sm:$0xf]
    %v579 = vld [vmem:[#allocation10 + $0x410] sm:$0xff]
    %v580 = vld [vmem:[#allocation10 + $0x418] sm:$0xff]
    %v581 = vld [vmem:[#allocation10 + $0x420] sm:$0xf]
    %v582 = vld [vmem:[#allocation10 + $0x424] sm:$0xff]
    %v583 = vld [vmem:[#allocation10 + $0x42c] sm:$0xff]
    %v584 = vld [vmem:[#allocation10 + $0x434] sm:$0xf]
    %v585 = vld [vmem:[#allocation10 + $0x438] sm:$0xff]
    %v586 = vld [vmem:[#allocation10 + $0x440] sm:$0xff]
    %v587 = vld [vmem:[#allocation10 + $0x448] sm:$0xf]
    %v588 = vld [vmem:[#allocation10 + $0x44c] sm:$0xff]
    %v589 = vld [vmem:[#allocation10 + $0x454] sm:$0xff]
    %v590 = vld [vmem:[#allocation10 + $0x45c] sm:$0xf]
    %v591 = vld [vmem:[#allocation10 + $0x460] sm:$0xff]
    %v592 = vld [vmem:[#allocation10 + $0x468] sm:$0xff]
    %v593 = vld [vmem:[#allocation10 + $0x470] sm:$0xf]
    %v594 = vld [vmem:[#allocation10 + $0x474] sm:$0xff]
    %v595 = vld [vmem:[#allocation10 + $0x47c] sm:$0xff]
    %v596 = vld [vmem:[#allocation10 + $0x484] sm:$0xf]
    %v597 = vld [vmem:[#allocation10 + $0x488] sm:$0xff]
    %v598 = vld [vmem:[#allocation10 + $0x490] sm:$0xff]
    %v599 = vld [vmem:[#allocation10 + $0x498] sm:$0xf]
    %v600 = vld [vmem:[#allocation10 + $0x49c] sm:$0xff]
    %v601 = vld [vmem:[#allocation10 + $0x4a4] sm:$0xff]
    %v602 = vld [vmem:[#allocation10 + $0x4ac] sm:$0xf]
    %v603 = vld [vmem:[#allocation10 + $0x4b0] sm:$0xff]
    %v604 = vld [vmem:[#allocation10 + $0x4b8] sm:$0xff]
    %v605 = vld [vmem:[#allocation10 + $0x4c0] sm:$0xf]
    %v606 = vld [vmem:[#allocation10 + $0x4c4] sm:$0xff]
    %v607 = vld [vmem:[#allocation10 + $0x4cc] sm:$0xff]
    %v608 = vld [vmem:[#allocation10 + $0x4d4] sm:$0xf]
    %v609 = vld [vmem:[#allocation10 + $0x4d8] sm:$0xff]
    %v610 = vld [vmem:[#allocation10 + $0x4e0] sm:$0xff]
    %v611 = vld [vmem:[#allocation10 + $0x4e8] sm:$0xf]
    %v612 = vld [vmem:[#allocation10 + $0x4ec] sm:$0xff]
    %v613 = vld [vmem:[#allocation10 + $0x4f4] sm:$0xff]
    %v614 = vld [vmem:[#allocation10 + $0x4fc] sm:$0xf]
    %v615 = vld [vmem:[#allocation10 + $0x500] sm:$0xff]
    %v616 = vld [vmem:[#allocation10 + $0x508] sm:$0xff]
    %v617 = vld [vmem:[#allocation10 + $0x510] sm:$0xf]
    %v618 = vld [vmem:[#allocation10 + $0x514] sm:$0xff]
    %v619 = vld [vmem:[#allocation10 + $0x51c] sm:$0xff]
    %v620 = vld [vmem:[#allocation10 + $0x524] sm:$0xf]
    %v621 = vld [vmem:[#allocation10 + $0x528] sm:$0xff]
    %v622 = vld [vmem:[#allocation10 + $0x530] sm:$0xff]
    %v623 = vld [vmem:[#allocation10 + $0x538] sm:$0xf]
    %v624 = vld [vmem:[#allocation10 + $0x53c] sm:$0xff]
    %v625 = vld [vmem:[#allocation10 + $0x544] sm:$0xff]
    %v626 = vld [vmem:[#allocation10 + $0x54c] sm:$0xf]
    %v627 = vld [vmem:[#allocation10 + $0x550] sm:$0xff]
    %v628 = vld [vmem:[#allocation10 + $0x558] sm:$0xff]
    %v629 = vld [vmem:[#allocation10 + $0x560] sm:$0xf]
    %v630 = vld [vmem:[#allocation10 + $0x564] sm:$0xff]
    %v631 = vld [vmem:[#allocation10 + $0x56c] sm:$0xff]
    %v632 = vld [vmem:[#allocation10 + $0x574] sm:$0xf]
    %v633 = vld [vmem:[#allocation10 + $0x578] sm:$0xff]
    %v634 = vld [vmem:[#allocation10 + $0x580] sm:$0xff]
    %v635 = vld [vmem:[#allocation10 + $0x588] sm:$0xf]
    %v636 = vld [vmem:[#allocation10 + $0x58c] sm:$0xff]
    %v637 = vld [vmem:[#allocation10 + $0x594] sm:$0xff]
    %v638 = vld [vmem:[#allocation10 + $0x59c] sm:$0xf]
    %v639 = vld [vmem:[#allocation10 + $0x5a0] sm:$0xff]
    %v640 = vld [vmem:[#allocation10 + $0x5a8] sm:$0xff]
    %v641 = vld [vmem:[#allocation10 + $0x5b0] sm:$0xf]
    %v642 = vld [vmem:[#allocation10 + $0x5b4] sm:$0xff]
    %v643 = vld [vmem:[#allocation10 + $0x5bc] sm:$0xff]
    %v644 = vld [vmem:[#allocation10 + $0x5c4] sm:$0xf]
    %v645 = vld [vmem:[#allocation10 + $0x5c8] sm:$0xff]
    %v646 = vld [vmem:[#allocation10 + $0x5d0] sm:$0xff]
    %v647 = vld [vmem:[#allocation10 + $0x5d8] sm:$0xf]
    %v648 = vld [vmem:[#allocation10 + $0x5dc] sm:$0xff]
    %v649 = vld [vmem:[#allocation10 + $0x5e4] sm:$0xff]
    %v650 = vld [vmem:[#allocation10 + $0x5ec] sm:$0xf]
    %v651 = vld [vmem:[#allocation10 + $0x5f0] sm:$0xff]
    %v652 = vld [vmem:[#allocation10 + $0x5f8] sm:$0xff]
    %v653 = vld [vmem:[#allocation10 + $0x600] sm:$0xf]
    %v654 = vld [vmem:[#allocation10 + $0x604] sm:$0xff]
    %v655 = vld [vmem:[#allocation10 + $0x60c] sm:$0xff]
    %v656 = vld [vmem:[#allocation10 + $0x614] sm:$0xf]
    %v657 = vld [vmem:[#allocation10 + $0x618] sm:$0xff]
    %v658 = vld [vmem:[#allocation10 + $0x620] sm:$0xff]
    %v659 = vld [vmem:[#allocation10 + $0x628] sm:$0xf]
    %v660 = vld [vmem:[#allocation10 + $0x62c] sm:$0xff]
    %v661 = vld [vmem:[#allocation10 + $0x634] sm:$0xff]
    %v662 = vld [vmem:[#allocation10 + $0x63c] sm:$0xf]
    %v663 = vld [vmem:[#allocation10 + $0x640] sm:$0xff]
    %v664 = vld [vmem:[#allocation10 + $0x648] sm:$0xff]
    %v665 = vld [vmem:[#allocation10 + $0x650] sm:$0xf]
    %v666 = vld [vmem:[#allocation10 + $0x654] sm:$0xff]
    %v667 = vld [vmem:[#allocation10 + $0x65c] sm:$0xff]
    %v668 = vld [vmem:[#allocation10 + $0x664] sm:$0xf]
    %v669 = vld [vmem:[#allocation10 + $0x668] sm:$0xff]
    %v670 = vld [vmem:[#allocation10 + $0x670] sm:$0xff]
    %v671 = vld [vmem:[#allocation10 + $0x678] sm:$0xf]
    %v672 = vld [vmem:[#allocation10 + $0x67c] sm:$0xff]
    %v673 = vld [vmem:[#allocation10 + $0x684] sm:$0xff]
    %v674 = vld [vmem:[#allocation10 + $0x68c] sm:$0xf]
    %v675 = vld [vmem:[#allocation10 + $0x690] sm:$0xff]
    %v676 = vld [vmem:[#allocation10 + $0x698] sm:$0xff]
    %v677 = vld [vmem:[#allocation10 + $0x6a0] sm:$0xf]
    %v678 = vld [vmem:[#allocation10 + $0x6a4] sm:$0xff]
    %v679 = vld [vmem:[#allocation10 + $0x6ac] sm:$0xff]
    %v680 = vld [vmem:[#allocation10 + $0x6b4] sm:$0xf]
    %v681 = vld [vmem:[#allocation10 + $0x6b8] sm:$0xff]
    %v682 = vld [vmem:[#allocation10 + $0x6c0] sm:$0xff]
    %v683 = vld [vmem:[#allocation10 + $0x6c8] sm:$0xf]
    %v684 = vld [vmem:[#allocation10 + $0x6cc] sm:$0xff]
    %v685 = vld [vmem:[#allocation10 + $0x6d4] sm:$0xff]
    %v686 = vld [vmem:[#allocation10 + $0x6dc] sm:$0xf]
    %v687 = vld [vmem:[#allocation10 + $0x6e0] sm:$0xff]
    %v688 = vld [vmem:[#allocation10 + $0x6e8] sm:$0xff]
    %v689 = vld [vmem:[#allocation10 + $0x6f0] sm:$0xf]
    %v690 = vld [vmem:[#allocation10 + $0x6f4] sm:$0xff]
    %v691 = vld [vmem:[#allocation10 + $0x6fc] sm:$0xff]
    %v692 = vld [vmem:[#allocation10 + $0x704] sm:$0xf]
    %v693 = vld [vmem:[#allocation10 + $0x708] sm:$0xff]
    %v694 = vld [vmem:[#allocation10 + $0x710] sm:$0xff]
    %v695 = vld [vmem:[#allocation10 + $0x718] sm:$0xf]
    %v696 = vld [vmem:[#allocation10 + $0x71c] sm:$0xff]
    %v697 = vld [vmem:[#allocation10 + $0x724] sm:$0xff]
    %v698 = vld [vmem:[#allocation10 + $0x72c] sm:$0xf]
    %v699 = vld [vmem:[#allocation10 + $0x730] sm:$0xff]
    %v700 = vld [vmem:[#allocation10 + $0x738] sm:$0xff]
    %v701 = vld [vmem:[#allocation10 + $0x740] sm:$0xf]
    %v702 = vld [vmem:[#allocation10 + $0x744] sm:$0xff]
    %v703 = vld [vmem:[#allocation10 + $0x74c] sm:$0xff]
    %v704 = vld [vmem:[#allocation10 + $0x754] sm:$0xf]
    %v705 = vld [vmem:[#allocation10 + $0x758] sm:$0xff]
    %v706 = vld [vmem:[#allocation10 + $0x760] sm:$0xff]
    %v707 = vld [vmem:[#allocation10 + $0x768] sm:$0xf]
    %v708 = vld [vmem:[#allocation10 + $0x76c] sm:$0xff]
    %v709 = vld [vmem:[#allocation10 + $0x774] sm:$0xff]
    %v710 = vld [vmem:[#allocation10 + $0x77c] sm:$0xf]
    %v711 = vld [vmem:[#allocation10 + $0x780] sm:$0xff]
    %v712 = vld [vmem:[#allocation10 + $0x788] sm:$0xff]
    %v713 = vld [vmem:[#allocation10 + $0x790] sm:$0xf]
    %v714 = vld [vmem:[#allocation10 + $0x794] sm:$0xff]
    %v715 = vld [vmem:[#allocation10 + $0x79c] sm:$0xff]
    %v716 = vld [vmem:[#allocation10 + $0x7a4] sm:$0xf]
    %v717 = vld [vmem:[#allocation10 + $0x7a8] sm:$0xff]
    %v718 = vld [vmem:[#allocation10 + $0x7b0] sm:$0xff]
    %v719 = vld [vmem:[#allocation10 + $0x7b8] sm:$0xf]
    %v720 = vld [vmem:[#allocation10 + $0x7bc] sm:$0xff]
    %v721 = vld [vmem:[#allocation10 + $0x7c4] sm:$0xff]
    %v722 = vld [vmem:[#allocation10 + $0x7cc] sm:$0xf]
    %v723 = vld [vmem:[#allocation10 + $0x7d0] sm:$0xff]
    %v724 = vld [vmem:[#allocation10 + $0x7d8] sm:$0xff]
    %v725 = vld [vmem:[#allocation10 + $0x7e0] sm:$0xf]
    %v726 = vld [vmem:[#allocation10 + $0x7e4] sm:$0xff]
    %v727 = vld [vmem:[#allocation10 + $0x7ec] sm:$0xff]
    %v728 = vld [vmem:[#allocation10 + $0x7f4] sm:$0xf]
    %v729 = vld [vmem:[#allocation10 + $0x7f8] sm:$0xff]
    %v730 = vld [vmem:[#allocation10 + $0x800] sm:$0xff]
    %v731 = vld [vmem:[#allocation10 + $0x808] sm:$0xf]
    %v732 = vld [vmem:[#allocation10 + $0x80c] sm:$0xff]
    %v733 = vld [vmem:[#allocation10 + $0x814] sm:$0xff]
    %v734 = vld [vmem:[#allocation10 + $0x81c] sm:$0xf]
    %v735 = vld [vmem:[#allocation10 + $0x820] sm:$0xff]
    %v736 = vld [vmem:[#allocation10 + $0x828] sm:$0xff]
    %v737 = vld [vmem:[#allocation10 + $0x830] sm:$0xf]
    %v738 = vld [vmem:[#allocation10 + $0x834] sm:$0xff]
    %v739 = vld [vmem:[#allocation10 + $0x83c] sm:$0xff]
    %v740 = vld [vmem:[#allocation10 + $0x844] sm:$0xf]
    %v741 = vld [vmem:[#allocation10 + $0x848] sm:$0xff]
    %v742 = vld [vmem:[#allocation10 + $0x850] sm:$0xff]
    %v743 = vld [vmem:[#allocation10 + $0x858] sm:$0xf]
    %v744 = vld [vmem:[#allocation10 + $0x85c] sm:$0xff]
    %v745 = vld [vmem:[#allocation10 + $0x864] sm:$0xff]
    %v746 = vld [vmem:[#allocation10 + $0x86c] sm:$0xf]
    %v747 = vld [vmem:[#allocation10 + $0x870] sm:$0xff]
    %v748 = vld [vmem:[#allocation10 + $0x878] sm:$0xff]
    %v749 = vld [vmem:[#allocation10 + $0x880] sm:$0xf]
    %v750 = vld [vmem:[#allocation10 + $0x884] sm:$0xff]
    %v751 = vld [vmem:[#allocation10 + $0x88c] sm:$0xff]
    %v752 = vld [vmem:[#allocation10 + $0x894] sm:$0xf]
    %v753 = vld [vmem:[#allocation10 + $0x898] sm:$0xff]
    %v754 = vld [vmem:[#allocation10 + $0x8a0] sm:$0xff]
    %v755 = vld [vmem:[#allocation10 + $0x8a8] sm:$0xf]
    %v756 = vld [vmem:[#allocation10 + $0x8ac] sm:$0xff]
    %v757 = vld [vmem:[#allocation10 + $0x8b4] sm:$0xff]
    %v758 = vld [vmem:[#allocation10 + $0x8bc] sm:$0xf]
    %v759 = vld [vmem:[#allocation11] sm:$0x1f]
    %v761 = vlaneseq
    %v762 = vshrl.u32 %v761, 7
    %v763 = vsub.s32 0, %v762
    %v764 = vrot.slane %v759, %v763
    %v765 = vlaneseq
    %v766 = vshrl.u32 %v765, 7
    %v767 = vsub.s32 1, %v766
    %v768 = vrot.slane %v759, %v767
    %v769 = vlaneseq
    %v770 = vshrl.u32 %v769, 7
    %v771 = vsub.s32 2, %v770
    %v772 = vrot.slane %v759, %v771
    %v773 = vlaneseq
    %v774 = vshrl.u32 %v773, 7
    %v775 = vsub.s32 3, %v774
    %v776 = vrot.slane %v759, %v775
    %v777 = vlaneseq
    %v778 = vshrl.u32 %v777, 7
    %v779 = vsub.s32 4, %v778
    %v780 = vrot.slane %v759, %v779
    %v1122 = vunpack.c.l.b16 %v423
    %v1123 = vunpack.c.h.b16 %v423
    %v1124 = vunpack.c.l.b16 %v424
    %v1125 = vunpack.c.h.b16 %v424
    %v1126 = vunpack.c.l.b16 %v425
    %v1127 = vunpack.c.l.b16 %v426
    %v1128 = vunpack.c.h.b16 %v426
    %v1129 = vunpack.c.l.b16 %v427
    %v1130 = vunpack.c.h.b16 %v427
    %v1131 = vunpack.c.l.b16 %v428
    %v1132 = vunpack.c.l.b16 %v429
    %v1133 = vunpack.c.h.b16 %v429
    %v1134 = vunpack.c.l.b16 %v430
    %v1135 = vunpack.c.h.b16 %v430
    %v1136 = vunpack.c.l.b16 %v431
    %v1137 = vunpack.c.l.b16 %v432
    %v1138 = vunpack.c.h.b16 %v432
    %v1139 = vunpack.c.l.b16 %v433
    %v1140 = vunpack.c.h.b16 %v433
    %v1141 = vunpack.c.l.b16 %v434
    %v1142 = vunpack.c.l.b16 %v435
    %v1143 = vunpack.c.h.b16 %v435
    %v1144 = vunpack.c.l.b16 %v436
    %v1145 = vunpack.c.h.b16 %v436
    %v1146 = vunpack.c.l.b16 %v437
    %v1147 = vunpack.c.l.b16 %v438
    %v1148 = vunpack.c.h.b16 %v438
    %v1149 = vunpack.c.l.b16 %v439
    %v1150 = vunpack.c.h.b16 %v439
    %v1151 = vunpack.c.l.b16 %v440
    %v1152 = vunpack.c.l.b16 %v441
    %v1153 = vunpack.c.h.b16 %v441
    %v1154 = vunpack.c.l.b16 %v442
    %v1155 = vunpack.c.h.b16 %v442
    %v1156 = vunpack.c.l.b16 %v443
    %v1157 = vunpack.c.l.b16 %v444
    %v1158 = vunpack.c.h.b16 %v444
    %v1159 = vunpack.c.l.b16 %v445
    %v1160 = vunpack.c.h.b16 %v445
    %v1161 = vunpack.c.l.b16 %v446
    %v1162 = vunpack.c.l.b16 %v447
    %v1163 = vunpack.c.h.b16 %v447
    %v1164 = vunpack.c.l.b16 %v448
    %v1165 = vunpack.c.h.b16 %v448
    %v1166 = vunpack.c.l.b16 %v449
    %v1167 = vunpack.c.l.b16 %v450
    %v1168 = vunpack.c.h.b16 %v450
    %v1169 = vunpack.c.l.b16 %v451
    %v1170 = vunpack.c.h.b16 %v451
    %v1171 = vunpack.c.l.b16 %v452
    %v1172 = vunpack.c.l.b16 %v453
    %v1173 = vunpack.c.h.b16 %v453
    %v1174 = vunpack.c.l.b16 %v454
    %v1175 = vunpack.c.h.b16 %v454
    %v1176 = vunpack.c.l.b16 %v455
    %v1177 = vunpack.c.l.b16 %v456
    %v1178 = vunpack.c.h.b16 %v456
    %v1179 = vunpack.c.l.b16 %v457
    %v1180 = vunpack.c.h.b16 %v457
    %v1181 = vunpack.c.l.b16 %v458
    %v1182 = vunpack.c.l.b16 %v459
    %v1183 = vunpack.c.h.b16 %v459
    %v1184 = vunpack.c.l.b16 %v460
    %v1185 = vunpack.c.h.b16 %v460
    %v1186 = vunpack.c.l.b16 %v461
    %v1187 = vunpack.c.l.b16 %v462
    %v1188 = vunpack.c.h.b16 %v462
    %v1189 = vunpack.c.l.b16 %v463
    %v1190 = vunpack.c.h.b16 %v463
    %v1191 = vunpack.c.l.b16 %v464
    %v1192 = vunpack.c.l.b16 %v465
    %v1193 = vunpack.c.h.b16 %v465
    %v1194 = vunpack.c.l.b16 %v466
    %v1195 = vunpack.c.h.b16 %v466
    %v1196 = vunpack.c.l.b16 %v467
    %v1197 = vunpack.c.l.b16 %v468
    %v1198 = vunpack.c.h.b16 %v468
    %v1199 = vunpack.c.l.b16 %v469
    %v1200 = vunpack.c.h.b16 %v469
    %v1201 = vunpack.c.l.b16 %v470
    %v1202 = vunpack.c.l.b16 %v471
    %v1203 = vunpack.c.h.b16 %v471
    %v1204 = vunpack.c.l.b16 %v472
    %v1205 = vunpack.c.h.b16 %v472
    %v1206 = vunpack.c.l.b16 %v473
    %v1207 = vunpack.c.l.b16 %v474
    %v1208 = vunpack.c.h.b16 %v474
    %v1209 = vunpack.c.l.b16 %v475
    %v1210 = vunpack.c.h.b16 %v475
    %v1211 = vunpack.c.l.b16 %v476
    %v1212 = vunpack.c.l.b16 %v477
    %v1213 = vunpack.c.h.b16 %v477
    %v1214 = vunpack.c.l.b16 %v478
    %v1215 = vunpack.c.h.b16 %v478
    %v1216 = vunpack.c.l.b16 %v479
    %v1217 = vunpack.c.l.b16 %v480
    %v1218 = vunpack.c.h.b16 %v480
    %v1219 = vunpack.c.l.b16 %v481
    %v1220 = vunpack.c.h.b16 %v481
    %v1221 = vunpack.c.l.b16 %v482
    %v1222 = vunpack.c.l.b16 %v483
    %v1223 = vunpack.c.h.b16 %v483
    %v1224 = vunpack.c.l.b16 %v484
    %v1225 = vunpack.c.h.b16 %v484
    %v1226 = vunpack.c.l.b16 %v485
    %v1227 = vunpack.c.l.b16 %v486
    %v1228 = vunpack.c.h.b16 %v486
    %v1229 = vunpack.c.l.b16 %v487
    %v1230 = vunpack.c.h.b16 %v487
    %v1231 = vunpack.c.l.b16 %v488
    %v1232 = vunpack.c.l.b16 %v489
    %v1233 = vunpack.c.h.b16 %v489
    %v1234 = vunpack.c.l.b16 %v490
    %v1235 = vunpack.c.h.b16 %v490
    %v1236 = vunpack.c.l.b16 %v491
    %v1237 = vunpack.c.l.b16 %v492
    %v1238 = vunpack.c.h.b16 %v492
    %v1239 = vunpack.c.l.b16 %v493
    %v1240 = vunpack.c.h.b16 %v493
    %v1241 = vunpack.c.l.b16 %v494
    %v1242 = vunpack.c.l.b16 %v495
    %v1243 = vunpack.c.h.b16 %v495
    %v1244 = vunpack.c.l.b16 %v496
    %v1245 = vunpack.c.h.b16 %v496
    %v1246 = vunpack.c.l.b16 %v497
    %v1247 = vunpack.c.l.b16 %v498
    %v1248 = vunpack.c.h.b16 %v498
    %v1249 = vunpack.c.l.b16 %v499
    %v1250 = vunpack.c.h.b16 %v499
    %v1251 = vunpack.c.l.b16 %v500
    %v1252 = vunpack.c.l.b16 %v501
    %v1253 = vunpack.c.h.b16 %v501
    %v1254 = vunpack.c.l.b16 %v502
    %v1255 = vunpack.c.h.b16 %v502
    %v1256 = vunpack.c.l.b16 %v503
    %v1257 = vunpack.c.l.b16 %v504
    %v1258 = vunpack.c.h.b16 %v504
    %v1259 = vunpack.c.l.b16 %v505
    %v1260 = vunpack.c.h.b16 %v505
    %v1261 = vunpack.c.l.b16 %v506
    %v1262 = vunpack.c.l.b16 %v507
    %v1263 = vunpack.c.h.b16 %v507
    %v1264 = vunpack.c.l.b16 %v508
    %v1265 = vunpack.c.h.b16 %v508
    %v1266 = vunpack.c.l.b16 %v509
    %v1267 = vunpack.c.l.b16 %v510
    %v1268 = vunpack.c.h.b16 %v510
    %v1269 = vunpack.c.l.b16 %v511
    %v1270 = vunpack.c.h.b16 %v511
    %v1271 = vunpack.c.l.b16 %v512
    %v1272 = vunpack.c.l.b16 %v513
    %v1273 = vunpack.c.h.b16 %v513
    %v1274 = vunpack.c.l.b16 %v514
    %v1275 = vunpack.c.h.b16 %v514
    %v1276 = vunpack.c.l.b16 %v515
    %v1277 = vunpack.c.l.b16 %v516
    %v1278 = vunpack.c.h.b16 %v516
    %v1279 = vunpack.c.l.b16 %v517
    %v1280 = vunpack.c.h.b16 %v517
    %v1281 = vunpack.c.l.b16 %v518
    %v1282 = vunpack.c.l.b16 %v519
    %v1283 = vunpack.c.h.b16 %v519
    %v1284 = vunpack.c.l.b16 %v520
    %v1285 = vunpack.c.h.b16 %v520
    %v1286 = vunpack.c.l.b16 %v521
    %v1287 = vunpack.c.l.b16 %v522
    %v1288 = vunpack.c.h.b16 %v522
    %v1289 = vunpack.c.l.b16 %v523
    %v1290 = vunpack.c.h.b16 %v523
    %v1291 = vunpack.c.l.b16 %v524
    %v1292 = vunpack.c.l.b16 %v525
    %v1293 = vunpack.c.h.b16 %v525
    %v1294 = vunpack.c.l.b16 %v526
    %v1295 = vunpack.c.h.b16 %v526
    %v1296 = vunpack.c.l.b16 %v527
    %v1297 = vunpack.c.l.b16 %v528
    %v1298 = vunpack.c.h.b16 %v528
    %v1299 = vunpack.c.l.b16 %v529
    %v1300 = vunpack.c.h.b16 %v529
    %v1301 = vunpack.c.l.b16 %v530
    %v1302 = vunpack.c.l.b16 %v531
    %v1303 = vunpack.c.h.b16 %v531
    %v1304 = vunpack.c.l.b16 %v532
    %v1305 = vunpack.c.h.b16 %v532
    %v1306 = vunpack.c.l.b16 %v533
    %v1307 = vunpack.c.l.b16 %v534
    %v1308 = vunpack.c.h.b16 %v534
    %v1309 = vunpack.c.l.b16 %v535
    %v1310 = vunpack.c.h.b16 %v535
    %v1311 = vunpack.c.l.b16 %v536
    %v1312 = vunpack.c.l.b16 %v537
    %v1313 = vunpack.c.h.b16 %v537
    %v1314 = vunpack.c.l.b16 %v538
    %v1315 = vunpack.c.h.b16 %v538
    %v1316 = vunpack.c.l.b16 %v539
    %v1317 = vunpack.c.l.b16 %v540
    %v1318 = vunpack.c.h.b16 %v540
    %v1319 = vunpack.c.l.b16 %v541
    %v1320 = vunpack.c.h.b16 %v541
    %v1321 = vunpack.c.l.b16 %v542
    %v1322 = vunpack.c.l.b16 %v543
    %v1323 = vunpack.c.h.b16 %v543
    %v1324 = vunpack.c.l.b16 %v544
    %v1325 = vunpack.c.h.b16 %v544
    %v1326 = vunpack.c.l.b16 %v545
    %v1327 = vunpack.c.l.b16 %v546
    %v1328 = vunpack.c.h.b16 %v546
    %v1329 = vunpack.c.l.b16 %v547
    %v1330 = vunpack.c.h.b16 %v547
    %v1331 = vunpack.c.l.b16 %v548
    %v1332 = vunpack.c.l.b16 %v549
    %v1333 = vunpack.c.h.b16 %v549
    %v1334 = vunpack.c.l.b16 %v550
    %v1335 = vunpack.c.h.b16 %v550
    %v1336 = vunpack.c.l.b16 %v551
    %v1337 = vunpack.c.l.b16 %v552
    %v1338 = vunpack.c.h.b16 %v552
    %v1339 = vunpack.c.l.b16 %v553
    %v1340 = vunpack.c.h.b16 %v553
    %v1341 = vunpack.c.l.b16 %v554
    %v1342 = vunpack.c.l.b16 %v555
    %v1343 = vunpack.c.h.b16 %v555
    %v1344 = vunpack.c.l.b16 %v556
    %v1345 = vunpack.c.h.b16 %v556
    %v1346 = vunpack.c.l.b16 %v557
    %v1347 = vunpack.c.l.b16 %v558
    %v1348 = vunpack.c.h.b16 %v558
    %v1349 = vunpack.c.l.b16 %v559
    %v1350 = vunpack.c.h.b16 %v559
    %v1351 = vunpack.c.l.b16 %v560
    %v1352 = vunpack.c.l.b16 %v561
    %v1353 = vunpack.c.h.b16 %v561
    %v1354 = vunpack.c.l.b16 %v562
    %v1355 = vunpack.c.h.b16 %v562
    %v1356 = vunpack.c.l.b16 %v563
    %v1357 = vunpack.c.l.b16 %v564
    %v1358 = vunpack.c.h.b16 %v564
    %v1359 = vunpack.c.l.b16 %v565
    %v1360 = vunpack.c.h.b16 %v565
    %v1361 = vunpack.c.l.b16 %v566
    %v1362 = vunpack.c.l.b16 %v567
    %v1363 = vunpack.c.h.b16 %v567
    %v1364 = vunpack.c.l.b16 %v568
    %v1365 = vunpack.c.h.b16 %v568
    %v1366 = vunpack.c.l.b16 %v569
    %v1367 = vunpack.c.l.b16 %v570
    %v1368 = vunpack.c.h.b16 %v570
    %v1369 = vunpack.c.l.b16 %v571
    %v1370 = vunpack.c.h.b16 %v571
    %v1371 = vunpack.c.l.b16 %v572
    %v1372 = vunpack.c.l.b16 %v573
    %v1373 = vunpack.c.h.b16 %v573
    %v1374 = vunpack.c.l.b16 %v574
    %v1375 = vunpack.c.h.b16 %v574
    %v1376 = vunpack.c.l.b16 %v575
    %v1377 = vunpack.c.l.b16 %v576
    %v1378 = vunpack.c.h.b16 %v576
    %v1379 = vunpack.c.l.b16 %v577
    %v1380 = vunpack.c.h.b16 %v577
    %v1381 = vunpack.c.l.b16 %v578
    %v1382 = vunpack.c.l.b16 %v579
    %v1383 = vunpack.c.h.b16 %v579
    %v1384 = vunpack.c.l.b16 %v580
    %v1385 = vunpack.c.h.b16 %v580
    %v1386 = vunpack.c.l.b16 %v581
    %v1387 = vunpack.c.l.b16 %v582
    %v1388 = vunpack.c.h.b16 %v582
    %v1389 = vunpack.c.l.b16 %v583
    %v1390 = vunpack.c.h.b16 %v583
    %v1391 = vunpack.c.l.b16 %v584
    %v1392 = vunpack.c.l.b16 %v585
    %v1393 = vunpack.c.h.b16 %v585
    %v1394 = vunpack.c.l.b16 %v586
    %v1395 = vunpack.c.h.b16 %v586
    %v1396 = vunpack.c.l.b16 %v587
    %v1397 = vunpack.c.l.b16 %v588
    %v1398 = vunpack.c.h.b16 %v588
    %v1399 = vunpack.c.l.b16 %v589
    %v1400 = vunpack.c.h.b16 %v589
    %v1401 = vunpack.c.l.b16 %v590
    %v1402 = vunpack.c.l.b16 %v591
    %v1403 = vunpack.c.h.b16 %v591
    %v1404 = vunpack.c.l.b16 %v592
    %v1405 = vunpack.c.h.b16 %v592
    %v1406 = vunpack.c.l.b16 %v593
    %v1407 = vunpack.c.l.b16 %v594
    %v1408 = vunpack.c.h.b16 %v594
    %v1409 = vunpack.c.l.b16 %v595
    %v1410 = vunpack.c.h.b16 %v595
    %v1411 = vunpack.c.l.b16 %v596
    %v1412 = vunpack.c.l.b16 %v597
    %v1413 = vunpack.c.h.b16 %v597
    %v1414 = vunpack.c.l.b16 %v598
    %v1415 = vunpack.c.h.b16 %v598
    %v1416 = vunpack.c.l.b16 %v599
    %v1417 = vunpack.c.l.b16 %v600
    %v1418 = vunpack.c.h.b16 %v600
    %v1419 = vunpack.c.l.b16 %v601
    %v1420 = vunpack.c.h.b16 %v601
    %v1421 = vunpack.c.l.b16 %v602
    %v1422 = vunpack.c.l.b16 %v603
    %v1423 = vunpack.c.h.b16 %v603
    %v1424 = vunpack.c.l.b16 %v604
    %v1425 = vunpack.c.h.b16 %v604
    %v1426 = vunpack.c.l.b16 %v605
    %v1427 = vunpack.c.l.b16 %v606
    %v1428 = vunpack.c.h.b16 %v606
    %v1429 = vunpack.c.l.b16 %v607
    %v1430 = vunpack.c.h.b16 %v607
    %v1431 = vunpack.c.l.b16 %v608
    %v1432 = vunpack.c.l.b16 %v609
    %v1433 = vunpack.c.h.b16 %v609
    %v1434 = vunpack.c.l.b16 %v610
    %v1435 = vunpack.c.h.b16 %v610
    %v1436 = vunpack.c.l.b16 %v611
    %v1437 = vunpack.c.l.b16 %v612
    %v1438 = vunpack.c.h.b16 %v612
    %v1439 = vunpack.c.l.b16 %v613
    %v1440 = vunpack.c.h.b16 %v613
    %v1441 = vunpack.c.l.b16 %v614
    %v1442 = vunpack.c.l.b16 %v615
    %v1443 = vunpack.c.h.b16 %v615
    %v1444 = vunpack.c.l.b16 %v616
    %v1445 = vunpack.c.h.b16 %v616
    %v1446 = vunpack.c.l.b16 %v617
    %v1447 = vunpack.c.l.b16 %v618
    %v1448 = vunpack.c.h.b16 %v618
    %v1449 = vunpack.c.l.b16 %v619
    %v1450 = vunpack.c.h.b16 %v619
    %v1451 = vunpack.c.l.b16 %v620
    %v1452 = vunpack.c.l.b16 %v621
    %v1453 = vunpack.c.h.b16 %v621
    %v1454 = vunpack.c.l.b16 %v622
    %v1455 = vunpack.c.h.b16 %v622
    %v1456 = vunpack.c.l.b16 %v623
    %v1457 = vunpack.c.l.b16 %v624
    %v1458 = vunpack.c.h.b16 %v624
    %v1459 = vunpack.c.l.b16 %v625
    %v1460 = vunpack.c.h.b16 %v625
    %v1461 = vunpack.c.l.b16 %v626
    %v1462 = vunpack.c.l.b16 %v627
    %v1463 = vunpack.c.h.b16 %v627
    %v1464 = vunpack.c.l.b16 %v628
    %v1465 = vunpack.c.h.b16 %v628
    %v1466 = vunpack.c.l.b16 %v629
    %v1467 = vunpack.c.l.b16 %v630
    %v1468 = vunpack.c.h.b16 %v630
    %v1469 = vunpack.c.l.b16 %v631
    %v1470 = vunpack.c.h.b16 %v631
    %v1471 = vunpack.c.l.b16 %v632
    %v1472 = vunpack.c.l.b16 %v633
    %v1473 = vunpack.c.h.b16 %v633
    %v1474 = vunpack.c.l.b16 %v634
    %v1475 = vunpack.c.h.b16 %v634
    %v1476 = vunpack.c.l.b16 %v635
    %v1477 = vunpack.c.l.b16 %v636
    %v1478 = vunpack.c.h.b16 %v636
    %v1479 = vunpack.c.l.b16 %v637
    %v1480 = vunpack.c.h.b16 %v637
    %v1481 = vunpack.c.l.b16 %v638
    %v1482 = vunpack.c.l.b16 %v639
    %v1483 = vunpack.c.h.b16 %v639
    %v1484 = vunpack.c.l.b16 %v640
    %v1485 = vunpack.c.h.b16 %v640
    %v1486 = vunpack.c.l.b16 %v641
    %v1487 = vunpack.c.l.b16 %v642
    %v1488 = vunpack.c.h.b16 %v642
    %v1489 = vunpack.c.l.b16 %v643
    %v1490 = vunpack.c.h.b16 %v643
    %v1491 = vunpack.c.l.b16 %v644
    %v1492 = vunpack.c.l.b16 %v645
    %v1493 = vunpack.c.h.b16 %v645
    %v1494 = vunpack.c.l.b16 %v646
    %v1495 = vunpack.c.h.b16 %v646
    %v1496 = vunpack.c.l.b16 %v647
    %v1497 = vunpack.c.l.b16 %v648
    %v1498 = vunpack.c.h.b16 %v648
    %v1499 = vunpack.c.l.b16 %v649
    %v1500 = vunpack.c.h.b16 %v649
    %v1501 = vunpack.c.l.b16 %v650
    %v1502 = vunpack.c.l.b16 %v651
    %v1503 = vunpack.c.h.b16 %v651
    %v1504 = vunpack.c.l.b16 %v652
    %v1505 = vunpack.c.h.b16 %v652
    %v1506 = vunpack.c.l.b16 %v653
    %v1507 = vunpack.c.l.b16 %v654
    %v1508 = vunpack.c.h.b16 %v654
    %v1509 = vunpack.c.l.b16 %v655
    %v1510 = vunpack.c.h.b16 %v655
    %v1511 = vunpack.c.l.b16 %v656
    %v1512 = vunpack.c.l.b16 %v657
    %v1513 = vunpack.c.h.b16 %v657
    %v1514 = vunpack.c.l.b16 %v658
    %v1515 = vunpack.c.h.b16 %v658
    %v1516 = vunpack.c.l.b16 %v659
    %v1517 = vunpack.c.l.b16 %v660
    %v1518 = vunpack.c.h.b16 %v660
    %v1519 = vunpack.c.l.b16 %v661
    %v1520 = vunpack.c.h.b16 %v661
    %v1521 = vunpack.c.l.b16 %v662
    %v1522 = vunpack.c.l.b16 %v663
    %v1523 = vunpack.c.h.b16 %v663
    %v1524 = vunpack.c.l.b16 %v664
    %v1525 = vunpack.c.h.b16 %v664
    %v1526 = vunpack.c.l.b16 %v665
    %v1527 = vunpack.c.l.b16 %v666
    %v1528 = vunpack.c.h.b16 %v666
    %v1529 = vunpack.c.l.b16 %v667
    %v1530 = vunpack.c.h.b16 %v667
    %v1531 = vunpack.c.l.b16 %v668
    %v1532 = vunpack.c.l.b16 %v669
    %v1533 = vunpack.c.h.b16 %v669
    %v1534 = vunpack.c.l.b16 %v670
    %v1535 = vunpack.c.h.b16 %v670
    %v1536 = vunpack.c.l.b16 %v671
    %v1537 = vunpack.c.l.b16 %v672
    %v1538 = vunpack.c.h.b16 %v672
    %v1539 = vunpack.c.l.b16 %v673
    %v1540 = vunpack.c.h.b16 %v673
    %v1541 = vunpack.c.l.b16 %v674
    %v1542 = vunpack.c.l.b16 %v675
    %v1543 = vunpack.c.h.b16 %v675
    %v1544 = vunpack.c.l.b16 %v676
    %v1545 = vunpack.c.h.b16 %v676
    %v1546 = vunpack.c.l.b16 %v677
    %v1547 = vunpack.c.l.b16 %v678
    %v1548 = vunpack.c.h.b16 %v678
    %v1549 = vunpack.c.l.b16 %v679
    %v1550 = vunpack.c.h.b16 %v679
    %v1551 = vunpack.c.l.b16 %v680
    %v1552 = vunpack.c.l.b16 %v681
    %v1553 = vunpack.c.h.b16 %v681
    %v1554 = vunpack.c.l.b16 %v682
    %v1555 = vunpack.c.h.b16 %v682
    %v1556 = vunpack.c.l.b16 %v683
    %v1557 = vunpack.c.l.b16 %v684
    %v1558 = vunpack.c.h.b16 %v684
    %v1559 = vunpack.c.l.b16 %v685
    %v1560 = vunpack.c.h.b16 %v685
    %v1561 = vunpack.c.l.b16 %v686
    %v1562 = vunpack.c.l.b16 %v687
    %v1563 = vunpack.c.h.b16 %v687
    %v1564 = vunpack.c.l.b16 %v688
    %v1565 = vunpack.c.h.b16 %v688
    %v1566 = vunpack.c.l.b16 %v689
    %v1567 = vunpack.c.l.b16 %v690
    %v1568 = vunpack.c.h.b16 %v690
    %v1569 = vunpack.c.l.b16 %v691
    %v1570 = vunpack.c.h.b16 %v691
    %v1571 = vunpack.c.l.b16 %v692
    %v1572 = vunpack.c.l.b16 %v693
    %v1573 = vunpack.c.h.b16 %v693
    %v1574 = vunpack.c.l.b16 %v694
    %v1575 = vunpack.c.h.b16 %v694
    %v1576 = vunpack.c.l.b16 %v695
    %v1577 = vunpack.c.l.b16 %v696
    %v1578 = vunpack.c.h.b16 %v696
    %v1579 = vunpack.c.l.b16 %v697
    %v1580 = vunpack.c.h.b16 %v697
    %v1581 = vunpack.c.l.b16 %v698
    %v1582 = vunpack.c.l.b16 %v699
    %v1583 = vunpack.c.h.b16 %v699
    %v1584 = vunpack.c.l.b16 %v700
    %v1585 = vunpack.c.h.b16 %v700
    %v1586 = vunpack.c.l.b16 %v701
    %v1587 = vunpack.c.l.b16 %v702
    %v1588 = vunpack.c.h.b16 %v702
    %v1589 = vunpack.c.l.b16 %v703
    %v1590 = vunpack.c.h.b16 %v703
    %v1591 = vunpack.c.l.b16 %v704
    %v1592 = vunpack.c.l.b16 %v705
    %v1593 = vunpack.c.h.b16 %v705
    %v1594 = vunpack.c.l.b16 %v706
    %v1595 = vunpack.c.h.b16 %v706
    %v1596 = vunpack.c.l.b16 %v707
    %v1597 = vunpack.c.l.b16 %v708
    %v1598 = vunpack.c.h.b16 %v708
    %v1599 = vunpack.c.l.b16 %v709
    %v1600 = vunpack.c.h.b16 %v709
    %v1601 = vunpack.c.l.b16 %v710
    %v1602 = vunpack.c.l.b16 %v711
    %v1603 = vunpack.c.h.b16 %v711
    %v1604 = vunpack.c.l.b16 %v712
    %v1605 = vunpack.c.h.b16 %v712
    %v1606 = vunpack.c.l.b16 %v713
    %v1607 = vunpack.c.l.b16 %v714
    %v1608 = vunpack.c.h.b16 %v714
    %v1609 = vunpack.c.l.b16 %v715
    %v1610 = vunpack.c.h.b16 %v715
    %v1611 = vunpack.c.l.b16 %v716
    %v1612 = vunpack.c.l.b16 %v717
    %v1613 = vunpack.c.h.b16 %v717
    %v1614 = vunpack.c.l.b16 %v718
    %v1615 = vunpack.c.h.b16 %v718
    %v1616 = vunpack.c.l.b16 %v719
    %v1617 = vunpack.c.l.b16 %v720
    %v1618 = vunpack.c.h.b16 %v720
    %v1619 = vunpack.c.l.b16 %v721
    %v1620 = vunpack.c.h.b16 %v721
    %v1621 = vunpack.c.l.b16 %v722
    %v1622 = vunpack.c.l.b16 %v723
    %v1623 = vunpack.c.h.b16 %v723
    %v1624 = vunpack.c.l.b16 %v724
    %v1625 = vunpack.c.h.b16 %v724
    %v1626 = vunpack.c.l.b16 %v725
    %v1627 = vunpack.c.l.b16 %v726
    %v1628 = vunpack.c.h.b16 %v726
    %v1629 = vunpack.c.l.b16 %v727
    %v1630 = vunpack.c.h.b16 %v727
    %v1631 = vunpack.c.l.b16 %v728
    %v1632 = vunpack.c.l.b16 %v729
    %v1633 = vunpack.c.h.b16 %v729
    %v1634 = vunpack.c.l.b16 %v730
    %v1635 = vunpack.c.h.b16 %v730
    %v1636 = vunpack.c.l.b16 %v731
    %v1637 = vunpack.c.l.b16 %v732
    %v1638 = vunpack.c.h.b16 %v732
    %v1639 = vunpack.c.l.b16 %v733
    %v1640 = vunpack.c.h.b16 %v733
    %v1641 = vunpack.c.l.b16 %v734
    %v1642 = vunpack.c.l.b16 %v735
    %v1643 = vunpack.c.h.b16 %v735
    %v1644 = vunpack.c.l.b16 %v736
    %v1645 = vunpack.c.h.b16 %v736
    %v1646 = vunpack.c.l.b16 %v737
    %v1647 = vunpack.c.l.b16 %v738
    %v1648 = vunpack.c.h.b16 %v738
    %v1649 = vunpack.c.l.b16 %v739
    %v1650 = vunpack.c.h.b16 %v739
    %v1651 = vunpack.c.l.b16 %v740
    %v1652 = vunpack.c.l.b16 %v741
    %v1653 = vunpack.c.h.b16 %v741
    %v1654 = vunpack.c.l.b16 %v742
    %v1655 = vunpack.c.h.b16 %v742
    %v1656 = vunpack.c.l.b16 %v743
    %v1657 = vunpack.c.l.b16 %v744
    %v1658 = vunpack.c.h.b16 %v744
    %v1659 = vunpack.c.l.b16 %v745
    %v1660 = vunpack.c.h.b16 %v745
    %v1661 = vunpack.c.l.b16 %v746
    %v1662 = vunpack.c.l.b16 %v747
    %v1663 = vunpack.c.h.b16 %v747
    %v1664 = vunpack.c.l.b16 %v748
    %v1665 = vunpack.c.h.b16 %v748
    %v1666 = vunpack.c.l.b16 %v749
    %v1667 = vunpack.c.l.b16 %v750
    %v1668 = vunpack.c.h.b16 %v750
    %v1669 = vunpack.c.l.b16 %v751
    %v1670 = vunpack.c.h.b16 %v751
    %v1671 = vunpack.c.l.b16 %v752
    %v1672 = vunpack.c.l.b16 %v753
    %v1673 = vunpack.c.h.b16 %v753
    %v1674 = vunpack.c.l.b16 %v754
    %v1675 = vunpack.c.h.b16 %v754
    %v1676 = vunpack.c.l.b16 %v755
    %v1677 = vunpack.c.l.b16 %v756
    %v1678 = vunpack.c.h.b16 %v756
    %v1679 = vunpack.c.l.b16 %v757
    %v1680 = vunpack.c.h.b16 %v757
    %v1681 = vunpack.c.l.b16 %v758
    %v1682 = vpack.c.b16 %v1127, %v1122
    %v1683 = vpack.c.b16 %v1128, %v1123
    %v1684 = vpack.c.b16 %v1129, %v1124
    %v1685 = vpack.c.b16 %v1130, %v1125
    %v1686 = vpack.c.b16 %v1131, %v1126
    %v1687 = vpack.c.b16 %v1137, %v1132
    %v1688 = vpack.c.b16 %v1138, %v1133
    %v1689 = vpack.c.b16 %v1139, %v1134
    %v1690 = vpack.c.b16 %v1140, %v1135
    %v1691 = vpack.c.b16 %v1141, %v1136
    %v1692 = vpack.c.b16 %v1147, %v1142
    %v1693 = vpack.c.b16 %v1148, %v1143
    %v1694 = vpack.c.b16 %v1149, %v1144
    %v1695 = vpack.c.b16 %v1150, %v1145
    %v1696 = vpack.c.b16 %v1151, %v1146
    %v1697 = vpack.c.b16 %v1157, %v1152
    %v1698 = vpack.c.b16 %v1158, %v1153
    %v1699 = vpack.c.b16 %v1159, %v1154
    %v1700 = vpack.c.b16 %v1160, %v1155
    %v1701 = vpack.c.b16 %v1161, %v1156
    %v1702 = vpack.c.b16 %v1167, %v1162
    %v1703 = vpack.c.b16 %v1168, %v1163
    %v1704 = vpack.c.b16 %v1169, %v1164
    %v1705 = vpack.c.b16 %v1170, %v1165
    %v1706 = vpack.c.b16 %v1171, %v1166
    %v1707 = vpack.c.b16 %v1177, %v1172
    %v1708 = vpack.c.b16 %v1178, %v1173
    %v1709 = vpack.c.b16 %v1179, %v1174
    %v1710 = vpack.c.b16 %v1180, %v1175
    %v1711 = vpack.c.b16 %v1181, %v1176
    %v1712 = vpack.c.b16 %v1187, %v1182
    %v1713 = vpack.c.b16 %v1188, %v1183
    %v1714 = vpack.c.b16 %v1189, %v1184
    %v1715 = vpack.c.b16 %v1190, %v1185
    %v1716 = vpack.c.b16 %v1191, %v1186
    %v1717 = vpack.c.b16 %v1197, %v1192
    %v1718 = vpack.c.b16 %v1198, %v1193
    %v1719 = vpack.c.b16 %v1199, %v1194
    %v1720 = vpack.c.b16 %v1200, %v1195
    %v1721 = vpack.c.b16 %v1201, %v1196
    %v1722 = vpack.c.b16 %v1207, %v1202
    %v1723 = vpack.c.b16 %v1208, %v1203
    %v1724 = vpack.c.b16 %v1209, %v1204
    %v1725 = vpack.c.b16 %v1210, %v1205
    %v1726 = vpack.c.b16 %v1211, %v1206
    %v1727 = vpack.c.b16 %v1217, %v1212
    %v1728 = vpack.c.b16 %v1218, %v1213
    %v1729 = vpack.c.b16 %v1219, %v1214
    %v1730 = vpack.c.b16 %v1220, %v1215
    %v1731 = vpack.c.b16 %v1221, %v1216
    %v1732 = vpack.c.b16 %v1227, %v1222
    %v1733 = vpack.c.b16 %v1228, %v1223
    %v1734 = vpack.c.b16 %v1229, %v1224
    %v1735 = vpack.c.b16 %v1230, %v1225
    %v1736 = vpack.c.b16 %v1231, %v1226
    %v1737 = vpack.c.b16 %v1237, %v1232
    %v1738 = vpack.c.b16 %v1238, %v1233
    %v1739 = vpack.c.b16 %v1239, %v1234
    %v1740 = vpack.c.b16 %v1240, %v1235
    %v1741 = vpack.c.b16 %v1241, %v1236
    %v1742 = vpack.c.b16 %v1247, %v1242
    %v1743 = vpack.c.b16 %v1248, %v1243
    %v1744 = vpack.c.b16 %v1249, %v1244
    %v1745 = vpack.c.b16 %v1250, %v1245
    %v1746 = vpack.c.b16 %v1251, %v1246
    %v1747 = vpack.c.b16 %v1257, %v1252
    %v1748 = vpack.c.b16 %v1258, %v1253
    %v1749 = vpack.c.b16 %v1259, %v1254
    %v1750 = vpack.c.b16 %v1260, %v1255
    %v1751 = vpack.c.b16 %v1261, %v1256
    %v1752 = vpack.c.b16 %v1267, %v1262
    %v1753 = vpack.c.b16 %v1268, %v1263
    %v1754 = vpack.c.b16 %v1269, %v1264
    %v1755 = vpack.c.b16 %v1270, %v1265
    %v1756 = vpack.c.b16 %v1271, %v1266
    %v1757 = vpack.c.b16 %v1277, %v1272
    %v1758 = vpack.c.b16 %v1278, %v1273
    %v1759 = vpack.c.b16 %v1279, %v1274
    %v1760 = vpack.c.b16 %v1280, %v1275
    %v1761 = vpack.c.b16 %v1281, %v1276
    %v1762 = vpack.c.b16 %v1287, %v1282
    %v1763 = vpack.c.b16 %v1288, %v1283
    %v1764 = vpack.c.b16 %v1289, %v1284
    %v1765 = vpack.c.b16 %v1290, %v1285
    %v1766 = vpack.c.b16 %v1291, %v1286
    %v1767 = vpack.c.b16 %v1297, %v1292
    %v1768 = vpack.c.b16 %v1298, %v1293
    %v1769 = vpack.c.b16 %v1299, %v1294
    %v1770 = vpack.c.b16 %v1300, %v1295
    %v1771 = vpack.c.b16 %v1301, %v1296
    %v1772 = vpack.c.b16 %v1307, %v1302
    %v1773 = vpack.c.b16 %v1308, %v1303
    %v1774 = vpack.c.b16 %v1309, %v1304
    %v1775 = vpack.c.b16 %v1310, %v1305
    %v1776 = vpack.c.b16 %v1311, %v1306
    %v1777 = vpack.c.b16 %v1317, %v1312
    %v1778 = vpack.c.b16 %v1318, %v1313
    %v1779 = vpack.c.b16 %v1319, %v1314
    %v1780 = vpack.c.b16 %v1320, %v1315
    %v1781 = vpack.c.b16 %v1321, %v1316
    %v1782 = vpack.c.b16 %v1327, %v1322
    %v1783 = vpack.c.b16 %v1328, %v1323
    %v1784 = vpack.c.b16 %v1329, %v1324
    %v1785 = vpack.c.b16 %v1330, %v1325
    %v1786 = vpack.c.b16 %v1331, %v1326
    %v1787 = vpack.c.b16 %v1337, %v1332
    %v1788 = vpack.c.b16 %v1338, %v1333
    %v1789 = vpack.c.b16 %v1339, %v1334
    %v1790 = vpack.c.b16 %v1340, %v1335
    %v1791 = vpack.c.b16 %v1341, %v1336
    %v1792 = vpack.c.b16 %v1347, %v1342
    %v1793 = vpack.c.b16 %v1348, %v1343
    %v1794 = vpack.c.b16 %v1349, %v1344
    %v1795 = vpack.c.b16 %v1350, %v1345
    %v1796 = vpack.c.b16 %v1351, %v1346
    %v1797 = vpack.c.b16 %v1357, %v1352
    %v1798 = vpack.c.b16 %v1358, %v1353
    %v1799 = vpack.c.b16 %v1359, %v1354
    %v1800 = vpack.c.b16 %v1360, %v1355
    %v1801 = vpack.c.b16 %v1361, %v1356
    %v1802 = vpack.c.b16 %v1367, %v1362
    %v1803 = vpack.c.b16 %v1368, %v1363
    %v1804 = vpack.c.b16 %v1369, %v1364
    %v1805 = vpack.c.b16 %v1370, %v1365
    %v1806 = vpack.c.b16 %v1371, %v1366
    %v1807 = vpack.c.b16 %v1377, %v1372
    %v1808 = vpack.c.b16 %v1378, %v1373
    %v1809 = vpack.c.b16 %v1379, %v1374
    %v1810 = vpack.c.b16 %v1380, %v1375
    %v1811 = vpack.c.b16 %v1381, %v1376
    %v1812 = vpack.c.b16 %v1387, %v1382
    %v1813 = vpack.c.b16 %v1388, %v1383
    %v1814 = vpack.c.b16 %v1389, %v1384
    %v1815 = vpack.c.b16 %v1390, %v1385
    %v1816 = vpack.c.b16 %v1391, %v1386
    %v1817 = vpack.c.b16 %v1397, %v1392
    %v1818 = vpack.c.b16 %v1398, %v1393
    %v1819 = vpack.c.b16 %v1399, %v1394
    %v1820 = vpack.c.b16 %v1400, %v1395
    %v1821 = vpack.c.b16 %v1401, %v1396
    %v1822 = vpack.c.b16 %v1407, %v1402
    %v1823 = vpack.c.b16 %v1408, %v1403
    %v1824 = vpack.c.b16 %v1409, %v1404
    %v1825 = vpack.c.b16 %v1410, %v1405
    %v1826 = vpack.c.b16 %v1411, %v1406
    %v1827 = vpack.c.b16 %v1417, %v1412
    %v1828 = vpack.c.b16 %v1418, %v1413
    %v1829 = vpack.c.b16 %v1419, %v1414
    %v1830 = vpack.c.b16 %v1420, %v1415
    %v1831 = vpack.c.b16 %v1421, %v1416
    %v1832 = vpack.c.b16 %v1427, %v1422
    %v1833 = vpack.c.b16 %v1428, %v1423
    %v1834 = vpack.c.b16 %v1429, %v1424
    %v1835 = vpack.c.b16 %v1430, %v1425
    %v1836 = vpack.c.b16 %v1431, %v1426
    %v1837 = vpack.c.b16 %v1437, %v1432
    %v1838 = vpack.c.b16 %v1438, %v1433
    %v1839 = vpack.c.b16 %v1439, %v1434
    %v1840 = vpack.c.b16 %v1440, %v1435
    %v1841 = vpack.c.b16 %v1441, %v1436
    %v1842 = vpack.c.b16 %v1447, %v1442
    %v1843 = vpack.c.b16 %v1448, %v1443
    %v1844 = vpack.c.b16 %v1449, %v1444
    %v1845 = vpack.c.b16 %v1450, %v1445
    %v1846 = vpack.c.b16 %v1451, %v1446
    %v1847 = vpack.c.b16 %v1457, %v1452
    %v1848 = vpack.c.b16 %v1458, %v1453
    %v1849 = vpack.c.b16 %v1459, %v1454
    %v1850 = vpack.c.b16 %v1460, %v1455
    %v1851 = vpack.c.b16 %v1461, %v1456
    %v1852 = vpack.c.b16 %v1467, %v1462
    %v1853 = vpack.c.b16 %v1468, %v1463
    %v1854 = vpack.c.b16 %v1469, %v1464
    %v1855 = vpack.c.b16 %v1470, %v1465
    %v1856 = vpack.c.b16 %v1471, %v1466
    %v1857 = vpack.c.b16 %v1477, %v1472
    %v1858 = vpack.c.b16 %v1478, %v1473
    %v1859 = vpack.c.b16 %v1479, %v1474
    %v1860 = vpack.c.b16 %v1480, %v1475
    %v1861 = vpack.c.b16 %v1481, %v1476
    %v1862 = vpack.c.b16 %v1487, %v1482
    %v1863 = vpack.c.b16 %v1488, %v1483
    %v1864 = vpack.c.b16 %v1489, %v1484
    %v1865 = vpack.c.b16 %v1490, %v1485
    %v1866 = vpack.c.b16 %v1491, %v1486
    %v1867 = vpack.c.b16 %v1497, %v1492
    %v1868 = vpack.c.b16 %v1498, %v1493
    %v1869 = vpack.c.b16 %v1499, %v1494
    %v1870 = vpack.c.b16 %v1500, %v1495
    %v1871 = vpack.c.b16 %v1501, %v1496
    %v1872 = vpack.c.b16 %v1507, %v1502
    %v1873 = vpack.c.b16 %v1508, %v1503
    %v1874 = vpack.c.b16 %v1509, %v1504
    %v1875 = vpack.c.b16 %v1510, %v1505
    %v1876 = vpack.c.b16 %v1511, %v1506
    %v1877 = vpack.c.b16 %v1517, %v1512
    %v1878 = vpack.c.b16 %v1518, %v1513
    %v1879 = vpack.c.b16 %v1519, %v1514
    %v1880 = vpack.c.b16 %v1520, %v1515
    %v1881 = vpack.c.b16 %v1521, %v1516
    %v1882 = vpack.c.b16 %v1527, %v1522
    %v1883 = vpack.c.b16 %v1528, %v1523
    %v1884 = vpack.c.b16 %v1529, %v1524
    %v1885 = vpack.c.b16 %v1530, %v1525
    %v1886 = vpack.c.b16 %v1531, %v1526
    %v1887 = vpack.c.b16 %v1537, %v1532
    %v1888 = vpack.c.b16 %v1538, %v1533
    %v1889 = vpack.c.b16 %v1539, %v1534
    %v1890 = vpack.c.b16 %v1540, %v1535
    %v1891 = vpack.c.b16 %v1541, %v1536
    %v1892 = vpack.c.b16 %v1547, %v1542
    %v1893 = vpack.c.b16 %v1548, %v1543
    %v1894 = vpack.c.b16 %v1549, %v1544
    %v1895 = vpack.c.b16 %v1550, %v1545
    %v1896 = vpack.c.b16 %v1551, %v1546
    %v1897 = vpack.c.b16 %v1557, %v1552
    %v1898 = vpack.c.b16 %v1558, %v1553
    %v1899 = vpack.c.b16 %v1559, %v1554
    %v1900 = vpack.c.b16 %v1560, %v1555
    %v1901 = vpack.c.b16 %v1561, %v1556
    %v1902 = vpack.c.b16 %v1567, %v1562
    %v1903 = vpack.c.b16 %v1568, %v1563
    %v1904 = vpack.c.b16 %v1569, %v1564
    %v1905 = vpack.c.b16 %v1570, %v1565
    %v1906 = vpack.c.b16 %v1571, %v1566
    %v1907 = vpack.c.b16 %v1577, %v1572
    %v1908 = vpack.c.b16 %v1578, %v1573
    %v1909 = vpack.c.b16 %v1579, %v1574
    %v1910 = vpack.c.b16 %v1580, %v1575
    %v1911 = vpack.c.b16 %v1581, %v1576
    %v1912 = vpack.c.b16 %v1587, %v1582
    %v1913 = vpack.c.b16 %v1588, %v1583
    %v1914 = vpack.c.b16 %v1589, %v1584
    %v1915 = vpack.c.b16 %v1590, %v1585
    %v1916 = vpack.c.b16 %v1591, %v1586
    %v1917 = vpack.c.b16 %v1597, %v1592
    %v1918 = vpack.c.b16 %v1598, %v1593
    %v1919 = vpack.c.b16 %v1599, %v1594
    %v1920 = vpack.c.b16 %v1600, %v1595
    %v1921 = vpack.c.b16 %v1601, %v1596
    %v1922 = vpack.c.b16 %v1607, %v1602
    %v1923 = vpack.c.b16 %v1608, %v1603
    %v1924 = vpack.c.b16 %v1609, %v1604
    %v1925 = vpack.c.b16 %v1610, %v1605
    %v1926 = vpack.c.b16 %v1611, %v1606
    %v1927 = vpack.c.b16 %v1617, %v1612
    %v1928 = vpack.c.b16 %v1618, %v1613
    %v1929 = vpack.c.b16 %v1619, %v1614
    %v1930 = vpack.c.b16 %v1620, %v1615
    %v1931 = vpack.c.b16 %v1621, %v1616
    %v1932 = vpack.c.b16 %v1627, %v1622
    %v1933 = vpack.c.b16 %v1628, %v1623
    %v1934 = vpack.c.b16 %v1629, %v1624
    %v1935 = vpack.c.b16 %v1630, %v1625
    %v1936 = vpack.c.b16 %v1631, %v1626
    %v1937 = vpack.c.b16 %v1637, %v1632
    %v1938 = vpack.c.b16 %v1638, %v1633
    %v1939 = vpack.c.b16 %v1639, %v1634
    %v1940 = vpack.c.b16 %v1640, %v1635
    %v1941 = vpack.c.b16 %v1641, %v1636
    %v1942 = vpack.c.b16 %v1647, %v1642
    %v1943 = vpack.c.b16 %v1648, %v1643
    %v1944 = vpack.c.b16 %v1649, %v1644
    %v1945 = vpack.c.b16 %v1650, %v1645
    %v1946 = vpack.c.b16 %v1651, %v1646
    %v1947 = vpack.c.b16 %v1657, %v1652
    %v1948 = vpack.c.b16 %v1658, %v1653
    %v1949 = vpack.c.b16 %v1659, %v1654
    %v1950 = vpack.c.b16 %v1660, %v1655
    %v1951 = vpack.c.b16 %v1661, %v1656
    %v1952 = vpack.c.b16 %v1667, %v1662
    %v1953 = vpack.c.b16 %v1668, %v1663
    %v1954 = vpack.c.b16 %v1669, %v1664
    %v1955 = vpack.c.b16 %v1670, %v1665
    %v1956 = vpack.c.b16 %v1671, %v1666
    %v1957 = vpack.c.b16 %v1677, %v1672
    %v1958 = vpack.c.b16 %v1678, %v1673
    %v1959 = vpack.c.b16 %v1679, %v1674
    %v1960 = vpack.c.b16 %v1680, %v1675
    %v1961 = vpack.c.b16 %v1681, %v1676
    %2242 = vmatprep.subr.bf16.mxu0 %v1718
    %2243 = vmatpush1.bf16.msra.mxu0 %v1717
    %2244 = vmatprep.subr.bf16.mxu0 %v1713
    %2245 = vmatpush1.bf16.msra.mxu0 %v1712
    %2246 = vmatprep.subr.bf16.mxu0 %v1708
    %2247 = vmatpush1.bf16.msra.mxu0 %v1707
    %2248 = vmatprep.subr.bf16.mxu0 %v1703
    %2249 = vmatpush1.bf16.msra.mxu0 %v1702
    %2250 = vmatprep.subr.bf16.mxu0 %v1698
    %2251 = vmatpush1.bf16.msra.mxu0 %v1697
    %2252 = vmatprep.subr.bf16.mxu0 %v1693
    %2253 = vmatpush1.bf16.msra.mxu0 %v1692
    %2254 = vmatprep.subr.bf16.mxu0 %v1688
    %2255 = vmatpush1.bf16.msra.mxu0 %v1687
    %2256 = vmatprep.subr.bf16.mxu0 %v1683
    %2257 = vmatpush1.bf16.msra.mxu0 %v1682
    %2258 = vmatprep.subr.bf16.mxu0 %v1758
    %2259 = vmatpush2.bf16.msra.mxu0 %v1757
    %2260 = vmatprep.subr.bf16.mxu0 %v1753
    %2261 = vmatpush2.bf16.msra.mxu0 %v1752
    %2262 = vmatprep.subr.bf16.mxu0 %v1748
    %2263 = vmatpush2.bf16.msra.mxu0 %v1747
    %2264 = vmatprep.subr.bf16.mxu0 %v1743
    %2265 = vmatpush2.bf16.msra.mxu0 %v1742
    %2266 = vmatprep.subr.bf16.mxu0 %v1738
    %2267 = vmatpush2.bf16.msra.mxu0 %v1737
    %2268 = vmatprep.subr.bf16.mxu0 %v1733
    %2269 = vmatpush2.bf16.msra.mxu0 %v1732
    %2270 = vmatprep.subr.bf16.mxu0 %v1728
    %2271 = vmatpush2.bf16.msra.mxu0 %v1727
    %2272 = vmatprep.subr.bf16.mxu0 %v1723
    %2273 = vmatpush2.bf16.msra.mxu0 %v1722
    %2274 = vmatprep.mubr.bf16.mxu0 %v417
    %2275 = vmatmul.mubr.bf16.gmra.mxu0 %v416
    %v2276 = vpop.f32.mrf.mxu0
    %v2277 = vadd.f32 %v764, %v2276
    %v2278 = vpop.f32.mrf.mxu0
    %v2279 = vadd.f32 %v768, %v2278
    %v2280 = vpop.f32.mrf.mxu0
    %v2281 = vpop.f32.mrf.mxu0
    %2282 = vdwg.mxu0
    %2283 = vmatprep.subr.bf16.mxu0 %v1798
    %2284 = vmatpush1.bf16.msra.mxu0 %v1797
    %2285 = vmatprep.subr.bf16.mxu0 %v1793
    %2286 = vmatpush1.bf16.msra.mxu0 %v1792
    %2287 = vmatprep.subr.bf16.mxu0 %v1788
    %2288 = vmatpush1.bf16.msra.mxu0 %v1787
    %2289 = vmatprep.subr.bf16.mxu0 %v1783
    %2290 = vmatpush1.bf16.msra.mxu0 %v1782
    %2291 = vmatprep.subr.bf16.mxu0 %v1778
    %2292 = vmatpush1.bf16.msra.mxu0 %v1777
    %2293 = vmatprep.subr.bf16.mxu0 %v1773
    %2294 = vmatpush1.bf16.msra.mxu0 %v1772
    %2295 = vmatprep.subr.bf16.mxu0 %v1768
    %2296 = vmatpush1.bf16.msra.mxu0 %v1767
    %2297 = vmatprep.subr.bf16.mxu0 %v1763
    %2298 = vmatpush1.bf16.msra.mxu0 %v1762
    %2299 = vmatprep.subr.bf16.mxu0 %v1838
    %2300 = vmatpush2.bf16.msra.mxu0 %v1837
    %2301 = vmatprep.subr.bf16.mxu0 %v1833
    %2302 = vmatpush2.bf16.msra.mxu0 %v1832
    %2303 = vmatprep.subr.bf16.mxu0 %v1828
    %2304 = vmatpush2.bf16.msra.mxu0 %v1827
    %2305 = vmatprep.subr.bf16.mxu0 %v1823
    %2306 = vmatpush2.bf16.msra.mxu0 %v1822
    %2307 = vmatprep.subr.bf16.mxu0 %v1818
    %2308 = vmatpush2.bf16.msra.mxu0 %v1817
    %2309 = vmatprep.subr.bf16.mxu0 %v1813
    %2310 = vmatpush2.bf16.msra.mxu0 %v1812
    %2311 = vmatprep.subr.bf16.mxu0 %v1808
    %2312 = vmatpush2.bf16.msra.mxu0 %v1807
    %2313 = vmatprep.subr.bf16.mxu0 %v1803
    %2314 = vmatpush2.bf16.msra.mxu0 %v1802
    %2315 = vmatprep.mubr.bf16.mxu0 %v419
    %2316 = vmatmul.mubr.bf16.gmra.mxu0 %v418
    %v2317 = vpop.f32.mrf.mxu0
    %v2318 = vadd.f32 %v2277, %v2317
    %v2319 = vpop.f32.mrf.mxu0
    %v2320 = vadd.f32 %v2279, %v2319
    %v2321 = vpop.f32.mrf.mxu0
    %v2322 = vpop.f32.mrf.mxu0
    %2323 = vdwg.mxu0
    %2324 = vmatprep.subr.bf16.mxu0 %v1878
    %2325 = vmatpush1.bf16.msra.mxu0 %v1877
    %2326 = vmatprep.subr.bf16.mxu0 %v1873
    %2327 = vmatpush1.bf16.msra.mxu0 %v1872
    %2328 = vmatprep.subr.bf16.mxu0 %v1868
    %2329 = vmatpush1.bf16.msra.mxu0 %v1867
    %2330 = vmatprep.subr.bf16.mxu0 %v1863
    %2331 = vmatpush1.bf16.msra.mxu0 %v1862
    %2332 = vmatprep.subr.bf16.mxu0 %v1858
    %2333 = vmatpush1.bf16.msra.mxu0 %v1857
    %2334 = vmatprep.subr.bf16.mxu0 %v1853
    %2335 = vmatpush1.bf16.msra.mxu0 %v1852
    %2336 = vmatprep.subr.bf16.mxu0 %v1848
    %2337 = vmatpush1.bf16.msra.mxu0 %v1847
    %2338 = vmatprep.subr.bf16.mxu0 %v1843
    %2339 = vmatpush1.bf16.msra.mxu0 %v1842
    %2340 = vmatprep.subr.bf16.mxu0 %v1918
    %2341 = vmatpush2.bf16.msra.mxu0 %v1917
    %2342 = vmatprep.subr.bf16.mxu0 %v1913
    %2343 = vmatpush2.bf16.msra.mxu0 %v1912
    %2344 = vmatprep.subr.bf16.mxu0 %v1908
    %2345 = vmatpush2.bf16.msra.mxu0 %v1907
    %2346 = vmatprep.subr.bf16.mxu0 %v1903
    %2347 = vmatpush2.bf16.msra.mxu0 %v1902
    %2348 = vmatprep.subr.bf16.mxu0 %v1898
    %2349 = vmatpush2.bf16.msra.mxu0 %v1897
    %2350 = vmatprep.subr.bf16.mxu0 %v1893
    %2351 = vmatpush2.bf16.msra.mxu0 %v1892
    %2352 = vmatprep.subr.bf16.mxu0 %v1888
    %2353 = vmatpush2.bf16.msra.mxu0 %v1887
    %2354 = vmatprep.subr.bf16.mxu0 %v1883
    %2355 = vmatpush2.bf16.msra.mxu0 %v1882
    %2356 = vmatprep.mubr.bf16.mxu0 %v421
    %2357 = vmatmul.mubr.bf16.gmra.mxu0 %v420
    %v2358 = vpop.f32.mrf.mxu0
    %v2359 = vadd.f32 %v2318, %v2358
    %v2360 = vpop.f32.mrf.mxu0
    %v2361 = vadd.f32 %v2320, %v2360
    %v2362 = vpop.f32.mrf.mxu0
    %v2363 = vpop.f32.mrf.mxu0
    %2364 = vdwg.mxu0
    %2365 = vmatprep.subr.bf16.mxu0 %v1958
    %2366 = vmatpush1.bf16.msra.mxu0 %v1957
    %2367 = vmatprep.subr.bf16.mxu0 %v1953
    %2368 = vmatpush1.bf16.msra.mxu0 %v1952
    %2369 = vmatprep.subr.bf16.mxu0 %v1948
    %2370 = vmatpush1.bf16.msra.mxu0 %v1947
    %2371 = vmatprep.subr.bf16.mxu0 %v1943
    %2372 = vmatpush1.bf16.msra.mxu0 %v1942
    %2373 = vmatprep.subr.bf16.mxu0 %v1938
    %2374 = vmatpush1.bf16.msra.mxu0 %v1937
    %2375 = vmatprep.subr.bf16.mxu0 %v1933
    %2376 = vmatpush1.bf16.msra.mxu0 %v1932
    %2377 = vmatprep.subr.bf16.mxu0 %v1928
    %2378 = vmatpush1.bf16.msra.mxu0 %v1927
    %2379 = vmatprep.subr.bf16.mxu0 %v1923
    %2380 = vmatpush1.bf16.msra.mxu0 %v1922
    %2381 = vmatprep.subr.bf16.mxu0 0
    %2382 = vmatpush2.bf16.msra.mxu0 0
    %2383 = vmatprep.subr.bf16.mxu0 0
    %2384 = vmatpush2.bf16.msra.mxu0 0
    %2385 = vmatprep.subr.bf16.mxu0 0
    %2386 = vmatpush2.bf16.msra.mxu0 0
    %2387 = vmatprep.subr.bf16.mxu0 0
    %2388 = vmatpush2.bf16.msra.mxu0 0
    %2389 = vmatprep.subr.bf16.mxu0 0
    %2390 = vmatpush2.bf16.msra.mxu0 0
    %2391 = vmatprep.subr.bf16.mxu0 0
    %2392 = vmatpush2.bf16.msra.mxu0 0
    %2393 = vmatprep.subr.bf16.mxu0 0
    %2394 = vmatpush2.bf16.msra.mxu0 0
    %2395 = vmatprep.subr.bf16.mxu0 0
    %2396 = vmatpush2.bf16.msra.mxu0 0
    %2397 = vmatprep.mubr.bf16.mxu0 0
    %2398 = vmatmul.mubr.bf16.gmra.mxu0 %v422
    %v2399 = vpop.f32.mrf.mxu0
    %v2400 = vadd.f32 %v2359, %v2399
    %v2401 = vpop.f32.mrf.mxu0
    %v2402 = vadd.f32 %v2361, %v2401
    %v2403 = vpop.f32.mrf.mxu0
    %v2404 = vpop.f32.mrf.mxu0
    %2405 = vdwg.mxu0
    %2406 = vmatprep.subr.bf16.mxu0 %v1720
    %2407 = vmatpush1.bf16.msra.mxu0 %v1719
    %2408 = vmatprep.subr.bf16.mxu0 %v1715
    %2409 = vmatpush1.bf16.msra.mxu0 %v1714
    %2410 = vmatprep.subr.bf16.mxu0 %v1710
    %2411 = vmatpush1.bf16.msra.mxu0 %v1709
    %2412 = vmatprep.subr.bf16.mxu0 %v1705
    %2413 = vmatpush1.bf16.msra.mxu0 %v1704
    %2414 = vmatprep.subr.bf16.mxu0 %v1700
    %2415 = vmatpush1.bf16.msra.mxu0 %v1699
    %2416 = vmatprep.subr.bf16.mxu0 %v1695
    %2417 = vmatpush1.bf16.msra.mxu0 %v1694
    %2418 = vmatprep.subr.bf16.mxu0 %v1690
    %2419 = vmatpush1.bf16.msra.mxu0 %v1689
    %2420 = vmatprep.subr.bf16.mxu0 %v1685
    %2421 = vmatpush1.bf16.msra.mxu0 %v1684
    %2422 = vmatprep.subr.bf16.mxu0 %v1760
    %2423 = vmatpush2.bf16.msra.mxu0 %v1759
    %2424 = vmatprep.subr.bf16.mxu0 %v1755
    %2425 = vmatpush2.bf16.msra.mxu0 %v1754
    %2426 = vmatprep.subr.bf16.mxu0 %v1750
    %2427 = vmatpush2.bf16.msra.mxu0 %v1749
    %2428 = vmatprep.subr.bf16.mxu0 %v1745
    %2429 = vmatpush2.bf16.msra.mxu0 %v1744
    %2430 = vmatprep.subr.bf16.mxu0 %v1740
    %2431 = vmatpush2.bf16.msra.mxu0 %v1739
    %2432 = vmatprep.subr.bf16.mxu0 %v1735
    %2433 = vmatpush2.bf16.msra.mxu0 %v1734
    %2434 = vmatprep.subr.bf16.mxu0 %v1730
    %2435 = vmatpush2.bf16.msra.mxu0 %v1729
    %2436 = vmatprep.subr.bf16.mxu0 %v1725
    %2437 = vmatpush2.bf16.msra.mxu0 %v1724
    %2438 = vmatprep.mubr.bf16.mxu0 %v417
    %2439 = vmatmul.mubr.bf16.gmra.mxu0 %v416
    %v2440 = vpop.f32.mrf.mxu0
    %v2441 = vadd.f32 %v772, %v2440
    %v2442 = vpop.f32.mrf.mxu0
    %v2443 = vadd.f32 %v776, %v2442
    %v2444 = vpop.f32.mrf.mxu0
    %v2445 = vpop.f32.mrf.mxu0
    %2446 = vdwg.mxu0
    %2447 = vmatprep.subr.bf16.mxu0 %v1800
    %2448 = vmatpush1.bf16.msra.mxu0 %v1799
    %2449 = vmatprep.subr.bf16.mxu0 %v1795
    %2450 = vmatpush1.bf16.msra.mxu0 %v1794
    %2451 = vmatprep.subr.bf16.mxu0 %v1790
    %2452 = vmatpush1.bf16.msra.mxu0 %v1789
    %2453 = vmatprep.subr.bf16.mxu0 %v1785
    %2454 = vmatpush1.bf16.msra.mxu0 %v1784
    %2455 = vmatprep.subr.bf16.mxu0 %v1780
    %2456 = vmatpush1.bf16.msra.mxu0 %v1779
    %2457 = vmatprep.subr.bf16.mxu0 %v1775
    %2458 = vmatpush1.bf16.msra.mxu0 %v1774
    %2459 = vmatprep.subr.bf16.mxu0 %v1770
    %2460 = vmatpush1.bf16.msra.mxu0 %v1769
    %2461 = vmatprep.subr.bf16.mxu0 %v1765
    %2462 = vmatpush1.bf16.msra.mxu0 %v1764
    %2463 = vmatprep.subr.bf16.mxu0 %v1840
    %2464 = vmatpush2.bf16.msra.mxu0 %v1839
    %2465 = vmatprep.subr.bf16.mxu0 %v1835
    %2466 = vmatpush2.bf16.msra.mxu0 %v1834
    %2467 = vmatprep.subr.bf16.mxu0 %v1830
    %2468 = vmatpush2.bf16.msra.mxu0 %v1829
    %2469 = vmatprep.subr.bf16.mxu0 %v1825
    %2470 = vmatpush2.bf16.msra.mxu0 %v1824
    %2471 = vmatprep.subr.bf16.mxu0 %v1820
    %2472 = vmatpush2.bf16.msra.mxu0 %v1819
    %2473 = vmatprep.subr.bf16.mxu0 %v1815
    %2474 = vmatpush2.bf16.msra.mxu0 %v1814
    %2475 = vmatprep.subr.bf16.mxu0 %v1810
    %2476 = vmatpush2.bf16.msra.mxu0 %v1809
    %2477 = vmatprep.subr.bf16.mxu0 %v1805
    %2478 = vmatpush2.bf16.msra.mxu0 %v1804
    %2479 = vmatprep.mubr.bf16.mxu0 %v419
    %2480 = vmatmul.mubr.bf16.gmra.mxu0 %v418
    %v2481 = vpop.f32.mrf.mxu0
    %v2482 = vadd.f32 %v2441, %v2481
    %v2483 = vpop.f32.mrf.mxu0
    %v2484 = vadd.f32 %v2443, %v2483
    %v2485 = vpop.f32.mrf.mxu0
    %v2486 = vpop.f32.mrf.mxu0
    %2487 = vdwg.mxu0
    %2488 = vmatprep.subr.bf16.mxu0 %v1880
    %2489 = vmatpush1.bf16.msra.mxu0 %v1879
    %2490 = vmatprep.subr.bf16.mxu0 %v1875
    %2491 = vmatpush1.bf16.msra.mxu0 %v1874
    %2492 = vmatprep.subr.bf16.mxu0 %v1870
    %2493 = vmatpush1.bf16.msra.mxu0 %v1869
    %2494 = vmatprep.subr.bf16.mxu0 %v1865
    %2495 = vmatpush1.bf16.msra.mxu0 %v1864
    %2496 = vmatprep.subr.bf16.mxu0 %v1860
    %2497 = vmatpush1.bf16.msra.mxu0 %v1859
    %2498 = vmatprep.subr.bf16.mxu0 %v1855
    %2499 = vmatpush1.bf16.msra.mxu0 %v1854
    %2500 = vmatprep.subr.bf16.mxu0 %v1850
    %2501 = vmatpush1.bf16.msra.mxu0 %v1849
    %2502 = vmatprep.subr.bf16.mxu0 %v1845
    %2503 = vmatpush1.bf16.msra.mxu0 %v1844
    %2504 = vmatprep.subr.bf16.mxu0 %v1920
    %2505 = vmatpush2.bf16.msra.mxu0 %v1919
    %2506 = vmatprep.subr.bf16.mxu0 %v1915
    %2507 = vmatpush2.bf16.msra.mxu0 %v1914
    %2508 = vmatprep.subr.bf16.mxu0 %v1910
    %2509 = vmatpush2.bf16.msra.mxu0 %v1909
    %2510 = vmatprep.subr.bf16.mxu0 %v1905
    %2511 = vmatpush2.bf16.msra.mxu0 %v1904
    %2512 = vmatprep.subr.bf16.mxu0 %v1900
    %2513 = vmatpush2.bf16.msra.mxu0 %v1899
    %2514 = vmatprep.subr.bf16.mxu0 %v1895
    %2515 = vmatpush2.bf16.msra.mxu0 %v1894
    %2516 = vmatprep.subr.bf16.mxu0 %v1890
    %2517 = vmatpush2.bf16.msra.mxu0 %v1889
    %2518 = vmatprep.subr.bf16.mxu0 %v1885
    %2519 = vmatpush2.bf16.msra.mxu0 %v1884
    %2520 = vmatprep.mubr.bf16.mxu0 %v421
    %2521 = vmatmul.mubr.bf16.gmra.mxu0 %v420
    %v2522 = vpop.f32.mrf.mxu0
    %v2523 = vadd.f32 %v2482, %v2522
    %v2524 = vpop.f32.mrf.mxu0
    %v2525 = vadd.f32 %v2484, %v2524
    %v2526 = vpop.f32.mrf.mxu0
    %v2527 = vpop.f32.mrf.mxu0
    %2528 = vdwg.mxu0
    %2529 = vmatprep.subr.bf16.mxu0 %v1960
    %2530 = vmatpush1.bf16.msra.mxu0 %v1959
    %2531 = vmatprep.subr.bf16.mxu0 %v1955
    %2532 = vmatpush1.bf16.msra.mxu0 %v1954
    %2533 = vmatprep.subr.bf16.mxu0 %v1950
    %2534 = vmatpush1.bf16.msra.mxu0 %v1949
    %2535 = vmatprep.subr.bf16.mxu0 %v1945
    %2536 = vmatpush1.bf16.msra.mxu0 %v1944
    %2537 = vmatprep.subr.bf16.mxu0 %v1940
    %2538 = vmatpush1.bf16.msra.mxu0 %v1939
    %2539 = vmatprep.subr.bf16.mxu0 %v1935
    %2540 = vmatpush1.bf16.msra.mxu0 %v1934
    %2541 = vmatprep.subr.bf16.mxu0 %v1930
    %2542 = vmatpush1.bf16.msra.mxu0 %v1929
    %2543 = vmatprep.subr.bf16.mxu0 %v1925
    %2544 = vmatpush1.bf16.msra.mxu0 %v1924
    %2545 = vmatprep.subr.bf16.mxu0 0
    %2546 = vmatpush2.bf16.msra.mxu0 0
    %2547 = vmatprep.subr.bf16.mxu0 0
    %2548 = vmatpush2.bf16.msra.mxu0 0
    %2549 = vmatprep.subr.bf16.mxu0 0
    %2550 = vmatpush2.bf16.msra.mxu0 0
    %2551 = vmatprep.subr.bf16.mxu0 0
    %2552 = vmatpush2.bf16.msra.mxu0 0
    %2553 = vmatprep.subr.bf16.mxu0 0
    %2554 = vmatpush2.bf16.msra.mxu0 0
    %2555 = vmatprep.subr.bf16.mxu0 0
    %2556 = vmatpush2.bf16.msra.mxu0 0
    %2557 = vmatprep.subr.bf16.mxu0 0
    %2558 = vmatpush2.bf16.msra.mxu0 0
    %2559 = vmatprep.subr.bf16.mxu0 0
    %2560 = vmatpush2.bf16.msra.mxu0 0
    %2561 = vmatprep.mubr.bf16.mxu0 0
    %2562 = vmatmul.mubr.bf16.gmra.mxu0 %v422
    %v2563 = vpop.f32.mrf.mxu0
    %v2564 = vadd.f32 %v2523, %v2563
    %v2565 = vpop.f32.mrf.mxu0
    %v2566 = vadd.f32 %v2525, %v2565
    %v2567 = vpop.f32.mrf.mxu0
    %v2568 = vpop.f32.mrf.mxu0
    %2569 = vdwg.mxu0
    %2570 = vmatprep.subr.bf16.mxu0 0
    %2571 = vmatpush1.bf16.msra.mxu0 %v1721
    %2572 = vmatprep.subr.bf16.mxu0 0
    %2573 = vmatpush1.bf16.msra.mxu0 %v1716
    %2574 = vmatprep.subr.bf16.mxu0 0
    %2575 = vmatpush1.bf16.msra.mxu0 %v1711
    %2576 = vmatprep.subr.bf16.mxu0 0
    %2577 = vmatpush1.bf16.msra.mxu0 %v1706
    %2578 = vmatprep.subr.bf16.mxu0 0
    %2579 = vmatpush1.bf16.msra.mxu0 %v1701
    %2580 = vmatprep.subr.bf16.mxu0 0
    %2581 = vmatpush1.bf16.msra.mxu0 %v1696
    %2582 = vmatprep.subr.bf16.mxu0 0
    %2583 = vmatpush1.bf16.msra.mxu0 %v1691
    %2584 = vmatprep.subr.bf16.mxu0 0
    %2585 = vmatpush1.bf16.msra.mxu0 %v1686
    %2586 = vmatprep.subr.bf16.mxu0 0
    %2587 = vmatpush2.bf16.msra.mxu0 %v1761
    %2588 = vmatprep.subr.bf16.mxu0 0
    %2589 = vmatpush2.bf16.msra.mxu0 %v1756
    %2590 = vmatprep.subr.bf16.mxu0 0
    %2591 = vmatpush2.bf16.msra.mxu0 %v1751
    %2592 = vmatprep.subr.bf16.mxu0 0
    %2593 = vmatpush2.bf16.msra.mxu0 %v1746
    %2594 = vmatprep.subr.bf16.mxu0 0
    %2595 = vmatpush2.bf16.msra.mxu0 %v1741
    %2596 = vmatprep.subr.bf16.mxu0 0
    %2597 = vmatpush2.bf16.msra.mxu0 %v1736
    %2598 = vmatprep.subr.bf16.mxu0 0
    %2599 = vmatpush2.bf16.msra.mxu0 %v1731
    %2600 = vmatprep.subr.bf16.mxu0 0
    %2601 = vmatpush2.bf16.msra.mxu0 %v1726
    %2602 = vmatprep.mubr.bf16.mxu0 %v417
    %2603 = vmatmul.mubr.bf16.gmra.mxu0 %v416
    %v2604 = vpop.f32.mrf.mxu0
    %v2605 = vadd.f32 %v780, %v2604
    %v2606 = vpop.f32.mrf.mxu0
    %v2607 = vpop.f32.mrf.mxu0
    %v2608 = vpop.f32.mrf.mxu0
    %2609 = vdwg.mxu0
    %2610 = vmatprep.subr.bf16.mxu0 0
    %2611 = vmatpush1.bf16.msra.mxu0 %v1801
    %2612 = vmatprep.subr.bf16.mxu0 0
    %2613 = vmatpush1.bf16.msra.mxu0 %v1796
    %2614 = vmatprep.subr.bf16.mxu0 0
    %2615 = vmatpush1.bf16.msra.mxu0 %v1791
    %2616 = vmatprep.subr.bf16.mxu0 0
    %2617 = vmatpush1.bf16.msra.mxu0 %v1786
    %2618 = vmatprep.subr.bf16.mxu0 0
    %2619 = vmatpush1.bf16.msra.mxu0 %v1781
    %2620 = vmatprep.subr.bf16.mxu0 0
    %2621 = vmatpush1.bf16.msra.mxu0 %v1776
    %2622 = vmatprep.subr.bf16.mxu0 0
    %2623 = vmatpush1.bf16.msra.mxu0 %v1771
    %2624 = vmatprep.subr.bf16.mxu0 0
    %2625 = vmatpush1.bf16.msra.mxu0 %v1766
    %2626 = vmatprep.subr.bf16.mxu0 0
    %2627 = vmatpush2.bf16.msra.mxu0 %v1841
    %2628 = vmatprep.subr.bf16.mxu0 0
    %2629 = vmatpush2.bf16.msra.mxu0 %v1836
    %2630 = vmatprep.subr.bf16.mxu0 0
    %2631 = vmatpush2.bf16.msra.mxu0 %v1831
    %2632 = vmatprep.subr.bf16.mxu0 0
    %2633 = vmatpush2.bf16.msra.mxu0 %v1826
    %2634 = vmatprep.subr.bf16.mxu0 0
    %2635 = vmatpush2.bf16.msra.mxu0 %v1821
    %2636 = vmatprep.subr.bf16.mxu0 0
    %2637 = vmatpush2.bf16.msra.mxu0 %v1816
    %2638 = vmatprep.subr.bf16.mxu0 0
    %2639 = vmatpush2.bf16.msra.mxu0 %v1811
    %2640 = vmatprep.subr.bf16.mxu0 0
    %2641 = vmatpush2.bf16.msra.mxu0 %v1806
    %2642 = vmatprep.mubr.bf16.mxu0 %v419
    %2643 = vmatmul.mubr.bf16.gmra.mxu0 %v418
    %v2644 = vpop.f32.mrf.mxu0
    %v2645 = vadd.f32 %v2605, %v2644
    %v2646 = vpop.f32.mrf.mxu0
    %v2647 = vpop.f32.mrf.mxu0
    %v2648 = vpop.f32.mrf.mxu0
    %2649 = vdwg.mxu0
    %2650 = vmatprep.subr.bf16.mxu0 0
    %2651 = vmatpush1.bf16.msra.mxu0 %v1881
    %2652 = vmatprep.subr.bf16.mxu0 0
    %2653 = vmatpush1.bf16.msra.mxu0 %v1876
    %2654 = vmatprep.subr.bf16.mxu0 0
    %2655 = vmatpush1.bf16.msra.mxu0 %v1871
    %2656 = vmatprep.subr.bf16.mxu0 0
    %2657 = vmatpush1.bf16.msra.mxu0 %v1866
    %2658 = vmatprep.subr.bf16.mxu0 0
    %2659 = vmatpush1.bf16.msra.mxu0 %v1861
    %2660 = vmatprep.subr.bf16.mxu0 0
    %2661 = vmatpush1.bf16.msra.mxu0 %v1856
    %2662 = vmatprep.subr.bf16.mxu0 0
    %2663 = vmatpush1.bf16.msra.mxu0 %v1851
    %2664 = vmatprep.subr.bf16.mxu0 0
    %2665 = vmatpush1.bf16.msra.mxu0 %v1846
    %2666 = vmatprep.subr.bf16.mxu0 0
    %2667 = vmatpush2.bf16.msra.mxu0 %v1921
    %2668 = vmatprep.subr.bf16.mxu0 0
    %2669 = vmatpush2.bf16.msra.mxu0 %v1916
    %2670 = vmatprep.subr.bf16.mxu0 0
    %2671 = vmatpush2.bf16.msra.mxu0 %v1911
    %2672 = vmatprep.subr.bf16.mxu0 0
    %2673 = vmatpush2.bf16.msra.mxu0 %v1906
    %2674 = vmatprep.subr.bf16.mxu0 0
    %2675 = vmatpush2.bf16.msra.mxu0 %v1901
    %2676 = vmatprep.subr.bf16.mxu0 0
    %2677 = vmatpush2.bf16.msra.mxu0 %v1896
    %2678 = vmatprep.subr.bf16.mxu0 0
    %2679 = vmatpush2.bf16.msra.mxu0 %v1891
    %2680 = vmatprep.subr.bf16.mxu0 0
    %2681 = vmatpush2.bf16.msra.mxu0 %v1886
    %2682 = vmatprep.mubr.bf16.mxu0 %v421
    %2683 = vmatmul.mubr.bf16.gmra.mxu0 %v420
    %v2684 = vpop.f32.mrf.mxu0
    %v2685 = vadd.f32 %v2645, %v2684
    %v2686 = vpop.f32.mrf.mxu0
    %v2687 = vpop.f32.mrf.mxu0
    %v2688 = vpop.f32.mrf.mxu0
    %2689 = vdwg.mxu0
    %2690 = vmatprep.subr.bf16.mxu0 0
    %2691 = vmatpush1.bf16.msra.mxu0 %v1961
    %2692 = vmatprep.subr.bf16.mxu0 0
    %2693 = vmatpush1.bf16.msra.mxu0 %v1956
    %2694 = vmatprep.subr.bf16.mxu0 0
    %2695 = vmatpush1.bf16.msra.mxu0 %v1951
    %2696 = vmatprep.subr.bf16.mxu0 0
    %2697 = vmatpush1.bf16.msra.mxu0 %v1946
    %2698 = vmatprep.subr.bf16.mxu0 0
    %2699 = vmatpush1.bf16.msra.mxu0 %v1941
    %2700 = vmatprep.subr.bf16.mxu0 0
    %2701 = vmatpush1.bf16.msra.mxu0 %v1936
    %2702 = vmatprep.subr.bf16.mxu0 0
    %2703 = vmatpush1.bf16.msra.mxu0 %v1931
    %2704 = vmatprep.subr.bf16.mxu0 0
    %2705 = vmatpush1.bf16.msra.mxu0 %v1926
    %2706 = vmatprep.subr.bf16.mxu0 0
    %2707 = vmatpush2.bf16.msra.mxu0 0
    %2708 = vmatprep.subr.bf16.mxu0 0
    %2709 = vmatpush2.bf16.msra.mxu0 0
    %2710 = vmatprep.subr.bf16.mxu0 0
    %2711 = vmatpush2.bf16.msra.mxu0 0
    %2712 = vmatprep.subr.bf16.mxu0 0
    %2713 = vmatpush2.bf16.msra.mxu0 0
    %2714 = vmatprep.subr.bf16.mxu0 0
    %2715 = vmatpush2.bf16.msra.mxu0 0
    %2716 = vmatprep.subr.bf16.mxu0 0
    %2717 = vmatpush2.bf16.msra.mxu0 0
    %2718 = vmatprep.subr.bf16.mxu0 0
    %2719 = vmatpush2.bf16.msra.mxu0 0
    %2720 = vmatprep.subr.bf16.mxu0 0
    %2721 = vmatpush2.bf16.msra.mxu0 0
    %2722 = vmatprep.mubr.bf16.mxu0 0
    %2723 = vmatmul.mubr.bf16.gmra.mxu0 %v422
    %v2724 = vpop.f32.mrf.mxu0
    %v2725 = vadd.f32 %v2685, %v2724
    %v2726 = vpop.f32.mrf.mxu0
    %v2727 = vpop.f32.mrf.mxu0
    %v2728 = vpop.f32.mrf.mxu0
    %2729 = vdwg.mxu0
    %v2730 = vmax.f32 %v2400, 0.0
    %v2731 = vmax.f32 %v2402, 0.0
    %v2732 = vmax.f32 %v2564, 0.0
    %v2733 = vmax.f32 %v2566, 0.0
    %v2734 = vmax.f32 %v2725, 0.0
    %v2735 = vpack.c.bf16 %v2730, %v2730
    %v2736 = vpack.c.bf16 %v2731, %v2731
    %v2737 = vpack.c.bf16 %v2732, %v2732
    %v2738 = vpack.c.bf16 %v2733, %v2733
    %v2739 = vpack.c.bf16 %v2734, %v2734
    %v2740 = vld [vmem:[#allocation13] sm:$0xff]
    %v2741 = vld [vmem:[#allocation13 + $0x8] sm:$0xff]
    %v2742 = vld [vmem:[#allocation13 + $0x10] sm:$0xff]
    %v2743 = vld [vmem:[#allocation13 + $0x18] sm:$0xff]
    %v2744 = vld [vmem:[#allocation13 + $0x20] sm:$0xff]
    %v2745 = vld [vmem:[#allocation13 + $0x28] sm:$0xff]
    %v2746 = vld [vmem:[#allocation13 + $0x30] sm:$0xff]
    %v2747 = vld [vmem:[#allocation13 + $0x38] sm:$0xff]
    %v2748 = vld [vmem:[#allocation13 + $0x40] sm:$0xff]
    %v2749 = vld [vmem:[#allocation13 + $0x48] sm:$0xff]
    %v2750 = vld [vmem:[#allocation13 + $0x50] sm:$0xff]
    %v2751 = vld [vmem:[#allocation13 + $0x58] sm:$0xff]
    %v2752 = vld [vmem:[#allocation13 + $0x60] sm:$0xff]
    %v2753 = vld [vmem:[#allocation13 + $0x68] sm:$0xff]
    %v2754 = vld [vmem:[#allocation13 + $0x70] sm:$0xff]
    %v2755 = vld [vmem:[#allocation13 + $0x78] sm:$0xff]
    %v2756 = vld [vmem:[#allocation13 + $0x80] sm:$0xff]
    %v2757 = vld [vmem:[#allocation13 + $0x88] sm:$0xff]
    %v2758 = vld [vmem:[#allocation13 + $0x90] sm:$0xff]
    %v2759 = vld [vmem:[#allocation13 + $0x98] sm:$0xff]
    %v2760 = vld [vmem:[#allocation13 + $0xa0] sm:$0xff]
    %v2761 = vld [vmem:[#allocation13 + $0xa8] sm:$0xff]
    %v2762 = vld [vmem:[#allocation13 + $0xb0] sm:$0xff]
    %v2763 = vld [vmem:[#allocation13 + $0xb8] sm:$0xff]
    %v2764 = vld [vmem:[#allocation13 + $0xc0] sm:$0xff]
    %v2765 = vld [vmem:[#allocation13 + $0xc8] sm:$0xff]
    %v2766 = vld [vmem:[#allocation13 + $0xd0] sm:$0xff]
    %v2767 = vld [vmem:[#allocation13 + $0xd8] sm:$0xff]
    %v2768 = vld [vmem:[#allocation13 + $0xe0] sm:$0xff]
    %v2769 = vld [vmem:[#allocation13 + $0xe8] sm:$0xff]
    %v2770 = vld [vmem:[#allocation13 + $0xf0] sm:$0xff]
    %v2771 = vld [vmem:[#allocation13 + $0xf8] sm:$0xff]
    %v2772 = vld [vmem:[#allocation13 + $0x100] sm:$0xff]
    %v2773 = vld [vmem:[#allocation13 + $0x108] sm:$0xff]
    %v2774 = vld [vmem:[#allocation13 + $0x110] sm:$0xff]
    %v2775 = vld [vmem:[#allocation13 + $0x118] sm:$0xff]
    %v2776 = vld [vmem:[#allocation13 + $0x120] sm:$0xff]
    %v2777 = vld [vmem:[#allocation13 + $0x128] sm:$0xff]
    %v2778 = vld [vmem:[#allocation13 + $0x130] sm:$0xff]
    %v2779 = vld [vmem:[#allocation13 + $0x138] sm:$0xff]
    %v2780 = vld [vmem:[#allocation13 + $0x140] sm:$0xff]
    %v2781 = vld [vmem:[#allocation13 + $0x148] sm:$0xff]
    %v2782 = vld [vmem:[#allocation13 + $0x150] sm:$0xff]
    %v2783 = vld [vmem:[#allocation13 + $0x158] sm:$0xff]
    %v2784 = vld [vmem:[#allocation13 + $0x160] sm:$0xff]
    %v2785 = vld [vmem:[#allocation13 + $0x168] sm:$0xff]
    %v2786 = vld [vmem:[#allocation13 + $0x170] sm:$0xff]
    %v2787 = vld [vmem:[#allocation13 + $0x178] sm:$0xff]
    %v2788 = vld [vmem:[#allocation13 + $0x180] sm:$0xff]
    %v2789 = vld [vmem:[#allocation13 + $0x188] sm:$0xff]
    %v2790 = vld [vmem:[#allocation13 + $0x190] sm:$0xff]
    %v2791 = vld [vmem:[#allocation13 + $0x198] sm:$0xff]
    %v2792 = vld [vmem:[#allocation13 + $0x1a0] sm:$0xff]
    %v2793 = vld [vmem:[#allocation13 + $0x1a8] sm:$0xff]
    %v2794 = vld [vmem:[#allocation13 + $0x1b0] sm:$0xff]
    %v2795 = vld [vmem:[#allocation13 + $0x1b8] sm:$0xff]
    %v2796 = vld [vmem:[#allocation13 + $0x1c0] sm:$0xff]
    %v2797 = vld [vmem:[#allocation13 + $0x1c8] sm:$0xff]
    %v2798 = vld [vmem:[#allocation13 + $0x1d0] sm:$0xff]
    %v2799 = vld [vmem:[#allocation13 + $0x1d8] sm:$0xff]
    %v2800 = vld [vmem:[#allocation13 + $0x1e0] sm:$0xff]
    %v2801 = vld [vmem:[#allocation13 + $0x1e8] sm:$0xff]
    %v2802 = vld [vmem:[#allocation13 + $0x1f0] sm:$0xff]
    %v2803 = vld [vmem:[#allocation13 + $0x1f8] sm:$0xff]
    %v2804 = vld [vmem:[#allocation13 + $0x200] sm:$0xff]
    %v2805 = vld [vmem:[#allocation13 + $0x208] sm:$0xff]
    %v2806 = vld [vmem:[#allocation13 + $0x210] sm:$0xff]
    %v2807 = vld [vmem:[#allocation13 + $0x218] sm:$0xff]
    %v2808 = vld [vmem:[#allocation13 + $0x220] sm:$0xff]
    %v2809 = vld [vmem:[#allocation13 + $0x228] sm:$0xff]
    %v2810 = vld [vmem:[#allocation13 + $0x230] sm:$0xff]
    %v2811 = vld [vmem:[#allocation13 + $0x238] sm:$0xff]
    %v2812 = vld [vmem:[#allocation13 + $0x240] sm:$0xff]
    %v2813 = vld [vmem:[#allocation13 + $0x248] sm:$0xff]
    %v2814 = vld [vmem:[#allocation13 + $0x250] sm:$0xff]
    %v2815 = vld [vmem:[#allocation13 + $0x258] sm:$0xff]
    %v2816 = vld [vmem:[#allocation13 + $0x260] sm:$0xff]
    %v2817 = vld [vmem:[#allocation13 + $0x268] sm:$0xff]
    %v2818 = vld [vmem:[#allocation13 + $0x270] sm:$0xff]
    %v2819 = vld [vmem:[#allocation13 + $0x278] sm:$0xff]
    %v2820 = vld [vmem:[#allocation13 + $0x280] sm:$0xff]
    %v2821 = vld [vmem:[#allocation13 + $0x288] sm:$0xff]
    %v2822 = vld [vmem:[#allocation13 + $0x290] sm:$0xff]
    %v2823 = vld [vmem:[#allocation13 + $0x298] sm:$0xff]
    %v2824 = vld [vmem:[#allocation13 + $0x2a0] sm:$0xff]
    %v2825 = vld [vmem:[#allocation13 + $0x2a8] sm:$0xff]
    %v2826 = vld [vmem:[#allocation13 + $0x2b0] sm:$0xff]
    %v2827 = vld [vmem:[#allocation13 + $0x2b8] sm:$0xff]
    %v2828 = vld [vmem:[#allocation13 + $0x2c0] sm:$0xff]
    %v2829 = vld [vmem:[#allocation13 + $0x2c8] sm:$0xff]
    %v2830 = vld [vmem:[#allocation13 + $0x2d0] sm:$0xff]
    %v2831 = vld [vmem:[#allocation13 + $0x2d8] sm:$0xff]
    %v2832 = vld [vmem:[#allocation13 + $0x2e0] sm:$0xff]
    %v2833 = vld [vmem:[#allocation13 + $0x2e8] sm:$0xff]
    %v2834 = vld [vmem:[#allocation13 + $0x2f0] sm:$0xff]
    %v2835 = vld [vmem:[#allocation13 + $0x2f8] sm:$0xff]
    %v2836 = vld [vmem:[#allocation13 + $0x300] sm:$0xff]
    %v2837 = vld [vmem:[#allocation13 + $0x308] sm:$0xff]
    %v2838 = vld [vmem:[#allocation13 + $0x310] sm:$0xff]
    %v2839 = vld [vmem:[#allocation13 + $0x318] sm:$0xff]
    %v2840 = vld [vmem:[#allocation13 + $0x320] sm:$0xff]
    %v2841 = vld [vmem:[#allocation13 + $0x328] sm:$0xff]
    %v2842 = vld [vmem:[#allocation13 + $0x330] sm:$0xff]
    %v2843 = vld [vmem:[#allocation13 + $0x338] sm:$0xff]
    %v2844 = vld [vmem:[#allocation13 + $0x340] sm:$0xff]
    %v2845 = vld [vmem:[#allocation13 + $0x348] sm:$0xff]
    %v2846 = vld [vmem:[#allocation13 + $0x350] sm:$0xff]
    %v2847 = vld [vmem:[#allocation13 + $0x358] sm:$0xff]
    %v2848 = vld [vmem:[#allocation13 + $0x360] sm:$0xff]
    %v2849 = vld [vmem:[#allocation13 + $0x368] sm:$0xff]
    %v2850 = vld [vmem:[#allocation13 + $0x370] sm:$0xff]
    %v2851 = vld [vmem:[#allocation13 + $0x378] sm:$0xff]
    %v2852 = vld [vmem:[#allocation13 + $0x380] sm:$0xff]
    %v2853 = vld [vmem:[#allocation13 + $0x388] sm:$0xff]
    %v2854 = vld [vmem:[#allocation13 + $0x390] sm:$0xff]
    %v2855 = vld [vmem:[#allocation13 + $0x398] sm:$0xff]
    %v2856 = vld [vmem:[#allocation13 + $0x3a0] sm:$0xff]
    %v2857 = vld [vmem:[#allocation13 + $0x3a8] sm:$0xff]
    %v2858 = vld [vmem:[#allocation13 + $0x3b0] sm:$0xff]
    %v2859 = vld [vmem:[#allocation13 + $0x3b8] sm:$0xff]
    %v2860 = vld [vmem:[#allocation13 + $0x3c0] sm:$0xff]
    %v2861 = vld [vmem:[#allocation13 + $0x3c8] sm:$0xff]
    %v2862 = vld [vmem:[#allocation13 + $0x3d0] sm:$0xff]
    %v2863 = vld [vmem:[#allocation13 + $0x3d8] sm:$0xff]
    %v2864 = vld [vmem:[#allocation13 + $0x3e0] sm:$0xff]
    %v2865 = vld [vmem:[#allocation13 + $0x3e8] sm:$0xff]
    %v2866 = vld [vmem:[#allocation13 + $0x3f0] sm:$0xff]
    %v2867 = vld [vmem:[#allocation13 + $0x3f8] sm:$0xff]
    %v2868 = vld [vmem:[#allocation13 + $0x400] sm:$0xff]
    %v2869 = vld [vmem:[#allocation13 + $0x408] sm:$0xff]
    %v2870 = vld [vmem:[#allocation13 + $0x410] sm:$0xff]
    %v2871 = vld [vmem:[#allocation13 + $0x418] sm:$0xff]
    %v2872 = vld [vmem:[#allocation13 + $0x420] sm:$0xff]
    %v2873 = vld [vmem:[#allocation13 + $0x428] sm:$0xff]
    %v2874 = vld [vmem:[#allocation13 + $0x430] sm:$0xff]
    %v2875 = vld [vmem:[#allocation13 + $0x438] sm:$0xff]
    %v2876 = vld [vmem:[#allocation13 + $0x440] sm:$0xff]
    %v2877 = vld [vmem:[#allocation13 + $0x448] sm:$0xff]
    %v2878 = vld [vmem:[#allocation13 + $0x450] sm:$0xff]
    %v2879 = vld [vmem:[#allocation13 + $0x458] sm:$0xff]
    %v2880 = vld [vmem:[#allocation13 + $0x460] sm:$0xff]
    %v2881 = vld [vmem:[#allocation13 + $0x468] sm:$0xff]
    %v2882 = vld [vmem:[#allocation13 + $0x470] sm:$0xff]
    %v2883 = vld [vmem:[#allocation13 + $0x478] sm:$0xff]
    %v2884 = vld [vmem:[#allocation13 + $0x480] sm:$0xff]
    %v2885 = vld [vmem:[#allocation13 + $0x488] sm:$0xff]
    %v2886 = vld [vmem:[#allocation13 + $0x490] sm:$0xff]
    %v2887 = vld [vmem:[#allocation13 + $0x498] sm:$0xff]
    %v2888 = vld [vmem:[#allocation13 + $0x4a0] sm:$0xff]
    %v2889 = vld [vmem:[#allocation13 + $0x4a8] sm:$0xff]
    %v2890 = vld [vmem:[#allocation13 + $0x4b0] sm:$0xff]
    %v2891 = vld [vmem:[#allocation13 + $0x4b8] sm:$0xff]
    %v2892 = vld [vmem:[#allocation13 + $0x4c0] sm:$0xff]
    %v2893 = vld [vmem:[#allocation13 + $0x4c8] sm:$0xff]
    %v2894 = vld [vmem:[#allocation13 + $0x4d0] sm:$0xff]
    %v2895 = vld [vmem:[#allocation13 + $0x4d8] sm:$0xff]
    %v2896 = vld [vmem:[#allocation13 + $0x4e0] sm:$0xff]
    %v2897 = vld [vmem:[#allocation13 + $0x4e8] sm:$0xff]
    %v2898 = vld [vmem:[#allocation13 + $0x4f0] sm:$0xff]
    %v2899 = vld [vmem:[#allocation13 + $0x4f8] sm:$0xff]
    %v2900 = vld [vmem:[#allocation14] sm:$0xf]
    %v2902 = vlaneseq
    %v2903 = vshrl.u32 %v2902, 7
    %v2904 = vsub.s32 0, %v2903
    %v2905 = vrot.slane %v2900, %v2904
    %v2906 = vlaneseq
    %v2907 = vshrl.u32 %v2906, 7
    %v2908 = vsub.s32 1, %v2907
    %v2909 = vrot.slane %v2900, %v2908
    %v2910 = vlaneseq
    %v2911 = vshrl.u32 %v2910, 7
    %v2912 = vsub.s32 2, %v2911
    %v2913 = vrot.slane %v2900, %v2912
    %v2914 = vlaneseq
    %v2915 = vshrl.u32 %v2914, 7
    %v2916 = vsub.s32 3, %v2915
    %v2917 = vrot.slane %v2900, %v2916
    %v3082 = vunpack.c.l.b16 %v2740
    %v3083 = vunpack.c.h.b16 %v2740
    %v3084 = vunpack.c.l.b16 %v2741
    %v3085 = vunpack.c.h.b16 %v2741
    %v3086 = vunpack.c.l.b16 %v2742
    %v3087 = vunpack.c.h.b16 %v2742
    %v3088 = vunpack.c.l.b16 %v2743
    %v3089 = vunpack.c.h.b16 %v2743
    %v3090 = vunpack.c.l.b16 %v2744
    %v3091 = vunpack.c.h.b16 %v2744
    %v3092 = vunpack.c.l.b16 %v2745
    %v3093 = vunpack.c.h.b16 %v2745
    %v3094 = vunpack.c.l.b16 %v2746
    %v3095 = vunpack.c.h.b16 %v2746
    %v3096 = vunpack.c.l.b16 %v2747
    %v3097 = vunpack.c.h.b16 %v2747
    %v3098 = vunpack.c.l.b16 %v2748
    %v3099 = vunpack.c.h.b16 %v2748
    %v3100 = vunpack.c.l.b16 %v2749
    %v3101 = vunpack.c.h.b16 %v2749
    %v3102 = vunpack.c.l.b16 %v2750
    %v3103 = vunpack.c.h.b16 %v2750
    %v3104 = vunpack.c.l.b16 %v2751
    %v3105 = vunpack.c.h.b16 %v2751
    %v3106 = vunpack.c.l.b16 %v2752
    %v3107 = vunpack.c.h.b16 %v2752
    %v3108 = vunpack.c.l.b16 %v2753
    %v3109 = vunpack.c.h.b16 %v2753
    %v3110 = vunpack.c.l.b16 %v2754
    %v3111 = vunpack.c.h.b16 %v2754
    %v3112 = vunpack.c.l.b16 %v2755
    %v3113 = vunpack.c.h.b16 %v2755
    %v3114 = vunpack.c.l.b16 %v2756
    %v3115 = vunpack.c.h.b16 %v2756
    %v3116 = vunpack.c.l.b16 %v2757
    %v3117 = vunpack.c.h.b16 %v2757
    %v3118 = vunpack.c.l.b16 %v2758
    %v3119 = vunpack.c.h.b16 %v2758
    %v3120 = vunpack.c.l.b16 %v2759
    %v3121 = vunpack.c.h.b16 %v2759
    %v3122 = vunpack.c.l.b16 %v2760
    %v3123 = vunpack.c.h.b16 %v2760
    %v3124 = vunpack.c.l.b16 %v2761
    %v3125 = vunpack.c.h.b16 %v2761
    %v3126 = vunpack.c.l.b16 %v2762
    %v3127 = vunpack.c.h.b16 %v2762
    %v3128 = vunpack.c.l.b16 %v2763
    %v3129 = vunpack.c.h.b16 %v2763
    %v3130 = vunpack.c.l.b16 %v2764
    %v3131 = vunpack.c.h.b16 %v2764
    %v3132 = vunpack.c.l.b16 %v2765
    %v3133 = vunpack.c.h.b16 %v2765
    %v3134 = vunpack.c.l.b16 %v2766
    %v3135 = vunpack.c.h.b16 %v2766
    %v3136 = vunpack.c.l.b16 %v2767
    %v3137 = vunpack.c.h.b16 %v2767
    %v3138 = vunpack.c.l.b16 %v2768
    %v3139 = vunpack.c.h.b16 %v2768
    %v3140 = vunpack.c.l.b16 %v2769
    %v3141 = vunpack.c.h.b16 %v2769
    %v3142 = vunpack.c.l.b16 %v2770
    %v3143 = vunpack.c.h.b16 %v2770
    %v3144 = vunpack.c.l.b16 %v2771
    %v3145 = vunpack.c.h.b16 %v2771
    %v3146 = vunpack.c.l.b16 %v2772
    %v3147 = vunpack.c.h.b16 %v2772
    %v3148 = vunpack.c.l.b16 %v2773
    %v3149 = vunpack.c.h.b16 %v2773
    %v3150 = vunpack.c.l.b16 %v2774
    %v3151 = vunpack.c.h.b16 %v2774
    %v3152 = vunpack.c.l.b16 %v2775
    %v3153 = vunpack.c.h.b16 %v2775
    %v3154 = vunpack.c.l.b16 %v2776
    %v3155 = vunpack.c.h.b16 %v2776
    %v3156 = vunpack.c.l.b16 %v2777
    %v3157 = vunpack.c.h.b16 %v2777
    %v3158 = vunpack.c.l.b16 %v2778
    %v3159 = vunpack.c.h.b16 %v2778
    %v3160 = vunpack.c.l.b16 %v2779
    %v3161 = vunpack.c.h.b16 %v2779
    %v3162 = vunpack.c.l.b16 %v2780
    %v3163 = vunpack.c.h.b16 %v2780
    %v3164 = vunpack.c.l.b16 %v2781
    %v3165 = vunpack.c.h.b16 %v2781
    %v3166 = vunpack.c.l.b16 %v2782
    %v3167 = vunpack.c.h.b16 %v2782
    %v3168 = vunpack.c.l.b16 %v2783
    %v3169 = vunpack.c.h.b16 %v2783
    %v3170 = vunpack.c.l.b16 %v2784
    %v3171 = vunpack.c.h.b16 %v2784
    %v3172 = vunpack.c.l.b16 %v2785
    %v3173 = vunpack.c.h.b16 %v2785
    %v3174 = vunpack.c.l.b16 %v2786
    %v3175 = vunpack.c.h.b16 %v2786
    %v3176 = vunpack.c.l.b16 %v2787
    %v3177 = vunpack.c.h.b16 %v2787
    %v3178 = vunpack.c.l.b16 %v2788
    %v3179 = vunpack.c.h.b16 %v2788
    %v3180 = vunpack.c.l.b16 %v2789
    %v3181 = vunpack.c.h.b16 %v2789
    %v3182 = vunpack.c.l.b16 %v2790
    %v3183 = vunpack.c.h.b16 %v2790
    %v3184 = vunpack.c.l.b16 %v2791
    %v3185 = vunpack.c.h.b16 %v2791
    %v3186 = vunpack.c.l.b16 %v2792
    %v3187 = vunpack.c.h.b16 %v2792
    %v3188 = vunpack.c.l.b16 %v2793
    %v3189 = vunpack.c.h.b16 %v2793
    %v3190 = vunpack.c.l.b16 %v2794
    %v3191 = vunpack.c.h.b16 %v2794
    %v3192 = vunpack.c.l.b16 %v2795
    %v3193 = vunpack.c.h.b16 %v2795
    %v3194 = vunpack.c.l.b16 %v2796
    %v3195 = vunpack.c.h.b16 %v2796
    %v3196 = vunpack.c.l.b16 %v2797
    %v3197 = vunpack.c.h.b16 %v2797
    %v3198 = vunpack.c.l.b16 %v2798
    %v3199 = vunpack.c.h.b16 %v2798
    %v3200 = vunpack.c.l.b16 %v2799
    %v3201 = vunpack.c.h.b16 %v2799
    %v3202 = vunpack.c.l.b16 %v2800
    %v3203 = vunpack.c.h.b16 %v2800
    %v3204 = vunpack.c.l.b16 %v2801
    %v3205 = vunpack.c.h.b16 %v2801
    %v3206 = vunpack.c.l.b16 %v2802
    %v3207 = vunpack.c.h.b16 %v2802
    %v3208 = vunpack.c.l.b16 %v2803
    %v3209 = vunpack.c.h.b16 %v2803
    %v3210 = vunpack.c.l.b16 %v2804
    %v3211 = vunpack.c.h.b16 %v2804
    %v3212 = vunpack.c.l.b16 %v2805
    %v3213 = vunpack.c.h.b16 %v2805
    %v3214 = vunpack.c.l.b16 %v2806
    %v3215 = vunpack.c.h.b16 %v2806
    %v3216 = vunpack.c.l.b16 %v2807
    %v3217 = vunpack.c.h.b16 %v2807
    %v3218 = vunpack.c.l.b16 %v2808
    %v3219 = vunpack.c.h.b16 %v2808
    %v3220 = vunpack.c.l.b16 %v2809
    %v3221 = vunpack.c.h.b16 %v2809
    %v3222 = vunpack.c.l.b16 %v2810
    %v3223 = vunpack.c.h.b16 %v2810
    %v3224 = vunpack.c.l.b16 %v2811
    %v3225 = vunpack.c.h.b16 %v2811
    %v3226 = vunpack.c.l.b16 %v2812
    %v3227 = vunpack.c.h.b16 %v2812
    %v3228 = vunpack.c.l.b16 %v2813
    %v3229 = vunpack.c.h.b16 %v2813
    %v3230 = vunpack.c.l.b16 %v2814
    %v3231 = vunpack.c.h.b16 %v2814
    %v3232 = vunpack.c.l.b16 %v2815
    %v3233 = vunpack.c.h.b16 %v2815
    %v3234 = vunpack.c.l.b16 %v2816
    %v3235 = vunpack.c.h.b16 %v2816
    %v3236 = vunpack.c.l.b16 %v2817
    %v3237 = vunpack.c.h.b16 %v2817
    %v3238 = vunpack.c.l.b16 %v2818
    %v3239 = vunpack.c.h.b16 %v2818
    %v3240 = vunpack.c.l.b16 %v2819
    %v3241 = vunpack.c.h.b16 %v2819
    %v3242 = vunpack.c.l.b16 %v2820
    %v3243 = vunpack.c.h.b16 %v2820
    %v3244 = vunpack.c.l.b16 %v2821
    %v3245 = vunpack.c.h.b16 %v2821
    %v3246 = vunpack.c.l.b16 %v2822
    %v3247 = vunpack.c.h.b16 %v2822
    %v3248 = vunpack.c.l.b16 %v2823
    %v3249 = vunpack.c.h.b16 %v2823
    %v3250 = vunpack.c.l.b16 %v2824
    %v3251 = vunpack.c.h.b16 %v2824
    %v3252 = vunpack.c.l.b16 %v2825
    %v3253 = vunpack.c.h.b16 %v2825
    %v3254 = vunpack.c.l.b16 %v2826
    %v3255 = vunpack.c.h.b16 %v2826
    %v3256 = vunpack.c.l.b16 %v2827
    %v3257 = vunpack.c.h.b16 %v2827
    %v3258 = vunpack.c.l.b16 %v2828
    %v3259 = vunpack.c.h.b16 %v2828
    %v3260 = vunpack.c.l.b16 %v2829
    %v3261 = vunpack.c.h.b16 %v2829
    %v3262 = vunpack.c.l.b16 %v2830
    %v3263 = vunpack.c.h.b16 %v2830
    %v3264 = vunpack.c.l.b16 %v2831
    %v3265 = vunpack.c.h.b16 %v2831
    %v3266 = vunpack.c.l.b16 %v2832
    %v3267 = vunpack.c.h.b16 %v2832
    %v3268 = vunpack.c.l.b16 %v2833
    %v3269 = vunpack.c.h.b16 %v2833
    %v3270 = vunpack.c.l.b16 %v2834
    %v3271 = vunpack.c.h.b16 %v2834
    %v3272 = vunpack.c.l.b16 %v2835
    %v3273 = vunpack.c.h.b16 %v2835
    %v3274 = vunpack.c.l.b16 %v2836
    %v3275 = vunpack.c.h.b16 %v2836
    %v3276 = vunpack.c.l.b16 %v2837
    %v3277 = vunpack.c.h.b16 %v2837
    %v3278 = vunpack.c.l.b16 %v2838
    %v3279 = vunpack.c.h.b16 %v2838
    %v3280 = vunpack.c.l.b16 %v2839
    %v3281 = vunpack.c.h.b16 %v2839
    %v3282 = vunpack.c.l.b16 %v2840
    %v3283 = vunpack.c.h.b16 %v2840
    %v3284 = vunpack.c.l.b16 %v2841
    %v3285 = vunpack.c.h.b16 %v2841
    %v3286 = vunpack.c.l.b16 %v2842
    %v3287 = vunpack.c.h.b16 %v2842
    %v3288 = vunpack.c.l.b16 %v2843
    %v3289 = vunpack.c.h.b16 %v2843
    %v3290 = vunpack.c.l.b16 %v2844
    %v3291 = vunpack.c.h.b16 %v2844
    %v3292 = vunpack.c.l.b16 %v2845
    %v3293 = vunpack.c.h.b16 %v2845
    %v3294 = vunpack.c.l.b16 %v2846
    %v3295 = vunpack.c.h.b16 %v2846
    %v3296 = vunpack.c.l.b16 %v2847
    %v3297 = vunpack.c.h.b16 %v2847
    %v3298 = vunpack.c.l.b16 %v2848
    %v3299 = vunpack.c.h.b16 %v2848
    %v3300 = vunpack.c.l.b16 %v2849
    %v3301 = vunpack.c.h.b16 %v2849
    %v3302 = vunpack.c.l.b16 %v2850
    %v3303 = vunpack.c.h.b16 %v2850
    %v3304 = vunpack.c.l.b16 %v2851
    %v3305 = vunpack.c.h.b16 %v2851
    %v3306 = vunpack.c.l.b16 %v2852
    %v3307 = vunpack.c.h.b16 %v2852
    %v3308 = vunpack.c.l.b16 %v2853
    %v3309 = vunpack.c.h.b16 %v2853
    %v3310 = vunpack.c.l.b16 %v2854
    %v3311 = vunpack.c.h.b16 %v2854
    %v3312 = vunpack.c.l.b16 %v2855
    %v3313 = vunpack.c.h.b16 %v2855
    %v3314 = vunpack.c.l.b16 %v2856
    %v3315 = vunpack.c.h.b16 %v2856
    %v3316 = vunpack.c.l.b16 %v2857
    %v3317 = vunpack.c.h.b16 %v2857
    %v3318 = vunpack.c.l.b16 %v2858
    %v3319 = vunpack.c.h.b16 %v2858
    %v3320 = vunpack.c.l.b16 %v2859
    %v3321 = vunpack.c.h.b16 %v2859
    %v3322 = vunpack.c.l.b16 %v2860
    %v3323 = vunpack.c.h.b16 %v2860
    %v3324 = vunpack.c.l.b16 %v2861
    %v3325 = vunpack.c.h.b16 %v2861
    %v3326 = vunpack.c.l.b16 %v2862
    %v3327 = vunpack.c.h.b16 %v2862
    %v3328 = vunpack.c.l.b16 %v2863
    %v3329 = vunpack.c.h.b16 %v2863
    %v3330 = vunpack.c.l.b16 %v2864
    %v3331 = vunpack.c.h.b16 %v2864
    %v3332 = vunpack.c.l.b16 %v2865
    %v3333 = vunpack.c.h.b16 %v2865
    %v3334 = vunpack.c.l.b16 %v2866
    %v3335 = vunpack.c.h.b16 %v2866
    %v3336 = vunpack.c.l.b16 %v2867
    %v3337 = vunpack.c.h.b16 %v2867
    %v3338 = vunpack.c.l.b16 %v2868
    %v3339 = vunpack.c.h.b16 %v2868
    %v3340 = vunpack.c.l.b16 %v2869
    %v3341 = vunpack.c.h.b16 %v2869
    %v3342 = vunpack.c.l.b16 %v2870
    %v3343 = vunpack.c.h.b16 %v2870
    %v3344 = vunpack.c.l.b16 %v2871
    %v3345 = vunpack.c.h.b16 %v2871
    %v3346 = vunpack.c.l.b16 %v2872
    %v3347 = vunpack.c.h.b16 %v2872
    %v3348 = vunpack.c.l.b16 %v2873
    %v3349 = vunpack.c.h.b16 %v2873
    %v3350 = vunpack.c.l.b16 %v2874
    %v3351 = vunpack.c.h.b16 %v2874
    %v3352 = vunpack.c.l.b16 %v2875
    %v3353 = vunpack.c.h.b16 %v2875
    %v3354 = vunpack.c.l.b16 %v2876
    %v3355 = vunpack.c.h.b16 %v2876
    %v3356 = vunpack.c.l.b16 %v2877
    %v3357 = vunpack.c.h.b16 %v2877
    %v3358 = vunpack.c.l.b16 %v2878
    %v3359 = vunpack.c.h.b16 %v2878
    %v3360 = vunpack.c.l.b16 %v2879
    %v3361 = vunpack.c.h.b16 %v2879
    %v3362 = vunpack.c.l.b16 %v2880
    %v3363 = vunpack.c.h.b16 %v2880
    %v3364 = vunpack.c.l.b16 %v2881
    %v3365 = vunpack.c.h.b16 %v2881
    %v3366 = vunpack.c.l.b16 %v2882
    %v3367 = vunpack.c.h.b16 %v2882
    %v3368 = vunpack.c.l.b16 %v2883
    %v3369 = vunpack.c.h.b16 %v2883
    %v3370 = vunpack.c.l.b16 %v2884
    %v3371 = vunpack.c.h.b16 %v2884
    %v3372 = vunpack.c.l.b16 %v2885
    %v3373 = vunpack.c.h.b16 %v2885
    %v3374 = vunpack.c.l.b16 %v2886
    %v3375 = vunpack.c.h.b16 %v2886
    %v3376 = vunpack.c.l.b16 %v2887
    %v3377 = vunpack.c.h.b16 %v2887
    %v3378 = vunpack.c.l.b16 %v2888
    %v3379 = vunpack.c.h.b16 %v2888
    %v3380 = vunpack.c.l.b16 %v2889
    %v3381 = vunpack.c.h.b16 %v2889
    %v3382 = vunpack.c.l.b16 %v2890
    %v3383 = vunpack.c.h.b16 %v2890
    %v3384 = vunpack.c.l.b16 %v2891
    %v3385 = vunpack.c.h.b16 %v2891
    %v3386 = vunpack.c.l.b16 %v2892
    %v3387 = vunpack.c.h.b16 %v2892
    %v3388 = vunpack.c.l.b16 %v2893
    %v3389 = vunpack.c.h.b16 %v2893
    %v3390 = vunpack.c.l.b16 %v2894
    %v3391 = vunpack.c.h.b16 %v2894
    %v3392 = vunpack.c.l.b16 %v2895
    %v3393 = vunpack.c.h.b16 %v2895
    %v3394 = vunpack.c.l.b16 %v2896
    %v3395 = vunpack.c.h.b16 %v2896
    %v3396 = vunpack.c.l.b16 %v2897
    %v3397 = vunpack.c.h.b16 %v2897
    %v3398 = vunpack.c.l.b16 %v2898
    %v3399 = vunpack.c.h.b16 %v2898
    %v3400 = vunpack.c.l.b16 %v2899
    %v3401 = vunpack.c.h.b16 %v2899
    %v3402 = vpack.c.b16 %v3086, %v3082
    %v3403 = vpack.c.b16 %v3087, %v3083
    %v3404 = vpack.c.b16 %v3088, %v3084
    %v3405 = vpack.c.b16 %v3089, %v3085
    %v3406 = vpack.c.b16 %v3094, %v3090
    %v3407 = vpack.c.b16 %v3095, %v3091
    %v3408 = vpack.c.b16 %v3096, %v3092
    %v3409 = vpack.c.b16 %v3097, %v3093
    %v3410 = vpack.c.b16 %v3102, %v3098
    %v3411 = vpack.c.b16 %v3103, %v3099
    %v3412 = vpack.c.b16 %v3104, %v3100
    %v3413 = vpack.c.b16 %v3105, %v3101
    %v3414 = vpack.c.b16 %v3110, %v3106
    %v3415 = vpack.c.b16 %v3111, %v3107
    %v3416 = vpack.c.b16 %v3112, %v3108
    %v3417 = vpack.c.b16 %v3113, %v3109
    %v3418 = vpack.c.b16 %v3118, %v3114
    %v3419 = vpack.c.b16 %v3119, %v3115
    %v3420 = vpack.c.b16 %v3120, %v3116
    %v3421 = vpack.c.b16 %v3121, %v3117
    %v3422 = vpack.c.b16 %v3126, %v3122
    %v3423 = vpack.c.b16 %v3127, %v3123
    %v3424 = vpack.c.b16 %v3128, %v3124
    %v3425 = vpack.c.b16 %v3129, %v3125
    %v3426 = vpack.c.b16 %v3134, %v3130
    %v3427 = vpack.c.b16 %v3135, %v3131
    %v3428 = vpack.c.b16 %v3136, %v3132
    %v3429 = vpack.c.b16 %v3137, %v3133
    %v3430 = vpack.c.b16 %v3142, %v3138
    %v3431 = vpack.c.b16 %v3143, %v3139
    %v3432 = vpack.c.b16 %v3144, %v3140
    %v3433 = vpack.c.b16 %v3145, %v3141
    %v3434 = vpack.c.b16 %v3150, %v3146
    %v3435 = vpack.c.b16 %v3151, %v3147
    %v3436 = vpack.c.b16 %v3152, %v3148
    %v3437 = vpack.c.b16 %v3153, %v3149
    %v3438 = vpack.c.b16 %v3158, %v3154
    %v3439 = vpack.c.b16 %v3159, %v3155
    %v3440 = vpack.c.b16 %v3160, %v3156
    %v3441 = vpack.c.b16 %v3161, %v3157
    %v3442 = vpack.c.b16 %v3166, %v3162
    %v3443 = vpack.c.b16 %v3167, %v3163
    %v3444 = vpack.c.b16 %v3168, %v3164
    %v3445 = vpack.c.b16 %v3169, %v3165
    %v3446 = vpack.c.b16 %v3174, %v3170
    %v3447 = vpack.c.b16 %v3175, %v3171
    %v3448 = vpack.c.b16 %v3176, %v3172
    %v3449 = vpack.c.b16 %v3177, %v3173
    %v3450 = vpack.c.b16 %v3182, %v3178
    %v3451 = vpack.c.b16 %v3183, %v3179
    %v3452 = vpack.c.b16 %v3184, %v3180
    %v3453 = vpack.c.b16 %v3185, %v3181
    %v3454 = vpack.c.b16 %v3190, %v3186
    %v3455 = vpack.c.b16 %v3191, %v3187
    %v3456 = vpack.c.b16 %v3192, %v3188
    %v3457 = vpack.c.b16 %v3193, %v3189
    %v3458 = vpack.c.b16 %v3198, %v3194
    %v3459 = vpack.c.b16 %v3199, %v3195
    %v3460 = vpack.c.b16 %v3200, %v3196
    %v3461 = vpack.c.b16 %v3201, %v3197
    %v3462 = vpack.c.b16 %v3206, %v3202
    %v3463 = vpack.c.b16 %v3207, %v3203
    %v3464 = vpack.c.b16 %v3208, %v3204
    %v3465 = vpack.c.b16 %v3209, %v3205
    %v3466 = vpack.c.b16 %v3214, %v3210
    %v3467 = vpack.c.b16 %v3215, %v3211
    %v3468 = vpack.c.b16 %v3216, %v3212
    %v3469 = vpack.c.b16 %v3217, %v3213
    %v3470 = vpack.c.b16 %v3222, %v3218
    %v3471 = vpack.c.b16 %v3223, %v3219
    %v3472 = vpack.c.b16 %v3224, %v3220
    %v3473 = vpack.c.b16 %v3225, %v3221
    %v3474 = vpack.c.b16 %v3230, %v3226
    %v3475 = vpack.c.b16 %v3231, %v3227
    %v3476 = vpack.c.b16 %v3232, %v3228
    %v3477 = vpack.c.b16 %v3233, %v3229
    %v3478 = vpack.c.b16 %v3238, %v3234
    %v3479 = vpack.c.b16 %v3239, %v3235
    %v3480 = vpack.c.b16 %v3240, %v3236
    %v3481 = vpack.c.b16 %v3241, %v3237
    %v3482 = vpack.c.b16 %v3246, %v3242
    %v3483 = vpack.c.b16 %v3247, %v3243
    %v3484 = vpack.c.b16 %v3248, %v3244
    %v3485 = vpack.c.b16 %v3249, %v3245
    %v3486 = vpack.c.b16 %v3254, %v3250
    %v3487 = vpack.c.b16 %v3255, %v3251
    %v3488 = vpack.c.b16 %v3256, %v3252
    %v3489 = vpack.c.b16 %v3257, %v3253
    %v3490 = vpack.c.b16 %v3262, %v3258
    %v3491 = vpack.c.b16 %v3263, %v3259
    %v3492 = vpack.c.b16 %v3264, %v3260
    %v3493 = vpack.c.b16 %v3265, %v3261
    %v3494 = vpack.c.b16 %v3270, %v3266
    %v3495 = vpack.c.b16 %v3271, %v3267
    %v3496 = vpack.c.b16 %v3272, %v3268
    %v3497 = vpack.c.b16 %v3273, %v3269
    %v3498 = vpack.c.b16 %v3278, %v3274
    %v3499 = vpack.c.b16 %v3279, %v3275
    %v3500 = vpack.c.b16 %v3280, %v3276
    %v3501 = vpack.c.b16 %v3281, %v3277
    %v3502 = vpack.c.b16 %v3286, %v3282
    %v3503 = vpack.c.b16 %v3287, %v3283
    %v3504 = vpack.c.b16 %v3288, %v3284
    %v3505 = vpack.c.b16 %v3289, %v3285
    %v3506 = vpack.c.b16 %v3294, %v3290
    %v3507 = vpack.c.b16 %v3295, %v3291
    %v3508 = vpack.c.b16 %v3296, %v3292
    %v3509 = vpack.c.b16 %v3297, %v3293
    %v3510 = vpack.c.b16 %v3302, %v3298
    %v3511 = vpack.c.b16 %v3303, %v3299
    %v3512 = vpack.c.b16 %v3304, %v3300
    %v3513 = vpack.c.b16 %v3305, %v3301
    %v3514 = vpack.c.b16 %v3310, %v3306
    %v3515 = vpack.c.b16 %v3311, %v3307
    %v3516 = vpack.c.b16 %v3312, %v3308
    %v3517 = vpack.c.b16 %v3313, %v3309
    %v3518 = vpack.c.b16 %v3318, %v3314
    %v3519 = vpack.c.b16 %v3319, %v3315
    %v3520 = vpack.c.b16 %v3320, %v3316
    %v3521 = vpack.c.b16 %v3321, %v3317
    %v3522 = vpack.c.b16 %v3326, %v3322
    %v3523 = vpack.c.b16 %v3327, %v3323
    %v3524 = vpack.c.b16 %v3328, %v3324
    %v3525 = vpack.c.b16 %v3329, %v3325
    %v3526 = vpack.c.b16 %v3334, %v3330
    %v3527 = vpack.c.b16 %v3335, %v3331
    %v3528 = vpack.c.b16 %v3336, %v3332
    %v3529 = vpack.c.b16 %v3337, %v3333
    %v3530 = vpack.c.b16 %v3342, %v3338
    %v3531 = vpack.c.b16 %v3343, %v3339
    %v3532 = vpack.c.b16 %v3344, %v3340
    %v3533 = vpack.c.b16 %v3345, %v3341
    %v3534 = vpack.c.b16 %v3350, %v3346
    %v3535 = vpack.c.b16 %v3351, %v3347
    %v3536 = vpack.c.b16 %v3352, %v3348
    %v3537 = vpack.c.b16 %v3353, %v3349
    %v3538 = vpack.c.b16 %v3358, %v3354
    %v3539 = vpack.c.b16 %v3359, %v3355
    %v3540 = vpack.c.b16 %v3360, %v3356
    %v3541 = vpack.c.b16 %v3361, %v3357
    %v3542 = vpack.c.b16 %v3366, %v3362
    %v3543 = vpack.c.b16 %v3367, %v3363
    %v3544 = vpack.c.b16 %v3368, %v3364
    %v3545 = vpack.c.b16 %v3369, %v3365
    %v3546 = vpack.c.b16 %v3374, %v3370
    %v3547 = vpack.c.b16 %v3375, %v3371
    %v3548 = vpack.c.b16 %v3376, %v3372
    %v3549 = vpack.c.b16 %v3377, %v3373
    %v3550 = vpack.c.b16 %v3382, %v3378
    %v3551 = vpack.c.b16 %v3383, %v3379
    %v3552 = vpack.c.b16 %v3384, %v3380
    %v3553 = vpack.c.b16 %v3385, %v3381
    %v3554 = vpack.c.b16 %v3390, %v3386
    %v3555 = vpack.c.b16 %v3391, %v3387
    %v3556 = vpack.c.b16 %v3392, %v3388
    %v3557 = vpack.c.b16 %v3393, %v3389
    %v3558 = vpack.c.b16 %v3398, %v3394
    %v3559 = vpack.c.b16 %v3399, %v3395
    %v3560 = vpack.c.b16 %v3400, %v3396
    %v3561 = vpack.c.b16 %v3401, %v3397
    %3722 = vmatprep.subr.bf16.mxu0 %v3431
    %3723 = vmatpush1.bf16.msra.mxu0 %v3430
    %3724 = vmatprep.subr.bf16.mxu0 %v3427
    %3725 = vmatpush1.bf16.msra.mxu0 %v3426
    %3726 = vmatprep.subr.bf16.mxu0 %v3423
    %3727 = vmatpush1.bf16.msra.mxu0 %v3422
    %3728 = vmatprep.subr.bf16.mxu0 %v3419
    %3729 = vmatpush1.bf16.msra.mxu0 %v3418
    %3730 = vmatprep.subr.bf16.mxu0 %v3415
    %3731 = vmatpush1.bf16.msra.mxu0 %v3414
    %3732 = vmatprep.subr.bf16.mxu0 %v3411
    %3733 = vmatpush1.bf16.msra.mxu0 %v3410
    %3734 = vmatprep.subr.bf16.mxu0 %v3407
    %3735 = vmatpush1.bf16.msra.mxu0 %v3406
    %3736 = vmatprep.subr.bf16.mxu0 %v3403
    %3737 = vmatpush1.bf16.msra.mxu0 %v3402
    %3738 = vmatprep.subr.bf16.mxu0 %v3463
    %3739 = vmatpush2.bf16.msra.mxu0 %v3462
    %3740 = vmatprep.subr.bf16.mxu0 %v3459
    %3741 = vmatpush2.bf16.msra.mxu0 %v3458
    %3742 = vmatprep.subr.bf16.mxu0 %v3455
    %3743 = vmatpush2.bf16.msra.mxu0 %v3454
    %3744 = vmatprep.subr.bf16.mxu0 %v3451
    %3745 = vmatpush2.bf16.msra.mxu0 %v3450
    %3746 = vmatprep.subr.bf16.mxu0 %v3447
    %3747 = vmatpush2.bf16.msra.mxu0 %v3446
    %3748 = vmatprep.subr.bf16.mxu0 %v3443
    %3749 = vmatpush2.bf16.msra.mxu0 %v3442
    %3750 = vmatprep.subr.bf16.mxu0 %v3439
    %3751 = vmatpush2.bf16.msra.mxu0 %v3438
    %3752 = vmatprep.subr.bf16.mxu0 %v3435
    %3753 = vmatpush2.bf16.msra.mxu0 %v3434
    %3754 = vmatprep.mubr.bf16.mxu0 %v2736
    %3755 = vmatmul.mubr.bf16.gmra.mxu0 %v2735
    %v3756 = vpop.f32.mrf.mxu0
    %v3757 = vadd.f32 %v2905, %v3756
    %v3758 = vpop.f32.mrf.mxu0
    %v3759 = vadd.f32 %v2909, %v3758
    %v3760 = vpop.f32.mrf.mxu0
    %v3761 = vpop.f32.mrf.mxu0
    %3762 = vdwg.mxu0
    %3763 = vmatprep.subr.bf16.mxu0 %v3495
    %3764 = vmatpush1.bf16.msra.mxu0 %v3494
    %3765 = vmatprep.subr.bf16.mxu0 %v3491
    %3766 = vmatpush1.bf16.msra.mxu0 %v3490
    %3767 = vmatprep.subr.bf16.mxu0 %v3487
    %3768 = vmatpush1.bf16.msra.mxu0 %v3486
    %3769 = vmatprep.subr.bf16.mxu0 %v3483
    %3770 = vmatpush1.bf16.msra.mxu0 %v3482
    %3771 = vmatprep.subr.bf16.mxu0 %v3479
    %3772 = vmatpush1.bf16.msra.mxu0 %v3478
    %3773 = vmatprep.subr.bf16.mxu0 %v3475
    %3774 = vmatpush1.bf16.msra.mxu0 %v3474
    %3775 = vmatprep.subr.bf16.mxu0 %v3471
    %3776 = vmatpush1.bf16.msra.mxu0 %v3470
    %3777 = vmatprep.subr.bf16.mxu0 %v3467
    %3778 = vmatpush1.bf16.msra.mxu0 %v3466
    %3779 = vmatprep.subr.bf16.mxu0 %v3527
    %3780 = vmatpush2.bf16.msra.mxu0 %v3526
    %3781 = vmatprep.subr.bf16.mxu0 %v3523
    %3782 = vmatpush2.bf16.msra.mxu0 %v3522
    %3783 = vmatprep.subr.bf16.mxu0 %v3519
    %3784 = vmatpush2.bf16.msra.mxu0 %v3518
    %3785 = vmatprep.subr.bf16.mxu0 %v3515
    %3786 = vmatpush2.bf16.msra.mxu0 %v3514
    %3787 = vmatprep.subr.bf16.mxu0 %v3511
    %3788 = vmatpush2.bf16.msra.mxu0 %v3510
    %3789 = vmatprep.subr.bf16.mxu0 %v3507
    %3790 = vmatpush2.bf16.msra.mxu0 %v3506
    %3791 = vmatprep.subr.bf16.mxu0 %v3503
    %3792 = vmatpush2.bf16.msra.mxu0 %v3502
    %3793 = vmatprep.subr.bf16.mxu0 %v3499
    %3794 = vmatpush2.bf16.msra.mxu0 %v3498
    %3795 = vmatprep.mubr.bf16.mxu0 %v2738
    %3796 = vmatmul.mubr.bf16.gmra.mxu0 %v2737
    %v3797 = vpop.f32.mrf.mxu0
    %v3798 = vadd.f32 %v3757, %v3797
    %v3799 = vpop.f32.mrf.mxu0
    %v3800 = vadd.f32 %v3759, %v3799
    %v3801 = vpop.f32.mrf.mxu0
    %v3802 = vpop.f32.mrf.mxu0
    %3803 = vdwg.mxu0
    %3804 = vmatprep.subr.bf16.mxu0 %v3559
    %3805 = vmatpush1.bf16.msra.mxu0 %v3558
    %3806 = vmatprep.subr.bf16.mxu0 %v3555
    %3807 = vmatpush1.bf16.msra.mxu0 %v3554
    %3808 = vmatprep.subr.bf16.mxu0 %v3551
    %3809 = vmatpush1.bf16.msra.mxu0 %v3550
    %3810 = vmatprep.subr.bf16.mxu0 %v3547
    %3811 = vmatpush1.bf16.msra.mxu0 %v3546
    %3812 = vmatprep.subr.bf16.mxu0 %v3543
    %3813 = vmatpush1.bf16.msra.mxu0 %v3542
    %3814 = vmatprep.subr.bf16.mxu0 %v3539
    %3815 = vmatpush1.bf16.msra.mxu0 %v3538
    %3816 = vmatprep.subr.bf16.mxu0 %v3535
    %3817 = vmatpush1.bf16.msra.mxu0 %v3534
    %3818 = vmatprep.subr.bf16.mxu0 %v3531
    %3819 = vmatpush1.bf16.msra.mxu0 %v3530
    %3820 = vmatprep.subr.bf16.mxu0 0
    %3821 = vmatpush2.bf16.msra.mxu0 0
    %3822 = vmatprep.subr.bf16.mxu0 0
    %3823 = vmatpush2.bf16.msra.mxu0 0
    %3824 = vmatprep.subr.bf16.mxu0 0
    %3825 = vmatpush2.bf16.msra.mxu0 0
    %3826 = vmatprep.subr.bf16.mxu0 0
    %3827 = vmatpush2.bf16.msra.mxu0 0
    %3828 = vmatprep.subr.bf16.mxu0 0
    %3829 = vmatpush2.bf16.msra.mxu0 0
    %3830 = vmatprep.subr.bf16.mxu0 0
    %3831 = vmatpush2.bf16.msra.mxu0 0
    %3832 = vmatprep.subr.bf16.mxu0 0
    %3833 = vmatpush2.bf16.msra.mxu0 0
    %3834 = vmatprep.subr.bf16.mxu0 0
    %3835 = vmatpush2.bf16.msra.mxu0 0
    %3836 = vmatprep.mubr.bf16.mxu0 0
    %3837 = vmatmul.mubr.bf16.gmra.mxu0 %v2739
    %v3838 = vpop.f32.mrf.mxu0
    %v3839 = vadd.f32 %v3798, %v3838
    %v3840 = vpop.f32.mrf.mxu0
    %v3841 = vadd.f32 %v3800, %v3840
    %v3842 = vpop.f32.mrf.mxu0
    %v3843 = vpop.f32.mrf.mxu0
    %3844 = vdwg.mxu0
    %3845 = vmatprep.subr.bf16.mxu0 %v3433
    %3846 = vmatpush1.bf16.msra.mxu0 %v3432
    %3847 = vmatprep.subr.bf16.mxu0 %v3429
    %3848 = vmatpush1.bf16.msra.mxu0 %v3428
    %3849 = vmatprep.subr.bf16.mxu0 %v3425
    %3850 = vmatpush1.bf16.msra.mxu0 %v3424
    %3851 = vmatprep.subr.bf16.mxu0 %v3421
    %3852 = vmatpush1.bf16.msra.mxu0 %v3420
    %3853 = vmatprep.subr.bf16.mxu0 %v3417
    %3854 = vmatpush1.bf16.msra.mxu0 %v3416
    %3855 = vmatprep.subr.bf16.mxu0 %v3413
    %3856 = vmatpush1.bf16.msra.mxu0 %v3412
    %3857 = vmatprep.subr.bf16.mxu0 %v3409
    %3858 = vmatpush1.bf16.msra.mxu0 %v3408
    %3859 = vmatprep.subr.bf16.mxu0 %v3405
    %3860 = vmatpush1.bf16.msra.mxu0 %v3404
    %3861 = vmatprep.subr.bf16.mxu0 %v3465
    %3862 = vmatpush2.bf16.msra.mxu0 %v3464
    %3863 = vmatprep.subr.bf16.mxu0 %v3461
    %3864 = vmatpush2.bf16.msra.mxu0 %v3460
    %3865 = vmatprep.subr.bf16.mxu0 %v3457
    %3866 = vmatpush2.bf16.msra.mxu0 %v3456
    %3867 = vmatprep.subr.bf16.mxu0 %v3453
    %3868 = vmatpush2.bf16.msra.mxu0 %v3452
    %3869 = vmatprep.subr.bf16.mxu0 %v3449
    %3870 = vmatpush2.bf16.msra.mxu0 %v3448
    %3871 = vmatprep.subr.bf16.mxu0 %v3445
    %3872 = vmatpush2.bf16.msra.mxu0 %v3444
    %3873 = vmatprep.subr.bf16.mxu0 %v3441
    %3874 = vmatpush2.bf16.msra.mxu0 %v3440
    %3875 = vmatprep.subr.bf16.mxu0 %v3437
    %3876 = vmatpush2.bf16.msra.mxu0 %v3436
    %3877 = vmatprep.mubr.bf16.mxu0 %v2736
    %3878 = vmatmul.mubr.bf16.gmra.mxu0 %v2735
    %v3879 = vpop.f32.mrf.mxu0
    %v3880 = vadd.f32 %v2913, %v3879
    %v3881 = vpop.f32.mrf.mxu0
    %v3882 = vadd.f32 %v2917, %v3881
    %v3883 = vpop.f32.mrf.mxu0
    %v3884 = vpop.f32.mrf.mxu0
    %3885 = vdwg.mxu0
    %3886 = vmatprep.subr.bf16.mxu0 %v3497
    %3887 = vmatpush1.bf16.msra.mxu0 %v3496
    %3888 = vmatprep.subr.bf16.mxu0 %v3493
    %3889 = vmatpush1.bf16.msra.mxu0 %v3492
    %3890 = vmatprep.subr.bf16.mxu0 %v3489
    %3891 = vmatpush1.bf16.msra.mxu0 %v3488
    %3892 = vmatprep.subr.bf16.mxu0 %v3485
    %3893 = vmatpush1.bf16.msra.mxu0 %v3484
    %3894 = vmatprep.subr.bf16.mxu0 %v3481
    %3895 = vmatpush1.bf16.msra.mxu0 %v3480
    %3896 = vmatprep.subr.bf16.mxu0 %v3477
    %3897 = vmatpush1.bf16.msra.mxu0 %v3476
    %3898 = vmatprep.subr.bf16.mxu0 %v3473
    %3899 = vmatpush1.bf16.msra.mxu0 %v3472
    %3900 = vmatprep.subr.bf16.mxu0 %v3469
    %3901 = vmatpush1.bf16.msra.mxu0 %v3468
    %3902 = vmatprep.subr.bf16.mxu0 %v3529
    %3903 = vmatpush2.bf16.msra.mxu0 %v3528
    %3904 = vmatprep.subr.bf16.mxu0 %v3525
    %3905 = vmatpush2.bf16.msra.mxu0 %v3524
    %3906 = vmatprep.subr.bf16.mxu0 %v3521
    %3907 = vmatpush2.bf16.msra.mxu0 %v3520
    %3908 = vmatprep.subr.bf16.mxu0 %v3517
    %3909 = vmatpush2.bf16.msra.mxu0 %v3516
    %3910 = vmatprep.subr.bf16.mxu0 %v3513
    %3911 = vmatpush2.bf16.msra.mxu0 %v3512
    %3912 = vmatprep.subr.bf16.mxu0 %v3509
    %3913 = vmatpush2.bf16.msra.mxu0 %v3508
    %3914 = vmatprep.subr.bf16.mxu0 %v3505
    %3915 = vmatpush2.bf16.msra.mxu0 %v3504
    %3916 = vmatprep.subr.bf16.mxu0 %v3501
    %3917 = vmatpush2.bf16.msra.mxu0 %v3500
    %3918 = vmatprep.mubr.bf16.mxu0 %v2738
    %3919 = vmatmul.mubr.bf16.gmra.mxu0 %v2737
    %v3920 = vpop.f32.mrf.mxu0
    %v3921 = vadd.f32 %v3880, %v3920
    %v3922 = vpop.f32.mrf.mxu0
    %v3923 = vadd.f32 %v3882, %v3922
    %v3924 = vpop.f32.mrf.mxu0
    %v3925 = vpop.f32.mrf.mxu0
    %3926 = vdwg.mxu0
    %3927 = vmatprep.subr.bf16.mxu0 %v3561
    %3928 = vmatpush1.bf16.msra.mxu0 %v3560
    %3929 = vmatprep.subr.bf16.mxu0 %v3557
    %3930 = vmatpush1.bf16.msra.mxu0 %v3556
    %3931 = vmatprep.subr.bf16.mxu0 %v3553
    %3932 = vmatpush1.bf16.msra.mxu0 %v3552
    %3933 = vmatprep.subr.bf16.mxu0 %v3549
    %3934 = vmatpush1.bf16.msra.mxu0 %v3548
    %3935 = vmatprep.subr.bf16.mxu0 %v3545
    %3936 = vmatpush1.bf16.msra.mxu0 %v3544
    %3937 = vmatprep.subr.bf16.mxu0 %v3541
    %3938 = vmatpush1.bf16.msra.mxu0 %v3540
    %3939 = vmatprep.subr.bf16.mxu0 %v3537
    %3940 = vmatpush1.bf16.msra.mxu0 %v3536
    %3941 = vmatprep.subr.bf16.mxu0 %v3533
    %3942 = vmatpush1.bf16.msra.mxu0 %v3532
    %3943 = vmatprep.subr.bf16.mxu0 0
    %3944 = vmatpush2.bf16.msra.mxu0 0
    %3945 = vmatprep.subr.bf16.mxu0 0
    %3946 = vmatpush2.bf16.msra.mxu0 0
    %3947 = vmatprep.subr.bf16.mxu0 0
    %3948 = vmatpush2.bf16.msra.mxu0 0
    %3949 = vmatprep.subr.bf16.mxu0 0
    %3950 = vmatpush2.bf16.msra.mxu0 0
    %3951 = vmatprep.subr.bf16.mxu0 0
    %3952 = vmatpush2.bf16.msra.mxu0 0
    %3953 = vmatprep.subr.bf16.mxu0 0
    %3954 = vmatpush2.bf16.msra.mxu0 0
    %3955 = vmatprep.subr.bf16.mxu0 0
    %3956 = vmatpush2.bf16.msra.mxu0 0
    %3957 = vmatprep.subr.bf16.mxu0 0
    %3958 = vmatpush2.bf16.msra.mxu0 0
    %3959 = vmatprep.mubr.bf16.mxu0 0
    %3960 = vmatmul.mubr.bf16.gmra.mxu0 %v2739
    %v3961 = vpop.f32.mrf.mxu0
    %v3962 = vadd.f32 %v3921, %v3961
    %v3963 = vpop.f32.mrf.mxu0
    %v3964 = vadd.f32 %v3923, %v3963
    %v3965 = vpop.f32.mrf.mxu0
    %v3966 = vpop.f32.mrf.mxu0
    %3967 = vdwg.mxu0
    %v3968 = vmax.f32 %v3839, 0.0
    %v3969 = vmax.f32 %v3841, 0.0
    %v3970 = vmax.f32 %v3962, 0.0
    %v3971 = vmax.f32 %v3964, 0.0
    %v3972 = vpack.c.bf16 %v3968, %v3968
    %v3973 = vpack.c.bf16 %v3969, %v3969
    %v3974 = vpack.c.bf16 %v3970, %v3970
    %v3975 = vpack.c.bf16 %v3971, %v3971
    %v3976 = vld [vmem:[#allocation16] sm:$0xff]
    %v3977 = vld [vmem:[#allocation16 + $0x8] sm:$0xff]
    %v3978 = vld [vmem:[#allocation16 + $0x10] sm:$0xff]
    %v3979 = vld [vmem:[#allocation16 + $0x18] sm:$0xff]
    %v3980 = vld [vmem:[#allocation16 + $0x20] sm:$0xff]
    %v3981 = vld [vmem:[#allocation16 + $0x28] sm:$0xff]
    %v3982 = vld [vmem:[#allocation16 + $0x30] sm:$0xff]
    %v3983 = vld [vmem:[#allocation16 + $0x38] sm:$0xff]
    %v3984 = vld [vmem:[#allocation16 + $0x40] sm:$0xff]
    %v3985 = vld [vmem:[#allocation16 + $0x48] sm:$0xff]
    %v3986 = vld [vmem:[#allocation16 + $0x50] sm:$0xff]
    %v3987 = vld [vmem:[#allocation16 + $0x58] sm:$0xff]
    %v3988 = vld [vmem:[#allocation16 + $0x60] sm:$0xff]
    %v3989 = vld [vmem:[#allocation16 + $0x68] sm:$0xff]
    %v3990 = vld [vmem:[#allocation16 + $0x70] sm:$0xff]
    %v3991 = vld [vmem:[#allocation16 + $0x78] sm:$0xff]
    %v3992 = vld [vmem:[#allocation16 + $0x80] sm:$0xff]
    %v3993 = vld [vmem:[#allocation16 + $0x88] sm:$0xff]
    %v3994 = vld [vmem:[#allocation16 + $0x90] sm:$0xff]
    %v3995 = vld [vmem:[#allocation16 + $0x98] sm:$0xff]
    %v3996 = vld [vmem:[#allocation16 + $0xa0] sm:$0xff]
    %v3997 = vld [vmem:[#allocation16 + $0xa8] sm:$0xff]
    %v3998 = vld [vmem:[#allocation16 + $0xb0] sm:$0xff]
    %v3999 = vld [vmem:[#allocation16 + $0xb8] sm:$0xff]
    %v4000 = vld [vmem:[#allocation16 + $0xc0] sm:$0xff]
    %v4001 = vld [vmem:[#allocation16 + $0xc8] sm:$0xff]
    %v4002 = vld [vmem:[#allocation16 + $0xd0] sm:$0xff]
    %v4003 = vld [vmem:[#allocation16 + $0xd8] sm:$0xff]
    %v4004 = vld [vmem:[#allocation16 + $0xe0] sm:$0xff]
    %v4005 = vld [vmem:[#allocation16 + $0xe8] sm:$0xff]
    %v4006 = vld [vmem:[#allocation16 + $0xf0] sm:$0xff]
    %v4007 = vld [vmem:[#allocation16 + $0xf8] sm:$0xff]
    %v4008 = vld [vmem:[#allocation16 + $0x100] sm:$0xff]
    %v4009 = vld [vmem:[#allocation16 + $0x108] sm:$0xff]
    %v4010 = vld [vmem:[#allocation16 + $0x110] sm:$0xff]
    %v4011 = vld [vmem:[#allocation16 + $0x118] sm:$0xff]
    %v4012 = vld [vmem:[#allocation16 + $0x120] sm:$0xff]
    %v4013 = vld [vmem:[#allocation16 + $0x128] sm:$0xff]
    %v4014 = vld [vmem:[#allocation16 + $0x130] sm:$0xff]
    %v4015 = vld [vmem:[#allocation16 + $0x138] sm:$0xff]
    %v4016 = vld [vmem:[#allocation16 + $0x140] sm:$0xff]
    %v4017 = vld [vmem:[#allocation16 + $0x148] sm:$0xff]
    %v4018 = vld [vmem:[#allocation16 + $0x150] sm:$0xff]
    %v4019 = vld [vmem:[#allocation16 + $0x158] sm:$0xff]
    %v4020 = vld [vmem:[#allocation16 + $0x160] sm:$0xff]
    %v4021 = vld [vmem:[#allocation16 + $0x168] sm:$0xff]
    %v4022 = vld [vmem:[#allocation16 + $0x170] sm:$0xff]
    %v4023 = vld [vmem:[#allocation16 + $0x178] sm:$0xff]
    %v4024 = vld [vmem:[#allocation16 + $0x180] sm:$0xff]
    %v4025 = vld [vmem:[#allocation16 + $0x188] sm:$0xff]
    %v4026 = vld [vmem:[#allocation16 + $0x190] sm:$0xff]
    %v4027 = vld [vmem:[#allocation16 + $0x198] sm:$0xff]
    %v4028 = vld [vmem:[#allocation16 + $0x1a0] sm:$0xff]
    %v4029 = vld [vmem:[#allocation16 + $0x1a8] sm:$0xff]
    %v4030 = vld [vmem:[#allocation16 + $0x1b0] sm:$0xff]
    %v4031 = vld [vmem:[#allocation16 + $0x1b8] sm:$0xff]
    %v4032 = vld [vmem:[#allocation16 + $0x1c0] sm:$0xff]
    %v4033 = vld [vmem:[#allocation16 + $0x1c8] sm:$0xff]
    %v4034 = vld [vmem:[#allocation16 + $0x1d0] sm:$0xff]
    %v4035 = vld [vmem:[#allocation16 + $0x1d8] sm:$0xff]
    %v4036 = vld [vmem:[#allocation16 + $0x1e0] sm:$0xff]
    %v4037 = vld [vmem:[#allocation16 + $0x1e8] sm:$0xff]
    %v4038 = vld [vmem:[#allocation16 + $0x1f0] sm:$0xff]
    %v4039 = vld [vmem:[#allocation16 + $0x1f8] sm:$0xff]
    %v4040 = vld [vmem:[#allocation17] sm:$0x3]
    %v4042 = vlaneseq
    %v4043 = vshrl.u32 %v4042, 7
    %v4044 = vsub.s32 0, %v4043
    %v4045 = vrot.slane %v4040, %v4044
    %v4046 = vlaneseq
    %v4047 = vshrl.u32 %v4046, 7
    %v4048 = vsub.s32 1, %v4047
    %v4049 = vrot.slane %v4040, %v4048
    %v4116 = vunpack.c.l.b16 %v3976
    %v4117 = vunpack.c.h.b16 %v3976
    %v4118 = vunpack.c.l.b16 %v3977
    %v4119 = vunpack.c.h.b16 %v3977
    %v4120 = vunpack.c.l.b16 %v3978
    %v4121 = vunpack.c.h.b16 %v3978
    %v4122 = vunpack.c.l.b16 %v3979
    %v4123 = vunpack.c.h.b16 %v3979
    %v4124 = vunpack.c.l.b16 %v3980
    %v4125 = vunpack.c.h.b16 %v3980
    %v4126 = vunpack.c.l.b16 %v3981
    %v4127 = vunpack.c.h.b16 %v3981
    %v4128 = vunpack.c.l.b16 %v3982
    %v4129 = vunpack.c.h.b16 %v3982
    %v4130 = vunpack.c.l.b16 %v3983
    %v4131 = vunpack.c.h.b16 %v3983
    %v4132 = vunpack.c.l.b16 %v3984
    %v4133 = vunpack.c.h.b16 %v3984
    %v4134 = vunpack.c.l.b16 %v3985
    %v4135 = vunpack.c.h.b16 %v3985
    %v4136 = vunpack.c.l.b16 %v3986
    %v4137 = vunpack.c.h.b16 %v3986
    %v4138 = vunpack.c.l.b16 %v3987
    %v4139 = vunpack.c.h.b16 %v3987
    %v4140 = vunpack.c.l.b16 %v3988
    %v4141 = vunpack.c.h.b16 %v3988
    %v4142 = vunpack.c.l.b16 %v3989
    %v4143 = vunpack.c.h.b16 %v3989
    %v4144 = vunpack.c.l.b16 %v3990
    %v4145 = vunpack.c.h.b16 %v3990
    %v4146 = vunpack.c.l.b16 %v3991
    %v4147 = vunpack.c.h.b16 %v3991
    %v4148 = vunpack.c.l.b16 %v3992
    %v4149 = vunpack.c.h.b16 %v3992
    %v4150 = vunpack.c.l.b16 %v3993
    %v4151 = vunpack.c.h.b16 %v3993
    %v4152 = vunpack.c.l.b16 %v3994
    %v4153 = vunpack.c.h.b16 %v3994
    %v4154 = vunpack.c.l.b16 %v3995
    %v4155 = vunpack.c.h.b16 %v3995
    %v4156 = vunpack.c.l.b16 %v3996
    %v4157 = vunpack.c.h.b16 %v3996
    %v4158 = vunpack.c.l.b16 %v3997
    %v4159 = vunpack.c.h.b16 %v3997
    %v4160 = vunpack.c.l.b16 %v3998
    %v4161 = vunpack.c.h.b16 %v3998
    %v4162 = vunpack.c.l.b16 %v3999
    %v4163 = vunpack.c.h.b16 %v3999
    %v4164 = vunpack.c.l.b16 %v4000
    %v4165 = vunpack.c.h.b16 %v4000
    %v4166 = vunpack.c.l.b16 %v4001
    %v4167 = vunpack.c.h.b16 %v4001
    %v4168 = vunpack.c.l.b16 %v4002
    %v4169 = vunpack.c.h.b16 %v4002
    %v4170 = vunpack.c.l.b16 %v4003
    %v4171 = vunpack.c.h.b16 %v4003
    %v4172 = vunpack.c.l.b16 %v4004
    %v4173 = vunpack.c.h.b16 %v4004
    %v4174 = vunpack.c.l.b16 %v4005
    %v4175 = vunpack.c.h.b16 %v4005
    %v4176 = vunpack.c.l.b16 %v4006
    %v4177 = vunpack.c.h.b16 %v4006
    %v4178 = vunpack.c.l.b16 %v4007
    %v4179 = vunpack.c.h.b16 %v4007
    %v4180 = vunpack.c.l.b16 %v4008
    %v4181 = vunpack.c.h.b16 %v4008
    %v4182 = vunpack.c.l.b16 %v4009
    %v4183 = vunpack.c.h.b16 %v4009
    %v4184 = vunpack.c.l.b16 %v4010
    %v4185 = vunpack.c.h.b16 %v4010
    %v4186 = vunpack.c.l.b16 %v4011
    %v4187 = vunpack.c.h.b16 %v4011
    %v4188 = vunpack.c.l.b16 %v4012
    %v4189 = vunpack.c.h.b16 %v4012
    %v4190 = vunpack.c.l.b16 %v4013
    %v4191 = vunpack.c.h.b16 %v4013
    %v4192 = vunpack.c.l.b16 %v4014
    %v4193 = vunpack.c.h.b16 %v4014
    %v4194 = vunpack.c.l.b16 %v4015
    %v4195 = vunpack.c.h.b16 %v4015
    %v4196 = vunpack.c.l.b16 %v4016
    %v4197 = vunpack.c.h.b16 %v4016
    %v4198 = vunpack.c.l.b16 %v4017
    %v4199 = vunpack.c.h.b16 %v4017
    %v4200 = vunpack.c.l.b16 %v4018
    %v4201 = vunpack.c.h.b16 %v4018
    %v4202 = vunpack.c.l.b16 %v4019
    %v4203 = vunpack.c.h.b16 %v4019
    %v4204 = vunpack.c.l.b16 %v4020
    %v4205 = vunpack.c.h.b16 %v4020
    %v4206 = vunpack.c.l.b16 %v4021
    %v4207 = vunpack.c.h.b16 %v4021
    %v4208 = vunpack.c.l.b16 %v4022
    %v4209 = vunpack.c.h.b16 %v4022
    %v4210 = vunpack.c.l.b16 %v4023
    %v4211 = vunpack.c.h.b16 %v4023
    %v4212 = vunpack.c.l.b16 %v4024
    %v4213 = vunpack.c.h.b16 %v4024
    %v4214 = vunpack.c.l.b16 %v4025
    %v4215 = vunpack.c.h.b16 %v4025
    %v4216 = vunpack.c.l.b16 %v4026
    %v4217 = vunpack.c.h.b16 %v4026
    %v4218 = vunpack.c.l.b16 %v4027
    %v4219 = vunpack.c.h.b16 %v4027
    %v4220 = vunpack.c.l.b16 %v4028
    %v4221 = vunpack.c.h.b16 %v4028
    %v4222 = vunpack.c.l.b16 %v4029
    %v4223 = vunpack.c.h.b16 %v4029
    %v4224 = vunpack.c.l.b16 %v4030
    %v4225 = vunpack.c.h.b16 %v4030
    %v4226 = vunpack.c.l.b16 %v4031
    %v4227 = vunpack.c.h.b16 %v4031
    %v4228 = vunpack.c.l.b16 %v4032
    %v4229 = vunpack.c.h.b16 %v4032
    %v4230 = vunpack.c.l.b16 %v4033
    %v4231 = vunpack.c.h.b16 %v4033
    %v4232 = vunpack.c.l.b16 %v4034
    %v4233 = vunpack.c.h.b16 %v4034
    %v4234 = vunpack.c.l.b16 %v4035
    %v4235 = vunpack.c.h.b16 %v4035
    %v4236 = vunpack.c.l.b16 %v4036
    %v4237 = vunpack.c.h.b16 %v4036
    %v4238 = vunpack.c.l.b16 %v4037
    %v4239 = vunpack.c.h.b16 %v4037
    %v4240 = vunpack.c.l.b16 %v4038
    %v4241 = vunpack.c.h.b16 %v4038
    %v4242 = vunpack.c.l.b16 %v4039
    %v4243 = vunpack.c.h.b16 %v4039
    %v4244 = vpack.c.b16 %v4118, %v4116
    %v4245 = vpack.c.b16 %v4119, %v4117
    %v4246 = vpack.c.b16 %v4122, %v4120
    %v4247 = vpack.c.b16 %v4123, %v4121
    %v4248 = vpack.c.b16 %v4126, %v4124
    %v4249 = vpack.c.b16 %v4127, %v4125
    %v4250 = vpack.c.b16 %v4130, %v4128
    %v4251 = vpack.c.b16 %v4131, %v4129
    %v4252 = vpack.c.b16 %v4134, %v4132
    %v4253 = vpack.c.b16 %v4135, %v4133
    %v4254 = vpack.c.b16 %v4138, %v4136
    %v4255 = vpack.c.b16 %v4139, %v4137
    %v4256 = vpack.c.b16 %v4142, %v4140
    %v4257 = vpack.c.b16 %v4143, %v4141
    %v4258 = vpack.c.b16 %v4146, %v4144
    %v4259 = vpack.c.b16 %v4147, %v4145
    %v4260 = vpack.c.b16 %v4150, %v4148
    %v4261 = vpack.c.b16 %v4151, %v4149
    %v4262 = vpack.c.b16 %v4154, %v4152
    %v4263 = vpack.c.b16 %v4155, %v4153
    %v4264 = vpack.c.b16 %v4158, %v4156
    %v4265 = vpack.c.b16 %v4159, %v4157
    %v4266 = vpack.c.b16 %v4162, %v4160
    %v4267 = vpack.c.b16 %v4163, %v4161
    %v4268 = vpack.c.b16 %v4166, %v4164
    %v4269 = vpack.c.b16 %v4167, %v4165
    %v4270 = vpack.c.b16 %v4170, %v4168
    %v4271 = vpack.c.b16 %v4171, %v4169
    %v4272 = vpack.c.b16 %v4174, %v4172
    %v4273 = vpack.c.b16 %v4175, %v4173
    %v4274 = vpack.c.b16 %v4178, %v4176
    %v4275 = vpack.c.b16 %v4179, %v4177
    %v4276 = vpack.c.b16 %v4182, %v4180
    %v4277 = vpack.c.b16 %v4183, %v4181
    %v4278 = vpack.c.b16 %v4186, %v4184
    %v4279 = vpack.c.b16 %v4187, %v4185
    %v4280 = vpack.c.b16 %v4190, %v4188
    %v4281 = vpack.c.b16 %v4191, %v4189
    %v4282 = vpack.c.b16 %v4194, %v4192
    %v4283 = vpack.c.b16 %v4195, %v4193
    %v4284 = vpack.c.b16 %v4198, %v4196
    %v4285 = vpack.c.b16 %v4199, %v4197
    %v4286 = vpack.c.b16 %v4202, %v4200
    %v4287 = vpack.c.b16 %v4203, %v4201
    %v4288 = vpack.c.b16 %v4206, %v4204
    %v4289 = vpack.c.b16 %v4207, %v4205
    %v4290 = vpack.c.b16 %v4210, %v4208
    %v4291 = vpack.c.b16 %v4211, %v4209
    %v4292 = vpack.c.b16 %v4214, %v4212
    %v4293 = vpack.c.b16 %v4215, %v4213
    %v4294 = vpack.c.b16 %v4218, %v4216
    %v4295 = vpack.c.b16 %v4219, %v4217
    %v4296 = vpack.c.b16 %v4222, %v4220
    %v4297 = vpack.c.b16 %v4223, %v4221
    %v4298 = vpack.c.b16 %v4226, %v4224
    %v4299 = vpack.c.b16 %v4227, %v4225
    %v4300 = vpack.c.b16 %v4230, %v4228
    %v4301 = vpack.c.b16 %v4231, %v4229
    %v4302 = vpack.c.b16 %v4234, %v4232
    %v4303 = vpack.c.b16 %v4235, %v4233
    %v4304 = vpack.c.b16 %v4238, %v4236
    %v4305 = vpack.c.b16 %v4239, %v4237
    %v4306 = vpack.c.b16 %v4242, %v4240
    %v4307 = vpack.c.b16 %v4243, %v4241
    %4372 = vmatprep.subr.bf16.mxu0 %v4259
    %4373 = vmatpush1.bf16.msra.mxu0 %v4258
    %4374 = vmatprep.subr.bf16.mxu0 %v4257
    %4375 = vmatpush1.bf16.msra.mxu0 %v4256
    %4376 = vmatprep.subr.bf16.mxu0 %v4255
    %4377 = vmatpush1.bf16.msra.mxu0 %v4254
    %4378 = vmatprep.subr.bf16.mxu0 %v4253
    %4379 = vmatpush1.bf16.msra.mxu0 %v4252
    %4380 = vmatprep.subr.bf16.mxu0 %v4251
    %4381 = vmatpush1.bf16.msra.mxu0 %v4250
    %4382 = vmatprep.subr.bf16.mxu0 %v4249
    %4383 = vmatpush1.bf16.msra.mxu0 %v4248
    %4384 = vmatprep.subr.bf16.mxu0 %v4247
    %4385 = vmatpush1.bf16.msra.mxu0 %v4246
    %4386 = vmatprep.subr.bf16.mxu0 %v4245
    %4387 = vmatpush1.bf16.msra.mxu0 %v4244
    %4388 = vmatprep.subr.bf16.mxu0 %v4275
    %4389 = vmatpush2.bf16.msra.mxu0 %v4274
    %4390 = vmatprep.subr.bf16.mxu0 %v4273
    %4391 = vmatpush2.bf16.msra.mxu0 %v4272
    %4392 = vmatprep.subr.bf16.mxu0 %v4271
    %4393 = vmatpush2.bf16.msra.mxu0 %v4270
    %4394 = vmatprep.subr.bf16.mxu0 %v4269
    %4395 = vmatpush2.bf16.msra.mxu0 %v4268
    %4396 = vmatprep.subr.bf16.mxu0 %v4267
    %4397 = vmatpush2.bf16.msra.mxu0 %v4266
    %4398 = vmatprep.subr.bf16.mxu0 %v4265
    %4399 = vmatpush2.bf16.msra.mxu0 %v4264
    %4400 = vmatprep.subr.bf16.mxu0 %v4263
    %4401 = vmatpush2.bf16.msra.mxu0 %v4262
    %4402 = vmatprep.subr.bf16.mxu0 %v4261
    %4403 = vmatpush2.bf16.msra.mxu0 %v4260
    %4404 = vmatprep.mubr.bf16.mxu0 %v3973
    %4405 = vmatmul.mubr.bf16.gmra.mxu0 %v3972
    %v4406 = vpop.f32.mrf.mxu0
    %v4407 = vadd.f32 %v4045, %v4406
    %v4408 = vpop.f32.mrf.mxu0
    %v4409 = vadd.f32 %v4049, %v4408
    %v4410 = vpop.f32.mrf.mxu0
    %v4411 = vpop.f32.mrf.mxu0
    %4412 = vdwg.mxu0
    %4413 = vmatprep.subr.bf16.mxu0 %v4291
    %4414 = vmatpush1.bf16.msra.mxu0 %v4290
    %4415 = vmatprep.subr.bf16.mxu0 %v4289
    %4416 = vmatpush1.bf16.msra.mxu0 %v4288
    %4417 = vmatprep.subr.bf16.mxu0 %v4287
    %4418 = vmatpush1.bf16.msra.mxu0 %v4286
    %4419 = vmatprep.subr.bf16.mxu0 %v4285
    %4420 = vmatpush1.bf16.msra.mxu0 %v4284
    %4421 = vmatprep.subr.bf16.mxu0 %v4283
    %4422 = vmatpush1.bf16.msra.mxu0 %v4282
    %4423 = vmatprep.subr.bf16.mxu0 %v4281
    %4424 = vmatpush1.bf16.msra.mxu0 %v4280
    %4425 = vmatprep.subr.bf16.mxu0 %v4279
    %4426 = vmatpush1.bf16.msra.mxu0 %v4278
    %4427 = vmatprep.subr.bf16.mxu0 %v4277
    %4428 = vmatpush1.bf16.msra.mxu0 %v4276
    %4429 = vmatprep.subr.bf16.mxu0 %v4307
    %4430 = vmatpush2.bf16.msra.mxu0 %v4306
    %4431 = vmatprep.subr.bf16.mxu0 %v4305
    %4432 = vmatpush2.bf16.msra.mxu0 %v4304
    %4433 = vmatprep.subr.bf16.mxu0 %v4303
    %4434 = vmatpush2.bf16.msra.mxu0 %v4302
    %4435 = vmatprep.subr.bf16.mxu0 %v4301
    %4436 = vmatpush2.bf16.msra.mxu0 %v4300
    %4437 = vmatprep.subr.bf16.mxu0 %v4299
    %4438 = vmatpush2.bf16.msra.mxu0 %v4298
    %4439 = vmatprep.subr.bf16.mxu0 %v4297
    %4440 = vmatpush2.bf16.msra.mxu0 %v4296
    %4441 = vmatprep.subr.bf16.mxu0 %v4295
    %4442 = vmatpush2.bf16.msra.mxu0 %v4294
    %4443 = vmatprep.subr.bf16.mxu0 %v4293
    %4444 = vmatpush2.bf16.msra.mxu0 %v4292
    %4445 = vmatprep.mubr.bf16.mxu0 %v3975
    %4446 = vmatmul.mubr.bf16.gmra.mxu0 %v3974
    %v4447 = vpop.f32.mrf.mxu0
    %v4448 = vadd.f32 %v4407, %v4447
    %v4449 = vpop.f32.mrf.mxu0
    %v4450 = vadd.f32 %v4409, %v4449
    %v4451 = vpop.f32.mrf.mxu0
    %v4452 = vpop.f32.mrf.mxu0
    %4453 = vdwg.mxu0
    %v4454 = vmax.f32 %v4450, 0.0
    %v4455 = vand.u32 2147483647, %v4450
    %v4456 = vsub.f32 0.0, %v4455
    %v4457 = vmul.f32 %v4456, 1.442695
    %v4458 = vpow.pop %v4457
    %v4459 = vadd.f32 %v4458, 1.0
    %v4460 = vlog2.pop %v4459
    %v4461 = vmul.f32 %v4460, 0.6931472
    %v4462 = vmul.f32 -0.5, %v4458
    %v4463 = vadd.f32 %v4462, 1.0
    %v4464 = vmul.f32 %v4463, %v4458
    %v4465 = vand.u32 2147483647, %v4458
    %vm4466 = vcmp.lt.f32.partialorder %v4465, 0.0004427343
    %v4467 = vsel %vm4466, %v4464, %v4461
    %v4468 = vadd.f32 %v4454, %v4467
    %v4469 = vld [vmem:[#allocation5] sm:$0xff]
    %v4470 = vmul.f32 %v4468, %v4469
    %v4471 = vadd.f32 %v4448, %v4470
    %v4472 = vmul.f32 %v4469, -0.5
    %v4473 = vmul.f32 %v4472, %v4469
    %v4474 = vlog2.pop %v4468
    %v4475 = vmul.f32 %v4474, 0.6931472
    %v4476 = vsub.f32 %v4473, %v4475
    %v4477 = vsub.f32 %v4476, 0.9189385
    %v4478 = vtanh.pop %v4471
    %v4479 = vtanh.pop %v4478
    %v4480 = vmul.f32 %v4479, %v4479
    %v4481 = vsub.f32 1.0, %v4480
    %v4482 = vadd.f32 %v4481, 1e-07
    %v4483 = vlog2.pop %v4482
    %v4484 = vmul.f32 %v4483, 0.6931472
    %v4485 = vsub.f32 %v4477, %v4484
    %v4486 = vlaneseq
    %v4487 = vand.u32 %v4486, 127
    %vm4488 = vcmp.lt.s32.totalorder %v4487, 4
    %v4489 = vsel %vm4488, %v4485, 0.0
    %4490 = vadd.xlane.f32.xlu0 %v4489
    %v4491 = vpop.xlane.xlu0 %4490
    %v4492 = vmul.f32 %v4478, 2.0
    %4493 = vst [vmem:[#allocation19] sm:$0xff] %v4492
    %4494 = vst [vmem:[#allocation19 + $0x8] sm:$0xff] %v4491
    // Predicated region
    $region82: #{tpu_custom_call.1} parent=1 // pred_check
      _
    $region83: #{tpu_custom_call.1} parent=1 // pred_check_branch
      %4496 = sbr.rel (0) target = $region85
    $region84: #{tpu_custom_call.1} parent=1 // pred_region
      %s4498 = ssub.s32 256, 256
      %4499 = vsyncadd [#allocation4], %s4498
      %s4501 = sshll.u32 [#allocation19], 4
      %s4502 = int_to_ptr.vmem [resolvable:$true] %s4501
      %4504 = dma.vmem_to_hbm [thread:$0]  %s4502, 256, %s10, [#allocation4]
    $region85: #{tpu_custom_call.1} parent=1 // pred_fallthru
      _
    // Predicated region
    $region86: #{tpu_custom_call.1} parent=1 // pred_check
      _
    $region87: #{tpu_custom_call.1} parent=1 // pred_check_branch
      %4506 = sbr.rel (0) target = $region89
    $region88: #{tpu_custom_call.1} parent=1 // pred_region
      %4507 = dma.done [#allocation4], 256
    $region89: #{tpu_custom_call.1} parent=1 // pred_fallthru
      _
    %4508 = vsyncpa [#allocation3], 1
    %4509 = vsyncpa [#allocation6], 1
    %4510 = vsyncpa [#allocation9], 1
    %4511 = vsyncpa [#allocation12], 1
    %4512 = vsyncpa [#allocation15], 1
    %4513 = vsyncpa [#allocation18], 1
    %4514 = vsyncpa [#allocation4], 1

</llo_original>
